<compile_context>
chip_gen: v5e
topology: v5e:2x2
jax: 0.10.0
libtpu: 0.0.40
codegen_flags: <defaults>
</compile_context>

<pallas_src>
import functools
import math

import jax
import jax.numpy as jnp
from jax.experimental import pallas as pl
from jax.experimental.pallas import tpu as pltpu

LEAKY_SLOPE = 0.01   # nn.LeakyReLU() default
BN_EPS = 1e-5
LANES = 128          # every feature/channel dim is padded to the lane width
FC1_K_PAD = 512      # compacted flatten (400) padded to a lane-friendly K
VMEM_LIMIT = 32 * 1024 * 1024


def _round_up(n, m):
    return ((n + m - 1) // m) * m


def _pad_axis(x, axis, target):
    pad = target - x.shape[axis]
    if pad <= 0:
        return x
    widths = [(0, 0)] * x.ndim
    widths[axis] = (0, pad)
    return jnp.pad(x, widths)


# ---------------------------------------------------------------------------
# Pallas kernels
# ---------------------------------------------------------------------------
def _conv_lrelu_bn_pool_kernel(x_ref, w_ref, b_ref, s_ref, t_ref, o_ref, *, ow):
    """Fused conv (as im2col matmul) + bias + LeakyReLU + BN + 2x2 AvgPool.

    x_ref : (bm, K) bf16 patches, bm = g * 2 * ow (whole pooling row-groups)
    w_ref : (K, 128) bf16 ; b/s/t : (1, 128) f32
    o_ref : (bm // 4, 128) bf16 pooled output tile
    """
    y = jnp.dot(x_ref[...], w_ref[...], preferred_element_type=jnp.float32)
    y = y + b_ref[...]                                  # (1,128) row broadcast
    y = jnp.where(y > 0, y, LEAKY_SLOPE * y)            # LeakyReLU(0.01)
    y = y * s_ref[...] + t_ref[...]                     # folded BatchNorm (eval)

    bm, n = y.shape
    g = bm // (2 * ow)
    # rows are ordered (group, oh parity, ow); pool 2x2 windows in VMEM.
    y = y.reshape(g, 2, ow, n)
    y = y[:, 0] + y[:, 1]                               # sum over oh pair -> (g, ow, n)
    y = y.reshape(g, ow // 2, 2, n)
    y = y[:, :, 0] + y[:, :, 1]                         # sum over ow pair -> (g, ow//2, n)
    o_ref[...] = (0.25 * y).reshape(g * (ow // 2), n).astype(o_ref.dtype)


def _fc_stack_kernel(x_ref,
                     w1_ref, b1_ref, s1_ref, t1_ref,
                     w2_ref, b2_ref, s2_ref, t2_ref,
                     w3_ref, b3_ref, o_ref):
    """Fused FC head: (Linear+LReLU+BN) x2 -> Linear, all in one kernel."""
    h = jnp.dot(x_ref[...], w1_ref[...], preferred_element_type=jnp.float32)
    h = h + b1_ref[...]
    h = jnp.where(h > 0, h, LEAKY_SLOPE * h)
    h = h * s1_ref[...] + t1_ref[...]

    h = jnp.dot(h.astype(jnp.bfloat16), w2_ref[...],
                preferred_element_type=jnp.float32)
    h = h + b2_ref[...]
    h = jnp.where(h > 0, h, LEAKY_SLOPE * h)
    h = h * s2_ref[...] + t2_ref[...]

    h = jnp.dot(h.astype(jnp.bfloat16), w3_ref[...],
                preferred_element_type=jnp.float32)
    o_ref[...] = (h + b3_ref[...]).astype(o_ref.dtype)


# ---------------------------------------------------------------------------
# pallas_call wrappers
# ---------------------------------------------------------------------------
def _pick_block_rows(M, ow, target):
    """Block rows: multiple of lcm(2*ow, 32) (whole pool groups + 8-sublane
    pooled tiles), near `target`, and >=2 grid steps when possible (v7x)."""
    unit = (2 * ow) * 32 // math.gcd(2 * ow, 32)
    if M < 2 * unit:
        return M                      # single full-extent block
    bm = min(target, -(-M // 2))      # aim for at least 2 grid steps
    bm = max(unit, (bm // unit) * unit)
    return min(bm, M)


def conv_lrelu_bn_pool(patches, w, b, s, t, *, ow, block_rows=2048):
    """patches:(M,K) bf16 with M=B*OH*OW -> pooled (M//4,128) bf16."""
    M, K = patches.shape
    N = w.shape[1]
    bm = _pick_block_rows(M, ow, block_rows)
    grid = (pl.cdiv(M, bm),)

    kernel = functools.partial(_conv_lrelu_bn_pool_kernel, ow=ow)

    def full(shape):
        return pl.BlockSpec(shape, lambda i: (0, 0))

    return pl.pallas_call(
        kernel,
        out_shape=jax.ShapeDtypeStruct((M // 4, N), jnp.bfloat16),
        grid=grid,
        in_specs=[
            pl.BlockSpec((bm, K), lambda i: (i, 0)),    # M-tiled patches
            full((K, N)),                               # resident weights
            full((1, N)), full((1, N)), full((1, N)),   # bias / BN scale / shift
        ],
        out_specs=pl.BlockSpec((bm // 4, N), lambda i: (i, 0)),
        compiler_params=pltpu.CompilerParams(
            dimension_semantics=("parallel",),
            vmem_limit_bytes=VMEM_LIMIT),
    )(patches, w, b, s, t)


def fc_stack(x, p, *, block_m=256):
    """Fused 3-layer FC head.  x:(B, 512) bf16 -> (B, 128) f32 (10 valid)."""
    M, K = x.shape
    N = LANES
    bm = M if M <= block_m else max(8, (block_m // 8) * 8)
    grid = (pl.cdiv(M, bm),)

    def full(shape):
        return pl.BlockSpec(shape, lambda i: (0, 0))

    return pl.pallas_call(
        _fc_stack_kernel,
        out_shape=jax.ShapeDtypeStruct((M, N), jnp.float32),
        grid=grid,
        in_specs=[
            pl.BlockSpec((bm, K), lambda i: (i, 0)),
            full(p["fc1_w"].shape), full((1, N)), full((1, N)), full((1, N)),
            full(p["fc2_w"].shape), full((1, N)), full((1, N)), full((1, N)),
            full(p["fc3_w"].shape), full((1, N)),
        ],
        out_specs=pl.BlockSpec((bm, N), lambda i: (i, 0)),
        compiler_params=pltpu.CompilerParams(
            dimension_semantics=("parallel",),
            vmem_limit_bytes=VMEM_LIMIT),
    )(x,
      p["fc1_w"], p["fc1_b"], p["fc1_s"], p["fc1_t"],
      p["fc2_w"], p["fc2_b"], p["fc2_s"], p["fc2_t"],
      p["fc3_w"], p["fc3_b"])


# ---------------------------------------------------------------------------
# Host-side glue (im2col, BN folding) — all NHWC
# ---------------------------------------------------------------------------
def im2col_nhwc(x, kh, kw):
    """x:(B,H,W,C) -> patches:(B*OH*OW, kh*kw*C) ordered (kh, kw, c)."""
    B, H, W, C = x.shape
    OH, OW = H - kh + 1, W - kw + 1
    cols = []
    for i in range(kh):
        for j in range(kw):
            cols.append(x[:, i:i + OH, j:j + OW, :])    # (B,OH,OW,C)
    p = jnp.stack(cols, axis=3)                         # (B,OH,OW,kh*kw,C)
    return p.reshape(B * OH * OW, kh * kw * C), OH, OW


def fold_bn(gamma, beta, mean, var, eps=BN_EPS):
    scale = gamma / jnp.sqrt(var + eps)
    shift = beta - mean * scale
    return scale, shift


# ---------------------------------------------------------------------------
# Parameter init (torch layout, mimics _init_weights) and kernel-ready prep
# ---------------------------------------------------------------------------
def kaiming_scaled(key, shape, fan_in):
    # kaiming_normal_(fan_in, relu): std = sqrt(2/fan_in); module scales by 0.1
    std = jnp.sqrt(2.0 / fan_in) * 0.1
    return jax.random.normal(key, shape, dtype=jnp.float32) * std


def init_raw_params(key):
    ks = jax.random.split(key, 5)
    r = {}
    r["c1_w"] = kaiming_scaled(ks[0], (6, 3, 5, 5), 3 * 5 * 5)
    r["c1_b"] = jnp.full((6,), 0.01, jnp.float32)
    r["bn1"] = (jnp.ones(6), jnp.zeros(6), jnp.zeros(6), jnp.ones(6))
    r["c2_w"] = kaiming_scaled(ks[1], (16, 6, 5, 5), 6 * 5 * 5)
    r["c2_b"] = jnp.full((16,), 0.01, jnp.float32)
    r["bn2"] = (jnp.ones(16), jnp.zeros(16), jnp.zeros(16), jnp.ones(16))
    r["fc1_w"] = kaiming_scaled(ks[2], (120, 400), 400)
    r["fc1_b"] = jnp.full((120,), 0.01, jnp.float32)
    r["bn3"] = (jnp.ones(120), jnp.zeros(120), jnp.zeros(120), jnp.ones(120))
    r["fc2_w"] = kaiming_scaled(ks[3], (84, 120), 120)
    r["fc2_b"] = jnp.full((84,), 0.01, jnp.float32)
    r["bn4"] = (jnp.ones(84), jnp.zeros(84), jnp.zeros(84), jnp.ones(84))
    r["fc3_w"] = kaiming_scaled(ks[4], (10, 84), 84)
    r["fc3_b"] = jnp.full((10,), 0.01, jnp.float32)
    return r


def _prep_vec(v, n=LANES):
    return _pad_axis(v.astype(jnp.float32), 0, n).reshape(1, n)


def _prep_bn(bn, n=LANES):
    s, t = fold_bn(*bn)
    return _prep_vec(s, n), _prep_vec(t, n)   # padded lanes -> scale=0, shift=0


def prepare_params(r):
    """Pad/transpose torch-layout params into lane-dense bf16 kernel operands."""
    p = {}
    # conv1: (6,3,5,5) -> (kh,kw,cin,cout) -> (75,6) -> pad N 6->128 (K stays 75)
    w = jnp.transpose(r["c1_w"], (2, 3, 1, 0)).reshape(75, 6)
    p["c1_w"] = _pad_axis(w, 1, LANES).astype(jnp.bfloat16)
    p["c1_b"] = _prep_vec(r["c1_b"])
    p["c1_s"], p["c1_t"] = _prep_bn(r["bn1"])
    # conv2: (16,6,5,5) -> (150,16) -> pad N 16->128 (K stays 150)
    w = jnp.transpose(r["c2_w"], (2, 3, 1, 0)).reshape(150, 16)
    p["c2_w"] = _pad_axis(w, 1, LANES).astype(jnp.bfloat16)
    p["c2_b"] = _prep_vec(r["c2_b"])
    p["c2_s"], p["c2_t"] = _prep_bn(r["bn2"])
    # fc1: torch (120,400) over features ordered (c=16,h=5,w=5); our compacted
    # flatten is (h,w,c) -> reorder, then pad K 400->512, N 120->128.
    w = jnp.transpose(r["fc1_w"].reshape(120, 16, 5, 5), (0, 2, 3, 1))  # (120,5,5,16)
    w = w.reshape(120, 400).T                                           # (400,120)
    w = _pad_axis(_pad_axis(w, 0, FC1_K_PAD), 1, LANES)                 # (512,128)
    p["fc1_w"] = w.astype(jnp.bfloat16)
    p["fc1_b"] = _prep_vec(r["fc1_b"])
    p["fc1_s"], p["fc1_t"] = _prep_bn(r["bn3"])
    # fc2: (84,120) -> (120,84) -> pad K 120->128, N 84->128
    w = _pad_axis(_pad_axis(r["fc2_w"].T, 0, LANES), 1, LANES)
    p["fc2_w"] = w.astype(jnp.bfloat16)
    p["fc2_b"] = _prep_vec(r["fc2_b"])
    p["fc2_s"], p["fc2_t"] = _prep_bn(r["bn4"])
    # fc3: (10,84) -> (84,10) -> pad K 84->128, N 10->128 (no activation/BN)
    w = _pad_axis(_pad_axis(r["fc3_w"].T, 0, LANES), 1, LANES)
    p["fc3_w"] = w.astype(jnp.bfloat16)
    p["fc3_b"] = _prep_vec(r["fc3_b"])
    return p


# ---------------------------------------------------------------------------
# Full forward pass (eval / inference semantics)
# ---------------------------------------------------------------------------
@jax.jit
def lenet_mix_forward(p, x_nchw):
    B = x_nchw.shape[0]
    x = jnp.transpose(x_nchw, (0, 2, 3, 1))                    # NHWC (B,32,32,3)

    # conv block 1: Conv(3->6,5) + LeakyReLU + BN2d + AvgPool2 (pool fused)
    patches, OH, OW = im2col_nhwc(x, 5, 5)                     # (B*28*28, 75)
    y = conv_lrelu_bn_pool(patches.astype(jnp.bfloat16),
                           p["c1_w"], p["c1_b"], p["c1_s"], p["c1_t"],
                           ow=OW)                              # (B*14*14, 128) bf16
    y = y.reshape(B, OH // 2, OW // 2, LANES)                  # (B,14,14,128)

    # conv block 2: Conv(6->16,5)+LeakyReLU+BN2d+Dropout(eval)+AvgPool2 (fused)
    patches, OH, OW = im2col_nhwc(y[..., :6], 5, 5)            # (B*10*10, 150) bf16
    y = conv_lrelu_bn_pool(patches, p["c2_w"], p["c2_b"],
                           p["c2_s"], p["c2_t"], ow=OW)        # (B*5*5, 128) bf16

    # compact the 16 valid channels, flatten (h,w,c) and pad K 400 -> 512
    xf = y[:, :16].reshape(B, 5 * 5 * 16)                      # (B,400) bf16
    xf = _pad_axis(xf, 1, FC1_K_PAD)                           # (B,512) bf16

    # fused FC head (fc1 weights pre-reordered from torch's (c,h,w) flatten)
    logits = fc_stack(xf, p)                                   # (B,128) f32
    return logits[:, :10]


if __name__ == "__main__":
    key = jax.random.PRNGKey(0)
    pkey, xkey = jax.random.split(key)
    raw = init_raw_params(pkey)
    params = prepare_params(raw)
    # CIFAR-sized input: Linear(400, ...) forces 3x32x32.
    x = jax.random.normal(xkey, (2, 3, 32, 32), dtype=jnp.float32)
    out = lenet_mix_forward(params, x)
    jax.block_until_ready(out)
    assert out.shape == (2, 10), out.shape
    assert bool(jnp.all(jnp.isfinite(out)))
    print("KERNEL_OK")
</pallas_src>

<mosaic_0001>
module attributes {stable_mosaic.version = 11 : i64} {
  func.func @_conv_lrelu_bn_pool_kernel(%arg0: i32, %arg1: memref<672x75xbf16, #tpu.memory_space<vmem>>, %arg2: memref<75x128xbf16, #tpu.memory_space<vmem>>, %arg3: memref<1x128xf32, #tpu.memory_space<vmem>>, %arg4: memref<1x128xf32, #tpu.memory_space<vmem>>, %arg5: memref<1x128xf32, #tpu.memory_space<vmem>>, %arg6: memref<168x128xbf16, #tpu.memory_space<vmem>>) attributes {dimension_semantics = [#tpu.dimension_semantics<parallel>], iteration_bounds = array<i64: 3>, scalar_prefetch = 0 : i64, scratch_operands = 0 : i64, tpu.core_type = #tpu.core_type<tc>, window_params = [{transform_indices = @transform_0, window_bounds = array<i64: 672, 75>}, {pipeline_mode = #tpu.pipeline_mode<synchronous>, transform_indices = @transform_1, window_bounds = array<i64: 75, 128>}, {pipeline_mode = #tpu.pipeline_mode<synchronous>, transform_indices = @transform_2, window_bounds = array<i64: 1, 128>}, {pipeline_mode = #tpu.pipeline_mode<synchronous>, transform_indices = @transform_3, window_bounds = array<i64: 1, 128>}, {pipeline_mode = #tpu.pipeline_mode<synchronous>, transform_indices = @transform_4, window_bounds = array<i64: 1, 128>}, {transform_indices = @transform_5, window_bounds = array<i64: 168, 128>}]} {
    %c0 = arith.constant 0 : index
    %c0_0 = arith.constant 0 : index
    %0 = vector.load %arg1[%c0, %c0_0] : memref<672x75xbf16, #tpu.memory_space<vmem>>, vector<672x75xbf16>
    %c0_1 = arith.constant 0 : index
    %c0_2 = arith.constant 0 : index
    %1 = vector.load %arg2[%c0_1, %c0_2] : memref<75x128xbf16, #tpu.memory_space<vmem>>, vector<75x128xbf16>
    %cst = arith.constant dense<0.000000e+00> : vector<672x128xf32>
    %2 = tpu.matmul %0, %1, %cst {dimension_numbers = #tpu.dot_dimension_numbers<[1], [0], [0], [1], [0, 0, 1, 1], [], []>} : vector<672x75xbf16>, vector<75x128xbf16>, vector<672x128xf32> -> vector<672x128xf32>
    %c0_3 = arith.constant 0 : index
    %c0_4 = arith.constant 0 : index
    %3 = vector.load %arg3[%c0_3, %c0_4] : memref<1x128xf32, #tpu.memory_space<vmem>>, vector<1x128xf32>
    %4 = vector.broadcast %3 : vector<1x128xf32> to vector<672x128xf32>
    %5 = arith.addf %2, %4 : vector<672x128xf32>
    %cst_5 = arith.constant 0.000000e+00 : f32
    %6 = vector.broadcast %cst_5 : f32 to vector<672x128xf32>
    %7 = arith.cmpf ogt, %5, %6 : vector<672x128xf32>
    %cst_6 = arith.constant 0.00999999977 : f32
    %8 = vector.broadcast %cst_6 : f32 to vector<672x128xf32>
    %9 = arith.mulf %8, %5 : vector<672x128xf32>
    %10 = arith.select %7, %5, %9 : vector<672x128xi1>, vector<672x128xf32>
    %c0_7 = arith.constant 0 : index
    %c0_8 = arith.constant 0 : index
    %11 = vector.load %arg4[%c0_7, %c0_8] : memref<1x128xf32, #tpu.memory_space<vmem>>, vector<1x128xf32>
    %12 = vector.broadcast %11 : vector<1x128xf32> to vector<672x128xf32>
    %13 = arith.mulf %10, %12 : vector<672x128xf32>
    %c0_9 = arith.constant 0 : index
    %c0_10 = arith.constant 0 : index
    %14 = vector.load %arg5[%c0_9, %c0_10] : memref<1x128xf32, #tpu.memory_space<vmem>>, vector<1x128xf32>
    %15 = vector.broadcast %14 : vector<1x128xf32> to vector<672x128xf32>
    %16 = arith.addf %13, %15 : vector<672x128xf32>
    %17 = vector.shape_cast %16 : vector<672x128xf32> to vector<12x2x28x128xf32>
    %18 = vector.extract_strided_slice %17 {offsets = [0, 0, 0, 0], sizes = [12, 1, 28, 128], strides = [1, 1, 1, 1]} : vector<12x2x28x128xf32> to vector<12x1x28x128xf32>
    %19 = vector.shape_cast %18 : vector<12x1x28x128xf32> to vector<12x28x128xf32>
    %20 = vector.extract_strided_slice %17 {offsets = [0, 1, 0, 0], sizes = [12, 1, 28, 128], strides = [1, 1, 1, 1]} : vector<12x2x28x128xf32> to vector<12x1x28x128xf32>
    %21 = vector.shape_cast %20 : vector<12x1x28x128xf32> to vector<12x28x128xf32>
    %22 = arith.addf %19, %21 : vector<12x28x128xf32>
    %23 = vector.shape_cast %22 : vector<12x28x128xf32> to vector<12x14x2x128xf32>
    %24 = vector.extract_strided_slice %23 {offsets = [0, 0, 0, 0], sizes = [12, 14, 1, 128], strides = [1, 1, 1, 1]} : vector<12x14x2x128xf32> to vector<12x14x1x128xf32>
    %25 = vector.shape_cast %24 : vector<12x14x1x128xf32> to vector<12x14x128xf32>
    %26 = vector.extract_strided_slice %23 {offsets = [0, 0, 1, 0], sizes = [12, 14, 1, 128], strides = [1, 1, 1, 1]} : vector<12x14x2x128xf32> to vector<12x14x1x128xf32>
    %27 = vector.shape_cast %26 : vector<12x14x1x128xf32> to vector<12x14x128xf32>
    %28 = arith.addf %25, %27 : vector<12x14x128xf32>
    %cst_11 = arith.constant 2.500000e-01 : f32
    %29 = vector.broadcast %cst_11 : f32 to vector<12x14x128xf32>
    %30 = arith.mulf %29, %28 : vector<12x14x128xf32>
    %31 = vector.shape_cast %30 : vector<12x14x128xf32> to vector<168x128xf32>
    %32 = arith.truncf %31 : vector<168x128xf32> to vector<168x128xbf16>
    %c0_12 = arith.constant 0 : index
    %c0_13 = arith.constant 0 : index
    %33 = vector.load %arg6[%c0_12, %c0_13] : memref<168x128xbf16, #tpu.memory_space<vmem>>, vector<168x128xbf16>
    tpu.vector_store %arg6[%c0_12, %c0_13], %32 {strides = array<i32>} : memref<168x128xbf16, #tpu.memory_space<vmem>>, vector<168x128xbf16>,
    return
  }
  func.func @transform_0(%arg0: i32) -> (i32, i32) {
    %c0_i32 = arith.constant 0 : i32
    %c0_i32_0 = arith.constant 0 : i32
    return %arg0, %c0_i32 : i32, i32
  }
  func.func @transform_1(%arg0: i32) -> (i32, i32) {
    %c0_i32 = arith.constant 0 : i32
    %c0_i32_0 = arith.constant 0 : i32
    %c0_i32_1 = arith.constant 0 : i32
    return %c0_i32, %c0_i32_0 : i32, i32
  }
  func.func @transform_2(%arg0: i32) -> (i32, i32) {
    %c0_i32 = arith.constant 0 : i32
    %c0_i32_0 = arith.constant 0 : i32
    %c0_i32_1 = arith.constant 0 : i32
    return %c0_i32, %c0_i32_0 : i32, i32
  }
  func.func @transform_3(%arg0: i32) -> (i32, i32) {
    %c0_i32 = arith.constant 0 : i32
    %c0_i32_0 = arith.constant 0 : i32
    %c0_i32_1 = arith.constant 0 : i32
    return %c0_i32, %c0_i32_0 : i32, i32
  }
  func.func @transform_4(%arg0: i32) -> (i32, i32) {
    %c0_i32 = arith.constant 0 : i32
    %c0_i32_0 = arith.constant 0 : i32
    %c0_i32_1 = arith.constant 0 : i32
    return %c0_i32, %c0_i32_0 : i32, i32
  }
  func.func @transform_5(%arg0: i32) -> (i32, i32) {
    %c0_i32 = arith.constant 0 : i32
    %c0_i32_0 = arith.constant 0 : i32
    return %arg0, %c0_i32 : i32, i32
  }
}

module attributes {stable_mosaic.version = 11 : i64} {
  func.func @_conv_lrelu_bn_pool_kernel(%arg0: i32, %arg1: memref<200x150xbf16, #tpu.memory_space<vmem>>, %arg2: memref<150x128xbf16, #tpu.memory_space<vmem>>, %arg3: memref<1x128xf32, #tpu.memory_space<vmem>>, %arg4: memref<1x128xf32, #tpu.memory_space<vmem>>, %arg5: memref<1x128xf32, #tpu.memory_space<vmem>>, %arg6: memref<50x128xbf16, #tpu.memory_space<vmem>>) attributes {dimension_semantics = [#tpu.dimension_semantics<parallel>], iteration_bounds = array<i64: 1>, scalar_prefetch = 0 : i64, scratch_operands = 0 : i64, tpu.core_type = #tpu.core_type<tc>, window_params = [{transform_indices = @transform_0, window_bounds = array<i64: 200, 150>}, {pipeline_mode = #tpu.pipeline_mode<synchronous>, transform_indices = @transform_1, window_bounds = array<i64: 150, 128>}, {pipeline_mode = #tpu.pipeline_mode<synchronous>, transform_indices = @transform_2, window_bounds = array<i64: 1, 128>}, {pipeline_mode = #tpu.pipeline_mode<synchronous>, transform_indices = @transform_3, window_bounds = array<i64: 1, 128>}, {pipeline_mode = #tpu.pipeline_mode<synchronous>, transform_indices = @transform_4, window_bounds = array<i64: 1, 128>}, {transform_indices = @transform_5, window_bounds = array<i64: 50, 128>}]} {
    %c0 = arith.constant 0 : index
    %c0_0 = arith.constant 0 : index
    %0 = vector.load %arg1[%c0, %c0_0] : memref<200x150xbf16, #tpu.memory_space<vmem>>, vector<200x150xbf16>
    %c0_1 = arith.constant 0 : index
    %c0_2 = arith.constant 0 : index
    %1 = vector.load %arg2[%c0_1, %c0_2] : memref<150x128xbf16, #tpu.memory_space<vmem>>, vector<150x128xbf16>
    %cst = arith.constant dense<0.000000e+00> : vector<200x128xf32>
    %2 = tpu.matmul %0, %1, %cst {dimension_numbers = #tpu.dot_dimension_numbers<[1], [0], [0], [1], [0, 0, 1, 1], [], []>} : vector<200x150xbf16>, vector<150x128xbf16>, vector<200x128xf32> -> vector<200x128xf32>
    %c0_3 = arith.constant 0 : index
    %c0_4 = arith.constant 0 : index
    %3 = vector.load %arg3[%c0_3, %c0_4] : memref<1x128xf32, #tpu.memory_space<vmem>>, vector<1x128xf32>
    %4 = vector.broadcast %3 : vector<1x128xf32> to vector<200x128xf32>
    %5 = arith.addf %2, %4 : vector<200x128xf32>
    %cst_5 = arith.constant 0.000000e+00 : f32
    %6 = vector.broadcast %cst_5 : f32 to vector<200x128xf32>
    %7 = arith.cmpf ogt, %5, %6 : vector<200x128xf32>
    %cst_6 = arith.constant 0.00999999977 : f32
    %8 = vector.broadcast %cst_6 : f32 to vector<200x128xf32>
    %9 = arith.mulf %8, %5 : vector<200x128xf32>
    %10 = arith.select %7, %5, %9 : vector<200x128xi1>, vector<200x128xf32>
    %c0_7 = arith.constant 0 : index
    %c0_8 = arith.constant 0 : index
    %11 = vector.load %arg4[%c0_7, %c0_8] : memref<1x128xf32, #tpu.memory_space<vmem>>, vector<1x128xf32>
    %12 = vector.broadcast %11 : vector<1x128xf32> to vector<200x128xf32>
    %13 = arith.mulf %10, %12 : vector<200x128xf32>
    %c0_9 = arith.constant 0 : index
    %c0_10 = arith.constant 0 : index
    %14 = vector.load %arg5[%c0_9, %c0_10] : memref<1x128xf32, #tpu.memory_space<vmem>>, vector<1x128xf32>
    %15 = vector.broadcast %14 : vector<1x128xf32> to vector<200x128xf32>
    %16 = arith.addf %13, %15 : vector<200x128xf32>
    %17 = vector.shape_cast %16 : vector<200x128xf32> to vector<10x2x10x128xf32>
    %18 = vector.extract_strided_slice %17 {offsets = [0, 0, 0, 0], sizes = [10, 1, 10, 128], strides = [1, 1, 1, 1]} : vector<10x2x10x128xf32> to vector<10x1x10x128xf32>
    %19 = vector.shape_cast %18 : vector<10x1x10x128xf32> to vector<10x10x128xf32>
    %20 = vector.extract_strided_slice %17 {offsets = [0, 1, 0, 0], sizes = [10, 1, 10, 128], strides = [1, 1, 1, 1]} : vector<10x2x10x128xf32> to vector<10x1x10x128xf32>
    %21 = vector.shape_cast %20 : vector<10x1x10x128xf32> to vector<10x10x128xf32>
    %22 = arith.addf %19, %21 : vector<10x10x128xf32>
    %23 = vector.shape_cast %22 : vector<10x10x128xf32> to vector<10x5x2x128xf32>
    %24 = vector.extract_strided_slice %23 {offsets = [0, 0, 0, 0], sizes = [10, 5, 1, 128], strides = [1, 1, 1, 1]} : vector<10x5x2x128xf32> to vector<10x5x1x128xf32>
    %25 = vector.shape_cast %24 : vector<10x5x1x128xf32> to vector<10x5x128xf32>
    %26 = vector.extract_strided_slice %23 {offsets = [0, 0, 1, 0], sizes = [10, 5, 1, 128], strides = [1, 1, 1, 1]} : vector<10x5x2x128xf32> to vector<10x5x1x128xf32>
    %27 = vector.shape_cast %26 : vector<10x5x1x128xf32> to vector<10x5x128xf32>
    %28 = arith.addf %25, %27 : vector<10x5x128xf32>
    %cst_11 = arith.constant 2.500000e-01 : f32
    %29 = vector.broadcast %cst_11 : f32 to vector<10x5x128xf32>
    %30 = arith.mulf %29, %28 : vector<10x5x128xf32>
    %31 = vector.shape_cast %30 : vector<10x5x128xf32> to vector<50x128xf32>
    %32 = arith.truncf %31 : vector<50x128xf32> to vector<50x128xbf16>
    %c0_12 = arith.constant 0 : index
    %c0_13 = arith.constant 0 : index
    %33 = vector.load %arg6[%c0_12, %c0_13] : memref<50x128xbf16, #tpu.memory_space<vmem>>, vector<50x128xbf16>
    tpu.vector_store %arg6[%c0_12, %c0_13], %32 {strides = array<i32>} : memref<50x128xbf16, #tpu.memory_space<vmem>>, vector<50x128xbf16>,
    return
  }
  func.func @transform_0(%arg0: i32) -> (i32, i32) {
    %c0_i32 = arith.constant 0 : i32
    %c0_i32_0 = arith.constant 0 : i32
    return %arg0, %c0_i32 : i32, i32
  }
  func.func @transform_1(%arg0: i32) -> (i32, i32) {
    %c0_i32 = arith.constant 0 : i32
    %c0_i32_0 = arith.constant 0 : i32
    %c0_i32_1 = arith.constant 0 : i32
    return %c0_i32, %c0_i32_0 : i32, i32
  }
  func.func @transform_2(%arg0: i32) -> (i32, i32) {
    %c0_i32 = arith.constant 0 : i32
    %c0_i32_0 = arith.constant 0 : i32
    %c0_i32_1 = arith.constant 0 : i32
    return %c0_i32, %c0_i32_0 : i32, i32
  }
  func.func @transform_3(%arg0: i32) -> (i32, i32) {
    %c0_i32 = arith.constant 0 : i32
    %c0_i32_0 = arith.constant 0 : i32
    %c0_i32_1 = arith.constant 0 : i32
    return %c0_i32, %c0_i32_0 : i32, i32
  }
  func.func @transform_4(%arg0: i32) -> (i32, i32) {
    %c0_i32 = arith.constant 0 : i32
    %c0_i32_0 = arith.constant 0 : i32
    %c0_i32_1 = arith.constant 0 : i32
    return %c0_i32, %c0_i32_0 : i32, i32
  }
  func.func @transform_5(%arg0: i32) -> (i32, i32) {
    %c0_i32 = arith.constant 0 : i32
    %c0_i32_0 = arith.constant 0 : i32
    return %arg0, %c0_i32 : i32, i32
  }
}

module attributes {stable_mosaic.version = 11 : i64} {
  func.func @_fc_stack_kernel(%arg0: i32, %arg1: memref<2x512xbf16, #tpu.memory_space<vmem>>, %arg2: memref<512x128xbf16, #tpu.memory_space<vmem>>, %arg3: memref<1x128xf32, #tpu.memory_space<vmem>>, %arg4: memref<1x128xf32, #tpu.memory_space<vmem>>, %arg5: memref<1x128xf32, #tpu.memory_space<vmem>>, %arg6: memref<128x128xbf16, #tpu.memory_space<vmem>>, %arg7: memref<1x128xf32, #tpu.memory_space<vmem>>, %arg8: memref<1x128xf32, #tpu.memory_space<vmem>>, %arg9: memref<1x128xf32, #tpu.memory_space<vmem>>, %arg10: memref<128x128xbf16, #tpu.memory_space<vmem>>, %arg11: memref<1x128xf32, #tpu.memory_space<vmem>>, %arg12: memref<2x128xf32, #tpu.memory_space<vmem>>) attributes {dimension_semantics = [#tpu.dimension_semantics<parallel>], iteration_bounds = array<i64: 1>, scalar_prefetch = 0 : i64, scratch_operands = 0 : i64, tpu.core_type = #tpu.core_type<tc>, window_params = [{transform_indices = @transform_0, window_bounds = array<i64: 2, 512>}, {pipeline_mode = #tpu.pipeline_mode<synchronous>, transform_indices = @transform_1, window_bounds = array<i64: 512, 128>}, {pipeline_mode = #tpu.pipeline_mode<synchronous>, transform_indices = @transform_2, window_bounds = array<i64: 1, 128>}, {pipeline_mode = #tpu.pipeline_mode<synchronous>, transform_indices = @transform_3, window_bounds = array<i64: 1, 128>}, {pipeline_mode = #tpu.pipeline_mode<synchronous>, transform_indices = @transform_4, window_bounds = array<i64: 1, 128>}, {pipeline_mode = #tpu.pipeline_mode<synchronous>, transform_indices = @transform_5, window_bounds = array<i64: 128, 128>}, {pipeline_mode = #tpu.pipeline_mode<synchronous>, transform_indices = @transform_6, window_bounds = array<i64: 1, 128>}, {pipeline_mode = #tpu.pipeline_mode<synchronous>, transform_indices = @transform_7, window_bounds = array<i64: 1, 128>}, {pipeline_mode = #tpu.pipeline_mode<synchronous>, transform_indices = @transform_8, window_bounds = array<i64: 1, 128>}, {pipeline_mode = #tpu.pipeline_mode<synchronous>, transform_indices = @transform_9, window_bounds = array<i64: 128, 128>}, {pipeline_mode = #tpu.pipeline_mode<synchronous>, transform_indices = @transform_10, window_bounds = array<i64: 1, 128>}, {transform_indices = @transform_11, window_bounds = array<i64: 2, 128>}]} {
    %c0 = arith.constant 0 : index
    %c0_0 = arith.constant 0 : index
    %0 = vector.load %arg1[%c0, %c0_0] : memref<2x512xbf16, #tpu.memory_space<vmem>>, vector<2x512xbf16>
    %c0_1 = arith.constant 0 : index
    %c0_2 = arith.constant 0 : index
    %1 = vector.load %arg2[%c0_1, %c0_2] : memref<512x128xbf16, #tpu.memory_space<vmem>>, vector<512x128xbf16>
    %cst = arith.constant dense<0.000000e+00> : vector<2x128xf32>
    %2 = tpu.matmul %0, %1, %cst {dimension_numbers = #tpu.dot_dimension_numbers<[1], [0], [0], [1], [0, 0, 1, 1], [], []>} : vector<2x512xbf16>, vector<512x128xbf16>, vector<2x128xf32> -> vector<2x128xf32>
    %c0_3 = arith.constant 0 : index
    %c0_4 = arith.constant 0 : index
    %3 = vector.load %arg3[%c0_3, %c0_4] : memref<1x128xf32, #tpu.memory_space<vmem>>, vector<1x128xf32>
    %4 = vector.broadcast %3 : vector<1x128xf32> to vector<2x128xf32>
    %5 = arith.addf %2, %4 : vector<2x128xf32>
    %cst_5 = arith.constant 0.000000e+00 : f32
    %6 = vector.broadcast %cst_5 : f32 to vector<2x128xf32>
    %7 = arith.cmpf ogt, %5, %6 : vector<2x128xf32>
    %cst_6 = arith.constant 0.00999999977 : f32
    %8 = vector.broadcast %cst_6 : f32 to vector<2x128xf32>
    %9 = arith.mulf %8, %5 : vector<2x128xf32>
    %10 = arith.select %7, %5, %9 : vector<2x128xi1>, vector<2x128xf32>
    %c0_7 = arith.constant 0 : index
    %c0_8 = arith.constant 0 : index
    %11 = vector.load %arg4[%c0_7, %c0_8] : memref<1x128xf32, #tpu.memory_space<vmem>>, vector<1x128xf32>
    %12 = vector.broadcast %11 : vector<1x128xf32> to vector<2x128xf32>
    %13 = arith.mulf %10, %12 : vector<2x128xf32>
    %c0_9 = arith.constant 0 : index
    %c0_10 = arith.constant 0 : index
    %14 = vector.load %arg5[%c0_9, %c0_10] : memref<1x128xf32, #tpu.memory_space<vmem>>, vector<1x128xf32>
    %15 = vector.broadcast %14 : vector<1x128xf32> to vector<2x128xf32>
    %16 = arith.addf %13, %15 : vector<2x128xf32>
    %17 = arith.truncf %16 : vector<2x128xf32> to vector<2x128xbf16>
    %c0_11 = arith.constant 0 : index
    %c0_12 = arith.constant 0 : index
    %18 = vector.load %arg6[%c0_11, %c0_12] : memref<128x128xbf16, #tpu.memory_space<vmem>>, vector<128x128xbf16>
    %cst_13 = arith.constant dense<0.000000e+00> : vector<2x128xf32>
    %19 = tpu.matmul %17, %18, %cst_13 {dimension_numbers = #tpu.dot_dimension_numbers<[1], [0], [0], [1], [0, 0, 1, 1], [], []>} : vector<2x128xbf16>, vector<128x128xbf16>, vector<2x128xf32> -> vector<2x128xf32>
    %c0_14 = arith.constant 0 : index
    %c0_15 = arith.constant 0 : index
    %20 = vector.load %arg7[%c0_14, %c0_15] : memref<1x128xf32, #tpu.memory_space<vmem>>, vector<1x128xf32>
    %21 = vector.broadcast %20 : vector<1x128xf32> to vector<2x128xf32>
    %22 = arith.addf %19, %21 : vector<2x128xf32>
    %cst_16 = arith.constant 0.000000e+00 : f32
    %23 = vector.broadcast %cst_16 : f32 to vector<2x128xf32>
    %24 = arith.cmpf ogt, %22, %23 : vector<2x128xf32>
    %cst_17 = arith.constant 0.00999999977 : f32
    %25 = vector.broadcast %cst_17 : f32 to vector<2x128xf32>
    %26 = arith.mulf %25, %22 : vector<2x128xf32>
    %27 = arith.select %24, %22, %26 : vector<2x128xi1>, vector<2x128xf32>
    %c0_18 = arith.constant 0 : index
    %c0_19 = arith.constant 0 : index
    %28 = vector.load %arg8[%c0_18, %c0_19] : memref<1x128xf32, #tpu.memory_space<vmem>>, vector<1x128xf32>
    %29 = vector.broadcast %28 : vector<1x128xf32> to vector<2x128xf32>
    %30 = arith.mulf %27, %29 : vector<2x128xf32>
    %c0_20 = arith.constant 0 : index
    %c0_21 = arith.constant 0 : index
    %31 = vector.load %arg9[%c0_20, %c0_21] : memref<1x128xf32, #tpu.memory_space<vmem>>, vector<1x128xf32>
    %32 = vector.broadcast %31 : vector<1x128xf32> to vector<2x128xf32>
    %33 = arith.addf %30, %32 : vector<2x128xf32>
    %34 = arith.truncf %33 : vector<2x128xf32> to vector<2x128xbf16>
    %c0_22 = arith.constant 0 : index
    %c0_23 = arith.constant 0 : index
    %35 = vector.load %arg10[%c0_22, %c0_23] : memref<128x128xbf16, #tpu.memory_space<vmem>>, vector<128x128xbf16>
    %cst_24 = arith.constant dense<0.000000e+00> : vector<2x128xf32>
    %36 = tpu.matmul %34, %35, %cst_24 {dimension_numbers = #tpu.dot_dimension_numbers<[1], [0], [0], [1], [0, 0, 1, 1], [], []>} : vector<2x128xbf16>, vector<128x128xbf16>, vector<2x128xf32> -> vector<2x128xf32>
    %c0_25 = arith.constant 0 : index
    %c0_26 = arith.constant 0 : index
    %37 = vector.load %arg11[%c0_25, %c0_26] : memref<1x128xf32, #tpu.memory_space<vmem>>, vector<1x128xf32>
    %38 = vector.broadcast %37 : vector<1x128xf32> to vector<2x128xf32>
    %39 = arith.addf %36, %38 : vector<2x128xf32>
    %c0_27 = arith.constant 0 : index
    %c0_28 = arith.constant 0 : index
    %40 = vector.load %arg12[%c0_27, %c0_28] : memref<2x128xf32, #tpu.memory_space<vmem>>, vector<2x128xf32>
    tpu.vector_store %arg12[%c0_27, %c0_28], %39 {strides = array<i32>} : memref<2x128xf32, #tpu.memory_space<vmem>>, vector<2x128xf32>,
    return
  }
  func.func @transform_0(%arg0: i32) -> (i32, i32) {
    %c0_i32 = arith.constant 0 : i32
    %c0_i32_0 = arith.constant 0 : i32
    return %arg0, %c0_i32 : i32, i32
  }
  func.func @transform_1(%arg0: i32) -> (i32, i32) {
    %c0_i32 = arith.constant 0 : i32
    %c0_i32_0 = arith.constant 0 : i32
    %c0_i32_1 = arith.constant 0 : i32
    return %c0_i32, %c0_i32_0 : i32, i32
  }
  func.func @transform_2(%arg0: i32) -> (i32, i32) {
    %c0_i32 = arith.constant 0 : i32
    %c0_i32_0 = arith.constant 0 : i32
    %c0_i32_1 = arith.constant 0 : i32
    return %c0_i32, %c0_i32_0 : i32, i32
  }
  func.func @transform_3(%arg0: i32) -> (i32, i32) {
    %c0_i32 = arith.constant 0 : i32
    %c0_i32_0 = arith.constant 0 : i32
    %c0_i32_1 = arith.constant 0 : i32
    return %c0_i32, %c0_i32_0 : i32, i32
  }
  func.func @transform_4(%arg0: i32) -> (i32, i32) {
    %c0_i32 = arith.constant 0 : i32
    %c0_i32_0 = arith.constant 0 : i32
    %c0_i32_1 = arith.constant 0 : i32
    return %c0_i32, %c0_i32_0 : i32, i32
  }
  func.func @transform_5(%arg0: i32) -> (i32, i32) {
    %c0_i32 = arith.constant 0 : i32
    %c0_i32_0 = arith.constant 0 : i32
    %c0_i32_1 = arith.constant 0 : i32
    return %c0_i32, %c0_i32_0 : i32, i32
  }
  func.func @transform_6(%arg0: i32) -> (i32, i32) {
    %c0_i32 = arith.constant 0 : i32
    %c0_i32_0 = arith.constant 0 : i32
    %c0_i32_1 = arith.constant 0 : i32
    return %c0_i32, %c0_i32_0 : i32, i32
  }
  func.func @transform_7(%arg0: i32) -> (i32, i32) {
    %c0_i32 = arith.constant 0 : i32
    %c0_i32_0 = arith.constant 0 : i32
    %c0_i32_1 = arith.constant 0 : i32
    return %c0_i32, %c0_i32_0 : i32, i32
  }
  func.func @transform_8(%arg0: i32) -> (i32, i32) {
    %c0_i32 = arith.constant 0 : i32
    %c0_i32_0 = arith.constant 0 : i32
    %c0_i32_1 = arith.constant 0 : i32
    return %c0_i32, %c0_i32_0 : i32, i32
  }
  func.func @transform_9(%arg0: i32) -> (i32, i32) {
    %c0_i32 = arith.constant 0 : i32
    %c0_i32_0 = arith.constant 0 : i32
    %c0_i32_1 = arith.constant 0 : i32
    return %c0_i32, %c0_i32_0 : i32, i32
  }
  func.func @transform_10(%arg0: i32) -> (i32, i32) {
    %c0_i32 = arith.constant 0 : i32
    %c0_i32_0 = arith.constant 0 : i32
    %c0_i32_1 = arith.constant 0 : i32
    return %c0_i32, %c0_i32_0 : i32, i32
  }
  func.func @transform_11(%arg0: i32) -> (i32, i32) {
    %c0_i32 = arith.constant 0 : i32
    %c0_i32_0 = arith.constant 0 : i32
    return %arg0, %c0_i32 : i32, i32
  }
}

</mosaic_0001>

<llo_original>
// kernel: lenet_mix_forward.3
$region0: #{lenet_mix_forward.3}
  #allocation0 [shape = 'u32[]', space=smem, size = 0x4, offset = 0x4, fixed_abs, tag = 'smem constant byte address 0x4 - core index']
  #allocation1 [shape = 'u32[72,128]{1,0:T(1,128)}', space=vmem, size = 0x9000, scoped, tag = 'internal scratch']
  %s0 = inlined_call_operand.vmem [shape: bf16[1568,75], index: 0, kind: input, shape index: {}]
  %s1 = inlined_call_operand.vmem [shape: bf16[75,128], index: 1, kind: input, shape index: {}]
  %s2 = inlined_call_operand.vmem [shape: f32[1,128], index: 2, kind: input, shape index: {}]
  %s3 = inlined_call_operand.vmem [shape: f32[1,128], index: 3, kind: input, shape index: {}]
  %s4 = inlined_call_operand.vmem [shape: f32[1,128], index: 4, kind: input, shape index: {}]
  %s5 = inlined_call_operand.vmem [shape: bf16[392,128], index: 5, kind: output, shape index: {}]
  %s6 = sld [smem:[#allocation0]]
  $region97: #{lenet_mix_forward.3} parent=0
    _
  %s8 = ssub.s32 1, %s6
  %s9 = scalar_select 0, %s8, %s6
  $region1: #{lenet_mix_forward.3} parent=0
    #allocation2 [shape = 'u8[86016]{0}', space=vmem, size = 0x15000, scoped, tag = 'output window, operand 0']
    loop: start=0, step=1, limit=5
    $region2: #{lenet_mix_forward.3} parent=1 // loop_pre_header
      _
    $region3: #{lenet_mix_forward.3} parent=1 // loop_header
      %s11 = sphi 0, %s15
      %p12 = scmp.ge.s32.totalorder %s11, 5
      %s21 = sphi 0, %s23
      %s24 = sphi 0, %s21
      %s25 = sphi 0, %s24
      %s41 = sphi 0, %s25
      %s45 = sphi 0, %s45
      %s47 = sphi 0, %s45
      %s48 = sphi 0, %s47
      %s62 = sphi 0, %s48
      %s66 = sphi 0, %s66
      %s68 = sphi 0, %s66
      %s69 = sphi 0, %s68
      %s83 = sphi 0, %s69
      %s87 = sphi 0, %s87
      %s89 = sphi 0, %s87
      %s90 = sphi 0, %s89
      %s104 = sphi 0, %s90
      %s108 = sphi 0, %s108
      %s110 = sphi 0, %s108
      %s111 = sphi 0, %s110
      %s125 = sphi 0, %s111
      %s131 = sphi 0, %s133
      %s134 = sphi 0, %s131
      %s135 = sphi 0, %s134
      %s151 = sphi 0, %s135
    $region4: #{lenet_mix_forward.3} parent=1 // loop_header_branch
      %14 = sbr.rel (%p12) target = $region8
    $region5: #{lenet_mix_forward.3} parent=1 // loop_body
      %s16 = ssub.s32 %s11, 1
      %s17 = ssub.s32 %s11, 2
      %s18 = sadd.s32 %s11, 1
      %s19 = ssub.s32 %s11, %s18
      %p20 = scmp.eq.s32.totalorder %s19, 0
      %s22 = sadd.s32 %s21, 1
      %s23 = scalar_select %p20, %s21, %s22
      %p26 = pneg %p20
      %p27 = scmp.eq.s32.totalorder %s11, 2
      %p28 = por %p26, %p27
      %p29 = scmp.ne.s32.totalorder %s21, %s24
      %p30 = scmp.eq.s32.totalorder %s11, 0
      %p31 = por %p29, %p30
      %p32 = scmp.ne.s32.totalorder %s21, %s24
      %p33 = scmp.eq.s32.totalorder %s16, 2
      %p34 = por %p32, %p33
      %p35 = scmp.ne.s32.totalorder %s24, %s25
      %p36 = scmp.eq.s32.totalorder %s16, 0
      %p37 = por %p35, %p36
      %p38 = scmp.ne.s32.totalorder %s24, %s25
      %p39 = scmp.eq.s32.totalorder %s17, 2
      %p40 = por %p38, %p39
      %p42 = scmp.ne.s32.totalorder %s25, %s41
      %p43 = scmp.eq.s32.totalorder %s17, 0
      %p44 = por %p42, %p43
      %s46 = sadd.s32 %s45, 1
      %p49 = scmp.eq.s32.totalorder %s11, 2
      %p50 = scmp.ne.s32.totalorder %s45, %s47
      %p51 = scmp.eq.s32.totalorder %s11, 0
      %p52 = por %p50, %p51
      %p53 = scmp.ne.s32.totalorder %s45, %s47
      %p54 = scmp.eq.s32.totalorder %s16, 2
      %p55 = por %p53, %p54
      %p56 = scmp.ne.s32.totalorder %s47, %s48
      %p57 = scmp.eq.s32.totalorder %s16, 0
      %p58 = por %p56, %p57
      %p59 = scmp.ne.s32.totalorder %s47, %s48
      %p60 = scmp.eq.s32.totalorder %s17, 2
      %p61 = por %p59, %p60
      %p63 = scmp.ne.s32.totalorder %s48, %s62
      %p64 = scmp.eq.s32.totalorder %s17, 0
      %p65 = por %p63, %p64
      %s67 = sadd.s32 %s66, 1
      %p70 = scmp.eq.s32.totalorder %s11, 2
      %p71 = scmp.ne.s32.totalorder %s66, %s68
      %p72 = scmp.eq.s32.totalorder %s11, 0
      %p73 = por %p71, %p72
      %p74 = scmp.ne.s32.totalorder %s66, %s68
      %p75 = scmp.eq.s32.totalorder %s16, 2
      %p76 = por %p74, %p75
      %p77 = scmp.ne.s32.totalorder %s68, %s69
      %p78 = scmp.eq.s32.totalorder %s16, 0
      %p79 = por %p77, %p78
      %p80 = scmp.ne.s32.totalorder %s68, %s69
      %p81 = scmp.eq.s32.totalorder %s17, 2
      %p82 = por %p80, %p81
      %p84 = scmp.ne.s32.totalorder %s69, %s83
      %p85 = scmp.eq.s32.totalorder %s17, 0
      %p86 = por %p84, %p85
      %s88 = sadd.s32 %s87, 1
      %p91 = scmp.eq.s32.totalorder %s11, 2
      %p92 = scmp.ne.s32.totalorder %s87, %s89
      %p93 = scmp.eq.s32.totalorder %s11, 0
      %p94 = por %p92, %p93
      %p95 = scmp.ne.s32.totalorder %s87, %s89
      %p96 = scmp.eq.s32.totalorder %s16, 2
      %p97 = por %p95, %p96
      %p98 = scmp.ne.s32.totalorder %s89, %s90
      %p99 = scmp.eq.s32.totalorder %s16, 0
      %p100 = por %p98, %p99
      %p101 = scmp.ne.s32.totalorder %s89, %s90
      %p102 = scmp.eq.s32.totalorder %s17, 2
      %p103 = por %p101, %p102
      %p105 = scmp.ne.s32.totalorder %s90, %s104
      %p106 = scmp.eq.s32.totalorder %s17, 0
      %p107 = por %p105, %p106
      %s109 = sadd.s32 %s108, 1
      %p112 = scmp.eq.s32.totalorder %s11, 2
      %p113 = scmp.ne.s32.totalorder %s108, %s110
      %p114 = scmp.eq.s32.totalorder %s11, 0
      %p115 = por %p113, %p114
      %p116 = scmp.ne.s32.totalorder %s108, %s110
      %p117 = scmp.eq.s32.totalorder %s16, 2
      %p118 = por %p116, %p117
      %p119 = scmp.ne.s32.totalorder %s110, %s111
      %p120 = scmp.eq.s32.totalorder %s16, 0
      %p121 = por %p119, %p120
      %p122 = scmp.ne.s32.totalorder %s110, %s111
      %p123 = scmp.eq.s32.totalorder %s17, 2
      %p124 = por %p122, %p123
      %p126 = scmp.ne.s32.totalorder %s111, %s125
      %p127 = scmp.eq.s32.totalorder %s17, 0
      %p128 = por %p126, %p127
      %s129 = ssub.s32 %s11, %s18
      %p130 = scmp.eq.s32.totalorder %s129, 0
      %s132 = sadd.s32 %s131, 1
      %s133 = scalar_select %p130, %s131, %s132
      %p136 = pneg %p130
      %p137 = scmp.eq.s32.totalorder %s11, 2
      %p138 = por %p136, %p137
      %p139 = scmp.ne.s32.totalorder %s131, %s134
      %p140 = scmp.eq.s32.totalorder %s11, 0
      %p141 = por %p139, %p140
      %p142 = scmp.ne.s32.totalorder %s131, %s134
      %p143 = scmp.eq.s32.totalorder %s16, 2
      %p144 = por %p142, %p143
      %p145 = scmp.ne.s32.totalorder %s134, %s135
      %p146 = scmp.eq.s32.totalorder %s16, 0
      %p147 = por %p145, %p146
      %p148 = scmp.ne.s32.totalorder %s134, %s135
      %p149 = scmp.eq.s32.totalorder %s17, 2
      %p150 = por %p148, %p149
      %p152 = scmp.ne.s32.totalorder %s135, %s151
      %p153 = scmp.eq.s32.totalorder %s17, 0
      %p154 = por %p152, %p153
      %p155 = scmp.le.s32.totalorder 1, %s11
      %p156 = scmp.lt.s32.totalorder %s11, 4
      %p157 = pnand %p155, %p156
      %p158 = pneg %p157
      // Predicated region
      $region9: #{lenet_mix_forward.3} parent=5 // pred_check
        _
      $region10: #{lenet_mix_forward.3} parent=5 // pred_check_branch
        %160 = sbr.rel (%p157) target = $region12
      $region11: #{lenet_mix_forward.3} parent=5 // pred_region
        %s161 = ssub.s32 %s11, 1
        // Predicated region
        $region13: #{lenet_mix_forward.3} parent=11 // pred_check
          %p162 = pneg %p58
        $region14: #{lenet_mix_forward.3} parent=11 // pred_check_branch
          %164 = sbr.rel (%p162) target = $region16
        $region15: #{lenet_mix_forward.3} parent=11 // pred_region
          _
        $region16: #{lenet_mix_forward.3} parent=11 // pred_fallthru
          _
        // Predicated region
        $region17: #{lenet_mix_forward.3} parent=11 // pred_check
          %p165 = pneg %p79
        $region18: #{lenet_mix_forward.3} parent=11 // pred_check_branch
          %167 = sbr.rel (%p165) target = $region20
        $region19: #{lenet_mix_forward.3} parent=11 // pred_region
          _
        $region20: #{lenet_mix_forward.3} parent=11 // pred_fallthru
          _
        // Predicated region
        $region21: #{lenet_mix_forward.3} parent=11 // pred_check
          %p168 = pneg %p100
        $region22: #{lenet_mix_forward.3} parent=11 // pred_check_branch
          %170 = sbr.rel (%p168) target = $region24
        $region23: #{lenet_mix_forward.3} parent=11 // pred_region
          _
        $region24: #{lenet_mix_forward.3} parent=11 // pred_fallthru
          _
        // Predicated region
        $region25: #{lenet_mix_forward.3} parent=11 // pred_check
          %p171 = pneg %p121
        $region26: #{lenet_mix_forward.3} parent=11 // pred_check_branch
          %173 = sbr.rel (%p171) target = $region28
        $region27: #{lenet_mix_forward.3} parent=11 // pred_region
          _
        $region28: #{lenet_mix_forward.3} parent=11 // pred_fallthru
          _
      $region12: #{lenet_mix_forward.3} parent=5 // pred_fallthru
        _
      %p174 = scmp.lt.s32.totalorder %s11, 3
      // Predicated region
      $region29: #{lenet_mix_forward.3} parent=5 // pred_check
        %p175 = pneg %p174
      $region30: #{lenet_mix_forward.3} parent=5 // pred_check_branch
        %177 = sbr.rel (%p175) target = $region32
      $region31: #{lenet_mix_forward.3} parent=5 // pred_region
        // Predicated region
        $region33: #{lenet_mix_forward.3} parent=31 // pred_check
          %p178 = pneg %p31
        $region34: #{lenet_mix_forward.3} parent=31 // pred_check_branch
          %180 = sbr.rel (%p178) target = $region36
        $region35: #{lenet_mix_forward.3} parent=31 // pred_region
          %s181 = smul.u32 84, %s11
          %s182 = ssub.s32 196, %s181
          %p183 = scmp.lt.s32.totalorder %s182, 84
          %s184 = scalar_select %p183, %s182, 84
          %s185 = smul.u32 4, %s184
          %p186 = scmp.lt.s32.totalorder %s181, 195
          %s187 = scalar_select %p186, %s181, 195
          %s188 = smul.addr %s187, 4
          %s189 = scalar_lea.vmem %s0, %s188
          %s190 = smul.u32 84, %s11
          %s191 = ssub.s32 196, %s190
          %p192 = scmp.lt.s32.totalorder %s191, 84
          %s193 = scalar_select %p192, %s191, 84
          %s194 = smul.u32 4, %s193
        $region36: #{lenet_mix_forward.3} parent=31 // pred_fallthru
          _
      $region32: #{lenet_mix_forward.3} parent=5 // pred_fallthru
        _
      %p195 = scmp.le.s32.totalorder 1, %s11
      %p196 = scmp.lt.s32.totalorder %s11, 4
      %p197 = pnand %p195, %p196
      %p198 = pneg %p197
      // Predicated region
      $region37: #{lenet_mix_forward.3} parent=5 // pred_check
        _
      $region38: #{lenet_mix_forward.3} parent=5 // pred_check_branch
        %200 = sbr.rel (%p197) target = $region40
      $region39: #{lenet_mix_forward.3} parent=5 // pred_region
        %s201 = ssub.s32 %s11, 1
        %s202 = smul.u32 84, %s16
        %s203 = ssub.s32 196, %s202
        %p204 = scmp.lt.s32.totalorder %s203, 84
        %s205 = scalar_select %p204, %s203, 84
        %s206 = smul.u32 4, %s205
        %p207 = scmp.lt.s32.totalorder %s202, 195
        %s208 = scalar_select %p207, %s202, 195
        %s209 = smul.addr %s208, 4
        %s210 = scalar_lea.vmem %s0, %s209
        %p211 = pneg %p37
        %p212 = pneg %p34
        %p213 = pneg %p58
        %p214 = pneg %p55
        %p215 = pneg %p79
        %p216 = pneg %p76
        %p217 = pneg %p100
        %p218 = pneg %p97
        %p219 = pneg %p121
        %p220 = pneg %p118
        %p221 = pneg %p147
        %p222 = pneg %p144
        %s223 = sand.u32 %s134, 1
        %s224 = sand.u32 %s134, 1
        %s225 = smul.addr %s224, 84
        %s226 = scalar_lea.vmem [#allocation2], %s225
        %s227 = smul.u32 84, %s16
        %s228 = ssub.s32 196, %s227
        %p229 = scmp.lt.s32.totalorder %s228, 84
        %s230 = scalar_select %p229, %s228, 84
        %s231 = smul.u32 4, %s230
        %p232 = scmp.lt.s32.totalorder %s227, 195
        %s233 = scalar_select %p232, %s227, 195
        %s234 = smul.addr %s233, 4
        %s235 = scalar_lea.vmem %s0, %s234
        %s236 = smul.u32 84, %s16
        %s237 = ssub.s32 196, %s236
        %p238 = scmp.lt.s32.totalorder %s237, 84
        %s239 = scalar_select %p238, %s237, 84
        %s240 = smul.u32 4, %s239
        %s241 = smul.u32 21, %s16
        %s242 = ssub.s32 49, %s241
        %p243 = scmp.lt.s32.totalorder %s242, 21
        %s244 = scalar_select %p243, %s242, 21
        %s245 = smul.u32 4, %s244
        %v247 = vld [vmem:[%s235] sm:$0xf]
        %v248 = vld [vmem:[%s235 + $0x4] sm:$0xf]
        %v249 = vld [vmem:[%s235 + $0x8] sm:$0xf]
        %v250 = vld [vmem:[%s235 + $0xc] sm:$0xf]
        %v251 = vld [vmem:[%s235 + $0x10] sm:$0xf]
        %v252 = vld [vmem:[%s235 + $0x14] sm:$0xf]
        %v253 = vld [vmem:[%s235 + $0x18] sm:$0xf]
        %v254 = vld [vmem:[%s235 + $0x1c] sm:$0xf]
        %v255 = vld [vmem:[%s235 + $0x20] sm:$0xf]
        %v256 = vld [vmem:[%s235 + $0x24] sm:$0xf]
        %v257 = vld [vmem:[%s235 + $0x28] sm:$0xf]
        %v258 = vld [vmem:[%s235 + $0x2c] sm:$0xf]
        %v259 = vld [vmem:[%s235 + $0x30] sm:$0xf]
        %v260 = vld [vmem:[%s235 + $0x34] sm:$0xf]
        %v261 = vld [vmem:[%s235 + $0x38] sm:$0xf]
        %v262 = vld [vmem:[%s235 + $0x3c] sm:$0xf]
        %v263 = vld [vmem:[%s235 + $0x40] sm:$0xf]
        %v264 = vld [vmem:[%s235 + $0x44] sm:$0xf]
        %v265 = vld [vmem:[%s235 + $0x48] sm:$0xf]
        %v266 = vld [vmem:[%s235 + $0x4c] sm:$0xf]
        %v267 = vld [vmem:[%s235 + $0x50] sm:$0xf]
        %v268 = vld [vmem:[%s235 + $0x54] sm:$0xf]
        %v269 = vld [vmem:[%s235 + $0x58] sm:$0xf]
        %v270 = vld [vmem:[%s235 + $0x5c] sm:$0xf]
        %v271 = vld [vmem:[%s235 + $0x60] sm:$0xf]
        %v272 = vld [vmem:[%s235 + $0x64] sm:$0xf]
        %v273 = vld [vmem:[%s235 + $0x68] sm:$0xf]
        %v274 = vld [vmem:[%s235 + $0x6c] sm:$0xf]
        %v275 = vld [vmem:[%s235 + $0x70] sm:$0xf]
        %v276 = vld [vmem:[%s235 + $0x74] sm:$0xf]
        %v277 = vld [vmem:[%s235 + $0x78] sm:$0xf]
        %v278 = vld [vmem:[%s235 + $0x7c] sm:$0xf]
        %v279 = vld [vmem:[%s235 + $0x80] sm:$0xf]
        %v280 = vld [vmem:[%s235 + $0x84] sm:$0xf]
        %v281 = vld [vmem:[%s235 + $0x88] sm:$0xf]
        %v282 = vld [vmem:[%s235 + $0x8c] sm:$0xf]
        %v283 = vld [vmem:[%s235 + $0x90] sm:$0xf]
        %v284 = vld [vmem:[%s235 + $0x94] sm:$0xf]
        %v285 = vld [vmem:[%s235 + $0x98] sm:$0xf]
        %v286 = vld [vmem:[%s235 + $0x9c] sm:$0xf]
        %v287 = vld [vmem:[%s235 + $0xa0] sm:$0xf]
        %v288 = vld [vmem:[%s235 + $0xa4] sm:$0xf]
        %v289 = vld [vmem:[%s235 + $0xa8] sm:$0xf]
        %v290 = vld [vmem:[%s235 + $0xac] sm:$0xf]
        %v291 = vld [vmem:[%s235 + $0xb0] sm:$0xf]
        %v292 = vld [vmem:[%s235 + $0xb4] sm:$0xf]
        %v293 = vld [vmem:[%s235 + $0xb8] sm:$0xf]
        %v294 = vld [vmem:[%s235 + $0xbc] sm:$0xf]
        %v295 = vld [vmem:[%s235 + $0xc0] sm:$0xf]
        %v296 = vld [vmem:[%s235 + $0xc4] sm:$0xf]
        %v297 = vld [vmem:[%s235 + $0xc8] sm:$0xf]
        %v298 = vld [vmem:[%s235 + $0xcc] sm:$0xf]
        %v299 = vld [vmem:[%s235 + $0xd0] sm:$0xf]
        %v300 = vld [vmem:[%s235 + $0xd4] sm:$0xf]
        %v301 = vld [vmem:[%s235 + $0xd8] sm:$0xf]
        %v302 = vld [vmem:[%s235 + $0xdc] sm:$0xf]
        %v303 = vld [vmem:[%s235 + $0xe0] sm:$0xf]
        %v304 = vld [vmem:[%s235 + $0xe4] sm:$0xf]
        %v305 = vld [vmem:[%s235 + $0xe8] sm:$0xf]
        %v306 = vld [vmem:[%s235 + $0xec] sm:$0xf]
        %v307 = vld [vmem:[%s235 + $0xf0] sm:$0xf]
        %v308 = vld [vmem:[%s235 + $0xf4] sm:$0xf]
        %v309 = vld [vmem:[%s235 + $0xf8] sm:$0xf]
        %v310 = vld [vmem:[%s235 + $0xfc] sm:$0xf]
        %v311 = vld [vmem:[%s235 + $0x100] sm:$0xf]
        %v312 = vld [vmem:[%s235 + $0x104] sm:$0xf]
        %v313 = vld [vmem:[%s235 + $0x108] sm:$0xf]
        %v314 = vld [vmem:[%s235 + $0x10c] sm:$0xf]
        %v315 = vld [vmem:[%s235 + $0x110] sm:$0xf]
        %v316 = vld [vmem:[%s235 + $0x114] sm:$0xf]
        %v317 = vld [vmem:[%s235 + $0x118] sm:$0xf]
        %v318 = vld [vmem:[%s235 + $0x11c] sm:$0xf]
        %v319 = vld [vmem:[%s235 + $0x120] sm:$0xf]
        %v320 = vld [vmem:[%s235 + $0x124] sm:$0xf]
        %v321 = vld [vmem:[%s235 + $0x128] sm:$0xf]
        %v322 = vld [vmem:[%s235 + $0x12c] sm:$0xf]
        %v323 = vld [vmem:[%s235 + $0x130] sm:$0xf]
        %v324 = vld [vmem:[%s235 + $0x134] sm:$0xf]
        %v325 = vld [vmem:[%s235 + $0x138] sm:$0xf]
        %v326 = vld [vmem:[%s235 + $0x13c] sm:$0xf]
        %v327 = vld [vmem:[%s235 + $0x140] sm:$0xf]
        %v328 = vld [vmem:[%s235 + $0x144] sm:$0xf]
        %v329 = vld [vmem:[%s235 + $0x148] sm:$0xf]
        %v330 = vld [vmem:[%s235 + $0x14c] sm:$0xf]
        %v331 = vld [vmem:[%s1] sm:$0xf]
        %v332 = vld [vmem:[%s1 + $0x4] sm:$0xf]
        %v333 = vld [vmem:[%s1 + $0x8] sm:$0xf]
        %v334 = vld [vmem:[%s1 + $0xc] sm:$0xf]
        %v335 = vld [vmem:[%s1 + $0x10] sm:$0xf]
        %v336 = vld [vmem:[%s1 + $0x14] sm:$0xf]
        %v337 = vld [vmem:[%s1 + $0x18] sm:$0xf]
        %v338 = vld [vmem:[%s1 + $0x1c] sm:$0xf]
        %v339 = vld [vmem:[%s1 + $0x20] sm:$0xf]
        %v340 = vld [vmem:[%s1 + $0x24] sm:$0x3]
        %v341 = vld [vmem:[%s2] sm:$0x1]
        %v343 = vperm.slane %v341, 0
        %v429 = vunpack.c.l.b16 %v247
        %v430 = vunpack.c.l.b16 %v248
        %v431 = vunpack.c.l.b16 %v249
        %v432 = vunpack.c.l.b16 %v250
        %v433 = vunpack.c.l.b16 %v251
        %v434 = vunpack.c.l.b16 %v252
        %v435 = vunpack.c.l.b16 %v253
        %v436 = vunpack.c.l.b16 %v254
        %v437 = vunpack.c.l.b16 %v255
        %v438 = vunpack.c.l.b16 %v256
        %v439 = vunpack.c.l.b16 %v257
        %v440 = vunpack.c.l.b16 %v258
        %v441 = vunpack.c.l.b16 %v259
        %v442 = vunpack.c.l.b16 %v260
        %v443 = vunpack.c.l.b16 %v261
        %v444 = vunpack.c.l.b16 %v262
        %v445 = vunpack.c.l.b16 %v263
        %v446 = vunpack.c.l.b16 %v264
        %v447 = vunpack.c.l.b16 %v265
        %v448 = vunpack.c.l.b16 %v266
        %v449 = vunpack.c.l.b16 %v267
        %v450 = vunpack.c.l.b16 %v268
        %v451 = vunpack.c.l.b16 %v269
        %v452 = vunpack.c.l.b16 %v270
        %v453 = vunpack.c.l.b16 %v271
        %v454 = vunpack.c.l.b16 %v272
        %v455 = vunpack.c.l.b16 %v273
        %v456 = vunpack.c.l.b16 %v274
        %v457 = vunpack.c.l.b16 %v275
        %v458 = vunpack.c.l.b16 %v276
        %v459 = vunpack.c.l.b16 %v277
        %v460 = vunpack.c.l.b16 %v278
        %v461 = vunpack.c.l.b16 %v279
        %v462 = vunpack.c.l.b16 %v280
        %v463 = vunpack.c.l.b16 %v281
        %v464 = vunpack.c.l.b16 %v282
        %v465 = vunpack.c.l.b16 %v283
        %v466 = vunpack.c.l.b16 %v284
        %v467 = vunpack.c.l.b16 %v285
        %v468 = vunpack.c.l.b16 %v286
        %v469 = vunpack.c.l.b16 %v287
        %v470 = vunpack.c.l.b16 %v288
        %v471 = vunpack.c.l.b16 %v289
        %v472 = vunpack.c.l.b16 %v290
        %v473 = vunpack.c.l.b16 %v291
        %v474 = vunpack.c.l.b16 %v292
        %v475 = vunpack.c.l.b16 %v293
        %v476 = vunpack.c.l.b16 %v294
        %v477 = vunpack.c.l.b16 %v295
        %v478 = vunpack.c.l.b16 %v296
        %v479 = vunpack.c.l.b16 %v297
        %v480 = vunpack.c.l.b16 %v298
        %v481 = vunpack.c.l.b16 %v299
        %v482 = vunpack.c.l.b16 %v300
        %v483 = vunpack.c.l.b16 %v301
        %v484 = vunpack.c.l.b16 %v302
        %v485 = vunpack.c.l.b16 %v303
        %v486 = vunpack.c.l.b16 %v304
        %v487 = vunpack.c.l.b16 %v305
        %v488 = vunpack.c.l.b16 %v306
        %v489 = vunpack.c.l.b16 %v307
        %v490 = vunpack.c.l.b16 %v308
        %v491 = vunpack.c.l.b16 %v309
        %v492 = vunpack.c.l.b16 %v310
        %v493 = vunpack.c.l.b16 %v311
        %v494 = vunpack.c.l.b16 %v312
        %v495 = vunpack.c.l.b16 %v313
        %v496 = vunpack.c.l.b16 %v314
        %v497 = vunpack.c.l.b16 %v315
        %v498 = vunpack.c.l.b16 %v316
        %v499 = vunpack.c.l.b16 %v317
        %v500 = vunpack.c.l.b16 %v318
        %v501 = vunpack.c.l.b16 %v319
        %v502 = vunpack.c.l.b16 %v320
        %v503 = vunpack.c.l.b16 %v321
        %v504 = vunpack.c.l.b16 %v322
        %v505 = vunpack.c.l.b16 %v323
        %v506 = vunpack.c.l.b16 %v324
        %v507 = vunpack.c.l.b16 %v325
        %v508 = vunpack.c.l.b16 %v326
        %v509 = vunpack.c.l.b16 %v327
        %v510 = vunpack.c.l.b16 %v328
        %v511 = vunpack.c.l.b16 %v329
        %v512 = vunpack.c.l.b16 %v330
        %v513 = vpack.c.b16 %v430, %v429
        %v514 = vpack.c.b16 %v432, %v431
        %v515 = vpack.c.b16 %v434, %v433
        %v516 = vpack.c.b16 %v436, %v435
        %v517 = vpack.c.b16 %v438, %v437
        %v518 = vpack.c.b16 %v440, %v439
        %v519 = vpack.c.b16 %v442, %v441
        %v520 = vpack.c.b16 %v444, %v443
        %v521 = vpack.c.b16 %v446, %v445
        %v522 = vpack.c.b16 %v448, %v447
        %v523 = vpack.c.b16 %v450, %v449
        %v524 = vpack.c.b16 %v452, %v451
        %v525 = vpack.c.b16 %v454, %v453
        %v526 = vpack.c.b16 %v456, %v455
        %v527 = vpack.c.b16 %v458, %v457
        %v528 = vpack.c.b16 %v460, %v459
        %v529 = vpack.c.b16 %v462, %v461
        %v530 = vpack.c.b16 %v464, %v463
        %v531 = vpack.c.b16 %v466, %v465
        %v532 = vpack.c.b16 %v468, %v467
        %v533 = vpack.c.b16 %v470, %v469
        %v534 = vpack.c.b16 %v472, %v471
        %v535 = vpack.c.b16 %v474, %v473
        %v536 = vpack.c.b16 %v476, %v475
        %v537 = vpack.c.b16 %v478, %v477
        %v538 = vpack.c.b16 %v480, %v479
        %v539 = vpack.c.b16 %v482, %v481
        %v540 = vpack.c.b16 %v484, %v483
        %v541 = vpack.c.b16 %v486, %v485
        %v542 = vpack.c.b16 %v488, %v487
        %v543 = vpack.c.b16 %v490, %v489
        %v544 = vpack.c.b16 %v492, %v491
        %v545 = vpack.c.b16 %v494, %v493
        %v546 = vpack.c.b16 %v496, %v495
        %v547 = vpack.c.b16 %v498, %v497
        %v548 = vpack.c.b16 %v500, %v499
        %v549 = vpack.c.b16 %v502, %v501
        %v550 = vpack.c.b16 %v504, %v503
        %v551 = vpack.c.b16 %v506, %v505
        %v552 = vpack.c.b16 %v508, %v507
        %v553 = vpack.c.b16 %v510, %v509
        %v554 = vpack.c.b16 %v512, %v511
        %v565 = vunpack.c.l.b16 %v331
        %v566 = vunpack.c.l.b16 %v332
        %v567 = vunpack.c.l.b16 %v333
        %v568 = vunpack.c.l.b16 %v334
        %v569 = vunpack.c.l.b16 %v335
        %v570 = vunpack.c.l.b16 %v336
        %v571 = vunpack.c.l.b16 %v337
        %v572 = vunpack.c.l.b16 %v338
        %v573 = vunpack.c.l.b16 %v339
        %v574 = vunpack.c.l.b16 %v340
        %v575 = vpack.c.b16 %v566, %v565
        %v576 = vpack.c.b16 %v568, %v567
        %v577 = vpack.c.b16 %v570, %v569
        %v578 = vpack.c.b16 %v572, %v571
        %v579 = vpack.c.b16 %v574, %v573
        %vm584 = vcmask 613376
        %v586 = vsel %vm584, %v513, 0
        %v589 = vsel %vm584, %v514, 0
        %v592 = vsel %vm584, %v515, 0
        %v595 = vsel %vm584, %v516, 0
        %v598 = vsel %vm584, %v517, 0
        %v601 = vsel %vm584, %v518, 0
        %v604 = vsel %vm584, %v519, 0
        %v607 = vsel %vm584, %v520, 0
        %v610 = vsel %vm584, %v521, 0
        %v613 = vsel %vm584, %v522, 0
        %v616 = vsel %vm584, %v523, 0
        %v619 = vsel %vm584, %v524, 0
        %v622 = vsel %vm584, %v525, 0
        %v625 = vsel %vm584, %v526, 0
        %v628 = vsel %vm584, %v527, 0
        %v631 = vsel %vm584, %v528, 0
        %v634 = vsel %vm584, %v529, 0
        %v637 = vsel %vm584, %v530, 0
        %v640 = vsel %vm584, %v531, 0
        %v643 = vsel %vm584, %v532, 0
        %v646 = vsel %vm584, %v533, 0
        %v649 = vsel %vm584, %v534, 0
        %v652 = vsel %vm584, %v535, 0
        %v655 = vsel %vm584, %v536, 0
        %v658 = vsel %vm584, %v537, 0
        %v661 = vsel %vm584, %v538, 0
        %v664 = vsel %vm584, %v539, 0
        %v667 = vsel %vm584, %v540, 0
        %v670 = vsel %vm584, %v541, 0
        %v673 = vsel %vm584, %v542, 0
        %v676 = vsel %vm584, %v543, 0
        %v679 = vsel %vm584, %v544, 0
        %v682 = vsel %vm584, %v545, 0
        %v685 = vsel %vm584, %v546, 0
        %v688 = vsel %vm584, %v547, 0
        %v691 = vsel %vm584, %v548, 0
        %v694 = vsel %vm584, %v549, 0
        %v697 = vsel %vm584, %v550, 0
        %v700 = vsel %vm584, %v551, 0
        %v703 = vsel %vm584, %v552, 0
        %v706 = vsel %vm584, %v553, 0
        %v709 = vsel %vm584, %v554, 0
        %vm711 = vcmask 1044480
        %vm712 = vcmask 1045504
        %v713 = vsel %vm711, 4294967295, 65535
        %v714 = vsel %vm712, %v713, 0
        %v716 = vand.u32 %v579, %v714
        %718 = vmatpush.bf16.msra.mxu0 0
        %719 = vmatpush.bf16.msra.mxu0 0
        %720 = vmatpush.bf16.msra.mxu0 0
        %721 = vmatpush.bf16.msra.mxu0 %v716
        %722 = vmatpush.bf16.msra.mxu0 %v578
        %723 = vmatpush.bf16.msra.mxu0 %v577
        %724 = vmatpush.bf16.msra.mxu0 %v576
        %725 = vmatpush.bf16.msra.mxu0 %v575
        %726 = vmatmul.bf16.gmra.mxu0 %v586
        %v727 = vpop.f32.mrf.mxu0
        %v728 = vadd.f32 %v343, %v727
        %v729 = vpop.f32.mrf.mxu0
        %v730 = vadd.f32 %v343, %v729
        %731 = vmatmul.bf16.gmra.mxu0 %v589
        %v732 = vpop.f32.mrf.mxu0
        %v733 = vadd.f32 %v343, %v732
        %v734 = vpop.f32.mrf.mxu0
        %v735 = vadd.f32 %v343, %v734
        %736 = vmatmul.bf16.gmra.mxu0 %v592
        %v737 = vpop.f32.mrf.mxu0
        %v738 = vadd.f32 %v343, %v737
        %v739 = vpop.f32.mrf.mxu0
        %v740 = vadd.f32 %v343, %v739
        %741 = vmatmul.bf16.gmra.mxu0 %v595
        %v742 = vpop.f32.mrf.mxu0
        %v743 = vadd.f32 %v343, %v742
        %v744 = vpop.f32.mrf.mxu0
        %v745 = vadd.f32 %v343, %v744
        %746 = vmatmul.bf16.gmra.mxu0 %v598
        %v747 = vpop.f32.mrf.mxu0
        %v748 = vadd.f32 %v343, %v747
        %v749 = vpop.f32.mrf.mxu0
        %v750 = vadd.f32 %v343, %v749
        %751 = vmatmul.bf16.gmra.mxu0 %v601
        %v752 = vpop.f32.mrf.mxu0
        %v753 = vadd.f32 %v343, %v752
        %v754 = vpop.f32.mrf.mxu0
        %v755 = vadd.f32 %v343, %v754
        %756 = vmatmul.bf16.gmra.mxu0 %v604
        %v757 = vpop.f32.mrf.mxu0
        %v758 = vadd.f32 %v343, %v757
        %v759 = vpop.f32.mrf.mxu0
        %v760 = vadd.f32 %v343, %v759
        %761 = vmatmul.bf16.gmra.mxu0 %v607
        %v762 = vpop.f32.mrf.mxu0
        %v763 = vadd.f32 %v343, %v762
        %v764 = vpop.f32.mrf.mxu0
        %v765 = vadd.f32 %v343, %v764
        %766 = vmatmul.bf16.gmra.mxu0 %v610
        %v767 = vpop.f32.mrf.mxu0
        %v768 = vadd.f32 %v343, %v767
        %v769 = vpop.f32.mrf.mxu0
        %v770 = vadd.f32 %v343, %v769
        %771 = vmatmul.bf16.gmra.mxu0 %v613
        %v772 = vpop.f32.mrf.mxu0
        %v773 = vadd.f32 %v343, %v772
        %v774 = vpop.f32.mrf.mxu0
        %v775 = vadd.f32 %v343, %v774
        %776 = vmatmul.bf16.gmra.mxu0 %v616
        %v777 = vpop.f32.mrf.mxu0
        %v778 = vadd.f32 %v343, %v777
        %v779 = vpop.f32.mrf.mxu0
        %v780 = vadd.f32 %v343, %v779
        %781 = vmatmul.bf16.gmra.mxu0 %v619
        %v782 = vpop.f32.mrf.mxu0
        %v783 = vadd.f32 %v343, %v782
        %v784 = vpop.f32.mrf.mxu0
        %v785 = vadd.f32 %v343, %v784
        %786 = vmatmul.bf16.gmra.mxu0 %v622
        %v787 = vpop.f32.mrf.mxu0
        %v788 = vadd.f32 %v343, %v787
        %v789 = vpop.f32.mrf.mxu0
        %v790 = vadd.f32 %v343, %v789
        %791 = vmatmul.bf16.gmra.mxu0 %v625
        %v792 = vpop.f32.mrf.mxu0
        %v793 = vadd.f32 %v343, %v792
        %v794 = vpop.f32.mrf.mxu0
        %v795 = vadd.f32 %v343, %v794
        %796 = vmatmul.bf16.gmra.mxu0 %v628
        %v797 = vpop.f32.mrf.mxu0
        %v798 = vadd.f32 %v343, %v797
        %v799 = vpop.f32.mrf.mxu0
        %v800 = vadd.f32 %v343, %v799
        %801 = vmatmul.bf16.gmra.mxu0 %v631
        %v802 = vpop.f32.mrf.mxu0
        %v803 = vadd.f32 %v343, %v802
        %v804 = vpop.f32.mrf.mxu0
        %v805 = vadd.f32 %v343, %v804
        %806 = vmatmul.bf16.gmra.mxu0 %v634
        %v807 = vpop.f32.mrf.mxu0
        %v808 = vadd.f32 %v343, %v807
        %v809 = vpop.f32.mrf.mxu0
        %v810 = vadd.f32 %v343, %v809
        %811 = vmatmul.bf16.gmra.mxu0 %v637
        %v812 = vpop.f32.mrf.mxu0
        %v813 = vadd.f32 %v343, %v812
        %v814 = vpop.f32.mrf.mxu0
        %v815 = vadd.f32 %v343, %v814
        %816 = vmatmul.bf16.gmra.mxu0 %v640
        %v817 = vpop.f32.mrf.mxu0
        %v818 = vadd.f32 %v343, %v817
        %v819 = vpop.f32.mrf.mxu0
        %v820 = vadd.f32 %v343, %v819
        %821 = vmatmul.bf16.gmra.mxu0 %v643
        %v822 = vpop.f32.mrf.mxu0
        %v823 = vadd.f32 %v343, %v822
        %v824 = vpop.f32.mrf.mxu0
        %v825 = vadd.f32 %v343, %v824
        %826 = vmatmul.bf16.gmra.mxu0 %v646
        %v827 = vpop.f32.mrf.mxu0
        %v828 = vadd.f32 %v343, %v827
        %v829 = vpop.f32.mrf.mxu0
        %v830 = vadd.f32 %v343, %v829
        %831 = vmatmul.bf16.gmra.mxu0 %v649
        %v832 = vpop.f32.mrf.mxu0
        %v833 = vadd.f32 %v343, %v832
        %v834 = vpop.f32.mrf.mxu0
        %v835 = vadd.f32 %v343, %v834
        %836 = vmatmul.bf16.gmra.mxu0 %v652
        %v837 = vpop.f32.mrf.mxu0
        %v838 = vadd.f32 %v343, %v837
        %v839 = vpop.f32.mrf.mxu0
        %v840 = vadd.f32 %v343, %v839
        %841 = vmatmul.bf16.gmra.mxu0 %v655
        %v842 = vpop.f32.mrf.mxu0
        %v843 = vadd.f32 %v343, %v842
        %v844 = vpop.f32.mrf.mxu0
        %v845 = vadd.f32 %v343, %v844
        %846 = vmatmul.bf16.gmra.mxu0 %v658
        %v847 = vpop.f32.mrf.mxu0
        %v848 = vadd.f32 %v343, %v847
        %v849 = vpop.f32.mrf.mxu0
        %v850 = vadd.f32 %v343, %v849
        %851 = vmatmul.bf16.gmra.mxu0 %v661
        %v852 = vpop.f32.mrf.mxu0
        %v853 = vadd.f32 %v343, %v852
        %v854 = vpop.f32.mrf.mxu0
        %v855 = vadd.f32 %v343, %v854
        %856 = vmatmul.bf16.gmra.mxu0 %v664
        %v857 = vpop.f32.mrf.mxu0
        %v858 = vadd.f32 %v343, %v857
        %v859 = vpop.f32.mrf.mxu0
        %v860 = vadd.f32 %v343, %v859
        %861 = vmatmul.bf16.gmra.mxu0 %v667
        %v862 = vpop.f32.mrf.mxu0
        %v863 = vadd.f32 %v343, %v862
        %v864 = vpop.f32.mrf.mxu0
        %v865 = vadd.f32 %v343, %v864
        %866 = vmatmul.bf16.gmra.mxu0 %v670
        %v867 = vpop.f32.mrf.mxu0
        %v868 = vadd.f32 %v343, %v867
        %v869 = vpop.f32.mrf.mxu0
        %v870 = vadd.f32 %v343, %v869
        %871 = vmatmul.bf16.gmra.mxu0 %v673
        %v872 = vpop.f32.mrf.mxu0
        %v873 = vadd.f32 %v343, %v872
        %v874 = vpop.f32.mrf.mxu0
        %v875 = vadd.f32 %v343, %v874
        %876 = vmatmul.bf16.gmra.mxu0 %v676
        %v877 = vpop.f32.mrf.mxu0
        %v878 = vadd.f32 %v343, %v877
        %v879 = vpop.f32.mrf.mxu0
        %v880 = vadd.f32 %v343, %v879
        %881 = vmatmul.bf16.gmra.mxu0 %v679
        %v882 = vpop.f32.mrf.mxu0
        %v883 = vadd.f32 %v343, %v882
        %v884 = vpop.f32.mrf.mxu0
        %v885 = vadd.f32 %v343, %v884
        %886 = vmatmul.bf16.gmra.mxu0 %v682
        %v887 = vpop.f32.mrf.mxu0
        %v888 = vadd.f32 %v343, %v887
        %v889 = vpop.f32.mrf.mxu0
        %v890 = vadd.f32 %v343, %v889
        %891 = vmatmul.bf16.gmra.mxu0 %v685
        %v892 = vpop.f32.mrf.mxu0
        %v893 = vadd.f32 %v343, %v892
        %v894 = vpop.f32.mrf.mxu0
        %v895 = vadd.f32 %v343, %v894
        %896 = vmatmul.bf16.gmra.mxu0 %v688
        %v897 = vpop.f32.mrf.mxu0
        %v898 = vadd.f32 %v343, %v897
        %v899 = vpop.f32.mrf.mxu0
        %v900 = vadd.f32 %v343, %v899
        %901 = vmatmul.bf16.gmra.mxu0 %v691
        %v902 = vpop.f32.mrf.mxu0
        %v903 = vadd.f32 %v343, %v902
        %v904 = vpop.f32.mrf.mxu0
        %v905 = vadd.f32 %v343, %v904
        %906 = vmatmul.bf16.gmra.mxu0 %v694
        %v907 = vpop.f32.mrf.mxu0
        %v908 = vadd.f32 %v343, %v907
        %v909 = vpop.f32.mrf.mxu0
        %v910 = vadd.f32 %v343, %v909
        %911 = vmatmul.bf16.gmra.mxu0 %v697
        %v912 = vpop.f32.mrf.mxu0
        %v913 = vadd.f32 %v343, %v912
        %v914 = vpop.f32.mrf.mxu0
        %v915 = vadd.f32 %v343, %v914
        %916 = vmatmul.bf16.gmra.mxu0 %v700
        %v917 = vpop.f32.mrf.mxu0
        %v918 = vadd.f32 %v343, %v917
        %v919 = vpop.f32.mrf.mxu0
        %v920 = vadd.f32 %v343, %v919
        %921 = vmatmul.bf16.gmra.mxu0 %v703
        %v922 = vpop.f32.mrf.mxu0
        %v923 = vadd.f32 %v343, %v922
        %v924 = vpop.f32.mrf.mxu0
        %v925 = vadd.f32 %v343, %v924
        %926 = vmatmul.bf16.gmra.mxu0 %v706
        %v927 = vpop.f32.mrf.mxu0
        %v928 = vadd.f32 %v343, %v927
        %v929 = vpop.f32.mrf.mxu0
        %v930 = vadd.f32 %v343, %v929
        %931 = vmatmul.bf16.gmra.mxu0 %v709
        %v932 = vpop.f32.mrf.mxu0
        %v933 = vadd.f32 %v343, %v932
        %v934 = vpop.f32.mrf.mxu0
        %v935 = vadd.f32 %v343, %v934
        %936 = vdwg.mxu0
        %vm937 = vcmp.gt.f32.partialorder %v728, 0.0
        %vm938 = vcmp.gt.f32.partialorder %v730, 0.0
        %vm939 = vcmp.gt.f32.partialorder %v733, 0.0
        %vm940 = vcmp.gt.f32.partialorder %v735, 0.0
        %vm941 = vcmp.gt.f32.partialorder %v738, 0.0
        %vm942 = vcmp.gt.f32.partialorder %v740, 0.0
        %vm943 = vcmp.gt.f32.partialorder %v743, 0.0
        %vm944 = vcmp.gt.f32.partialorder %v745, 0.0
        %vm945 = vcmp.gt.f32.partialorder %v748, 0.0
        %vm946 = vcmp.gt.f32.partialorder %v750, 0.0
        %vm947 = vcmp.gt.f32.partialorder %v753, 0.0
        %vm948 = vcmp.gt.f32.partialorder %v755, 0.0
        %vm949 = vcmp.gt.f32.partialorder %v758, 0.0
        %vm950 = vcmp.gt.f32.partialorder %v760, 0.0
        %vm951 = vcmp.gt.f32.partialorder %v763, 0.0
        %vm952 = vcmp.gt.f32.partialorder %v765, 0.0
        %vm953 = vcmp.gt.f32.partialorder %v768, 0.0
        %vm954 = vcmp.gt.f32.partialorder %v770, 0.0
        %vm955 = vcmp.gt.f32.partialorder %v773, 0.0
        %vm956 = vcmp.gt.f32.partialorder %v775, 0.0
        %vm957 = vcmp.gt.f32.partialorder %v778, 0.0
        %vm958 = vcmp.gt.f32.partialorder %v780, 0.0
        %vm959 = vcmp.gt.f32.partialorder %v783, 0.0
        %vm960 = vcmp.gt.f32.partialorder %v785, 0.0
        %vm961 = vcmp.gt.f32.partialorder %v788, 0.0
        %vm962 = vcmp.gt.f32.partialorder %v790, 0.0
        %vm963 = vcmp.gt.f32.partialorder %v793, 0.0
        %vm964 = vcmp.gt.f32.partialorder %v795, 0.0
        %vm965 = vcmp.gt.f32.partialorder %v798, 0.0
        %vm966 = vcmp.gt.f32.partialorder %v800, 0.0
        %vm967 = vcmp.gt.f32.partialorder %v803, 0.0
        %vm968 = vcmp.gt.f32.partialorder %v805, 0.0
        %vm969 = vcmp.gt.f32.partialorder %v808, 0.0
        %vm970 = vcmp.gt.f32.partialorder %v810, 0.0
        %vm971 = vcmp.gt.f32.partialorder %v813, 0.0
        %vm972 = vcmp.gt.f32.partialorder %v815, 0.0
        %vm973 = vcmp.gt.f32.partialorder %v818, 0.0
        %vm974 = vcmp.gt.f32.partialorder %v820, 0.0
        %vm975 = vcmp.gt.f32.partialorder %v823, 0.0
        %vm976 = vcmp.gt.f32.partialorder %v825, 0.0
        %vm977 = vcmp.gt.f32.partialorder %v828, 0.0
        %vm978 = vcmp.gt.f32.partialorder %v830, 0.0
        %vm979 = vcmp.gt.f32.partialorder %v833, 0.0
        %vm980 = vcmp.gt.f32.partialorder %v835, 0.0
        %vm981 = vcmp.gt.f32.partialorder %v838, 0.0
        %vm982 = vcmp.gt.f32.partialorder %v840, 0.0
        %vm983 = vcmp.gt.f32.partialorder %v843, 0.0
        %vm984 = vcmp.gt.f32.partialorder %v845, 0.0
        %vm985 = vcmp.gt.f32.partialorder %v848, 0.0
        %vm986 = vcmp.gt.f32.partialorder %v850, 0.0
        %vm987 = vcmp.gt.f32.partialorder %v853, 0.0
        %vm988 = vcmp.gt.f32.partialorder %v855, 0.0
        %vm989 = vcmp.gt.f32.partialorder %v858, 0.0
        %vm990 = vcmp.gt.f32.partialorder %v860, 0.0
        %vm991 = vcmp.gt.f32.partialorder %v863, 0.0
        %vm992 = vcmp.gt.f32.partialorder %v865, 0.0
        %vm993 = vcmp.gt.f32.partialorder %v868, 0.0
        %vm994 = vcmp.gt.f32.partialorder %v870, 0.0
        %vm995 = vcmp.gt.f32.partialorder %v873, 0.0
        %vm996 = vcmp.gt.f32.partialorder %v875, 0.0
        %vm997 = vcmp.gt.f32.partialorder %v878, 0.0
        %vm998 = vcmp.gt.f32.partialorder %v880, 0.0
        %vm999 = vcmp.gt.f32.partialorder %v883, 0.0
        %vm1000 = vcmp.gt.f32.partialorder %v885, 0.0
        %vm1001 = vcmp.gt.f32.partialorder %v888, 0.0
        %vm1002 = vcmp.gt.f32.partialorder %v890, 0.0
        %vm1003 = vcmp.gt.f32.partialorder %v893, 0.0
        %vm1004 = vcmp.gt.f32.partialorder %v895, 0.0
        %vm1005 = vcmp.gt.f32.partialorder %v898, 0.0
        %vm1006 = vcmp.gt.f32.partialorder %v900, 0.0
        %vm1007 = vcmp.gt.f32.partialorder %v903, 0.0
        %vm1008 = vcmp.gt.f32.partialorder %v905, 0.0
        %vm1009 = vcmp.gt.f32.partialorder %v908, 0.0
        %vm1010 = vcmp.gt.f32.partialorder %v910, 0.0
        %vm1011 = vcmp.gt.f32.partialorder %v913, 0.0
        %vm1012 = vcmp.gt.f32.partialorder %v915, 0.0
        %vm1013 = vcmp.gt.f32.partialorder %v918, 0.0
        %vm1014 = vcmp.gt.f32.partialorder %v920, 0.0
        %vm1015 = vcmp.gt.f32.partialorder %v923, 0.0
        %vm1016 = vcmp.gt.f32.partialorder %v925, 0.0
        %vm1017 = vcmp.gt.f32.partialorder %v928, 0.0
        %vm1018 = vcmp.gt.f32.partialorder %v930, 0.0
        %vm1019 = vcmp.gt.f32.partialorder %v933, 0.0
        %vm1020 = vcmp.gt.f32.partialorder %v935, 0.0
        %v1021 = vmul.f32 %v728, 0.01
        %v1022 = vmul.f32 %v730, 0.01
        %v1023 = vmul.f32 %v733, 0.01
        %v1024 = vmul.f32 %v735, 0.01
        %v1025 = vmul.f32 %v738, 0.01
        %v1026 = vmul.f32 %v740, 0.01
        %v1027 = vmul.f32 %v743, 0.01
        %v1028 = vmul.f32 %v745, 0.01
        %v1029 = vmul.f32 %v748, 0.01
        %v1030 = vmul.f32 %v750, 0.01
        %v1031 = vmul.f32 %v753, 0.01
        %v1032 = vmul.f32 %v755, 0.01
        %v1033 = vmul.f32 %v758, 0.01
        %v1034 = vmul.f32 %v760, 0.01
        %v1035 = vmul.f32 %v763, 0.01
        %v1036 = vmul.f32 %v765, 0.01
        %v1037 = vmul.f32 %v768, 0.01
        %v1038 = vmul.f32 %v770, 0.01
        %v1039 = vmul.f32 %v773, 0.01
        %v1040 = vmul.f32 %v775, 0.01
        %v1041 = vmul.f32 %v778, 0.01
        %v1042 = vmul.f32 %v780, 0.01
        %v1043 = vmul.f32 %v783, 0.01
        %v1044 = vmul.f32 %v785, 0.01
        %v1045 = vmul.f32 %v788, 0.01
        %v1046 = vmul.f32 %v790, 0.01
        %v1047 = vmul.f32 %v793, 0.01
        %v1048 = vmul.f32 %v795, 0.01
        %v1049 = vmul.f32 %v798, 0.01
        %v1050 = vmul.f32 %v800, 0.01
        %v1051 = vmul.f32 %v803, 0.01
        %v1052 = vmul.f32 %v805, 0.01
        %v1053 = vmul.f32 %v808, 0.01
        %v1054 = vmul.f32 %v810, 0.01
        %v1055 = vmul.f32 %v813, 0.01
        %v1056 = vmul.f32 %v815, 0.01
        %v1057 = vmul.f32 %v818, 0.01
        %v1058 = vmul.f32 %v820, 0.01
        %v1059 = vmul.f32 %v823, 0.01
        %v1060 = vmul.f32 %v825, 0.01
        %v1061 = vmul.f32 %v828, 0.01
        %v1062 = vmul.f32 %v830, 0.01
        %v1063 = vmul.f32 %v833, 0.01
        %v1064 = vmul.f32 %v835, 0.01
        %v1065 = vmul.f32 %v838, 0.01
        %v1066 = vmul.f32 %v840, 0.01
        %v1067 = vmul.f32 %v843, 0.01
        %v1068 = vmul.f32 %v845, 0.01
        %v1069 = vmul.f32 %v848, 0.01
        %v1070 = vmul.f32 %v850, 0.01
        %v1071 = vmul.f32 %v853, 0.01
        %v1072 = vmul.f32 %v855, 0.01
        %v1073 = vmul.f32 %v858, 0.01
        %v1074 = vmul.f32 %v860, 0.01
        %v1075 = vmul.f32 %v863, 0.01
        %v1076 = vmul.f32 %v865, 0.01
        %v1077 = vmul.f32 %v868, 0.01
        %v1078 = vmul.f32 %v870, 0.01
        %v1079 = vmul.f32 %v873, 0.01
        %v1080 = vmul.f32 %v875, 0.01
        %v1081 = vmul.f32 %v878, 0.01
        %v1082 = vmul.f32 %v880, 0.01
        %v1083 = vmul.f32 %v883, 0.01
        %v1084 = vmul.f32 %v885, 0.01
        %v1085 = vmul.f32 %v888, 0.01
        %v1086 = vmul.f32 %v890, 0.01
        %v1087 = vmul.f32 %v893, 0.01
        %v1088 = vmul.f32 %v895, 0.01
        %v1089 = vmul.f32 %v898, 0.01
        %v1090 = vmul.f32 %v900, 0.01
        %v1091 = vmul.f32 %v903, 0.01
        %v1092 = vmul.f32 %v905, 0.01
        %v1093 = vmul.f32 %v908, 0.01
        %v1094 = vmul.f32 %v910, 0.01
        %v1095 = vmul.f32 %v913, 0.01
        %v1096 = vmul.f32 %v915, 0.01
        %v1097 = vmul.f32 %v918, 0.01
        %v1098 = vmul.f32 %v920, 0.01
        %v1099 = vmul.f32 %v923, 0.01
        %v1100 = vmul.f32 %v925, 0.01
        %v1101 = vmul.f32 %v928, 0.01
        %v1102 = vmul.f32 %v930, 0.01
        %v1103 = vmul.f32 %v933, 0.01
        %v1104 = vmul.f32 %v935, 0.01
        %v1105 = vsel %vm937, %v728, %v1021
        %v1106 = vsel %vm938, %v730, %v1022
        %v1107 = vsel %vm939, %v733, %v1023
        %v1108 = vsel %vm940, %v735, %v1024
        %v1109 = vsel %vm941, %v738, %v1025
        %v1110 = vsel %vm942, %v740, %v1026
        %v1111 = vsel %vm943, %v743, %v1027
        %v1112 = vsel %vm944, %v745, %v1028
        %v1113 = vsel %vm945, %v748, %v1029
        %v1114 = vsel %vm946, %v750, %v1030
        %v1115 = vsel %vm947, %v753, %v1031
        %v1116 = vsel %vm948, %v755, %v1032
        %v1117 = vsel %vm949, %v758, %v1033
        %v1118 = vsel %vm950, %v760, %v1034
        %v1119 = vsel %vm951, %v763, %v1035
        %v1120 = vsel %vm952, %v765, %v1036
        %v1121 = vsel %vm953, %v768, %v1037
        %v1122 = vsel %vm954, %v770, %v1038
        %v1123 = vsel %vm955, %v773, %v1039
        %v1124 = vsel %vm956, %v775, %v1040
        %v1125 = vsel %vm957, %v778, %v1041
        %v1126 = vsel %vm958, %v780, %v1042
        %v1127 = vsel %vm959, %v783, %v1043
        %v1128 = vsel %vm960, %v785, %v1044
        %v1129 = vsel %vm961, %v788, %v1045
        %v1130 = vsel %vm962, %v790, %v1046
        %v1131 = vsel %vm963, %v793, %v1047
        %v1132 = vsel %vm964, %v795, %v1048
        %v1133 = vsel %vm965, %v798, %v1049
        %v1134 = vsel %vm966, %v800, %v1050
        %v1135 = vsel %vm967, %v803, %v1051
        %v1136 = vsel %vm968, %v805, %v1052
        %v1137 = vsel %vm969, %v808, %v1053
        %v1138 = vsel %vm970, %v810, %v1054
        %v1139 = vsel %vm971, %v813, %v1055
        %v1140 = vsel %vm972, %v815, %v1056
        %v1141 = vsel %vm973, %v818, %v1057
        %v1142 = vsel %vm974, %v820, %v1058
        %v1143 = vsel %vm975, %v823, %v1059
        %v1144 = vsel %vm976, %v825, %v1060
        %v1145 = vsel %vm977, %v828, %v1061
        %v1146 = vsel %vm978, %v830, %v1062
        %v1147 = vsel %vm979, %v833, %v1063
        %v1148 = vsel %vm980, %v835, %v1064
        %v1149 = vsel %vm981, %v838, %v1065
        %v1150 = vsel %vm982, %v840, %v1066
        %v1151 = vsel %vm983, %v843, %v1067
        %v1152 = vsel %vm984, %v845, %v1068
        %v1153 = vsel %vm985, %v848, %v1069
        %v1154 = vsel %vm986, %v850, %v1070
        %v1155 = vsel %vm987, %v853, %v1071
        %v1156 = vsel %vm988, %v855, %v1072
        %v1157 = vsel %vm989, %v858, %v1073
        %v1158 = vsel %vm990, %v860, %v1074
        %v1159 = vsel %vm991, %v863, %v1075
        %v1160 = vsel %vm992, %v865, %v1076
        %v1161 = vsel %vm993, %v868, %v1077
        %v1162 = vsel %vm994, %v870, %v1078
        %v1163 = vsel %vm995, %v873, %v1079
        %v1164 = vsel %vm996, %v875, %v1080
        %v1165 = vsel %vm997, %v878, %v1081
        %v1166 = vsel %vm998, %v880, %v1082
        %v1167 = vsel %vm999, %v883, %v1083
        %v1168 = vsel %vm1000, %v885, %v1084
        %v1169 = vsel %vm1001, %v888, %v1085
        %v1170 = vsel %vm1002, %v890, %v1086
        %v1171 = vsel %vm1003, %v893, %v1087
        %v1172 = vsel %vm1004, %v895, %v1088
        %v1173 = vsel %vm1005, %v898, %v1089
        %v1174 = vsel %vm1006, %v900, %v1090
        %v1175 = vsel %vm1007, %v903, %v1091
        %v1176 = vsel %vm1008, %v905, %v1092
        %v1177 = vsel %vm1009, %v908, %v1093
        %v1178 = vsel %vm1010, %v910, %v1094
        %v1179 = vsel %vm1011, %v913, %v1095
        %v1180 = vsel %vm1012, %v915, %v1096
        %v1181 = vsel %vm1013, %v918, %v1097
        %v1182 = vsel %vm1014, %v920, %v1098
        %v1183 = vsel %vm1015, %v923, %v1099
        %v1184 = vsel %vm1016, %v925, %v1100
        %v1185 = vsel %vm1017, %v928, %v1101
        %v1186 = vsel %vm1018, %v930, %v1102
        %v1187 = vsel %vm1019, %v933, %v1103
        %v1188 = vsel %vm1020, %v935, %v1104
        %v1189 = vld [vmem:[%s3] sm:$0x1]
        %v1191 = vperm.slane %v1189, 0
        %v1193 = vmul.f32 %v1105, %v1191
        %v1194 = vmul.f32 %v1106, %v1191
        %v1195 = vmul.f32 %v1107, %v1191
        %v1196 = vmul.f32 %v1108, %v1191
        %v1197 = vmul.f32 %v1109, %v1191
        %v1198 = vmul.f32 %v1110, %v1191
        %v1199 = vmul.f32 %v1111, %v1191
        %v1200 = vmul.f32 %v1112, %v1191
        %v1201 = vmul.f32 %v1113, %v1191
        %v1202 = vmul.f32 %v1114, %v1191
        %v1203 = vmul.f32 %v1115, %v1191
        %v1204 = vmul.f32 %v1116, %v1191
        %v1205 = vmul.f32 %v1117, %v1191
        %v1206 = vmul.f32 %v1118, %v1191
        %v1207 = vmul.f32 %v1119, %v1191
        %v1208 = vmul.f32 %v1120, %v1191
        %v1209 = vmul.f32 %v1121, %v1191
        %v1210 = vmul.f32 %v1122, %v1191
        %v1211 = vmul.f32 %v1123, %v1191
        %v1212 = vmul.f32 %v1124, %v1191
        %v1213 = vmul.f32 %v1125, %v1191
        %v1214 = vmul.f32 %v1126, %v1191
        %v1215 = vmul.f32 %v1127, %v1191
        %v1216 = vmul.f32 %v1128, %v1191
        %v1217 = vmul.f32 %v1129, %v1191
        %v1218 = vmul.f32 %v1130, %v1191
        %v1219 = vmul.f32 %v1131, %v1191
        %v1220 = vmul.f32 %v1132, %v1191
        %v1221 = vmul.f32 %v1133, %v1191
        %v1222 = vmul.f32 %v1134, %v1191
        %v1223 = vmul.f32 %v1135, %v1191
        %v1224 = vmul.f32 %v1136, %v1191
        %v1225 = vmul.f32 %v1137, %v1191
        %v1226 = vmul.f32 %v1138, %v1191
        %v1227 = vmul.f32 %v1139, %v1191
        %v1228 = vmul.f32 %v1140, %v1191
        %v1229 = vmul.f32 %v1141, %v1191
        %v1230 = vmul.f32 %v1142, %v1191
        %v1231 = vmul.f32 %v1143, %v1191
        %v1232 = vmul.f32 %v1144, %v1191
        %v1233 = vmul.f32 %v1145, %v1191
        %v1234 = vmul.f32 %v1146, %v1191
        %v1235 = vmul.f32 %v1147, %v1191
        %v1236 = vmul.f32 %v1148, %v1191
        %v1237 = vmul.f32 %v1149, %v1191
        %v1238 = vmul.f32 %v1150, %v1191
        %v1239 = vmul.f32 %v1151, %v1191
        %v1240 = vmul.f32 %v1152, %v1191
        %v1241 = vmul.f32 %v1153, %v1191
        %v1242 = vmul.f32 %v1154, %v1191
        %v1243 = vmul.f32 %v1155, %v1191
        %v1244 = vmul.f32 %v1156, %v1191
        %v1245 = vmul.f32 %v1157, %v1191
        %v1246 = vmul.f32 %v1158, %v1191
        %v1247 = vmul.f32 %v1159, %v1191
        %v1248 = vmul.f32 %v1160, %v1191
        %v1249 = vmul.f32 %v1161, %v1191
        %v1250 = vmul.f32 %v1162, %v1191
        %v1251 = vmul.f32 %v1163, %v1191
        %v1252 = vmul.f32 %v1164, %v1191
        %v1253 = vmul.f32 %v1165, %v1191
        %v1254 = vmul.f32 %v1166, %v1191
        %v1255 = vmul.f32 %v1167, %v1191
        %v1256 = vmul.f32 %v1168, %v1191
        %v1257 = vmul.f32 %v1169, %v1191
        %v1258 = vmul.f32 %v1170, %v1191
        %v1259 = vmul.f32 %v1171, %v1191
        %v1260 = vmul.f32 %v1172, %v1191
        %v1261 = vmul.f32 %v1173, %v1191
        %v1262 = vmul.f32 %v1174, %v1191
        %v1263 = vmul.f32 %v1175, %v1191
        %v1264 = vmul.f32 %v1176, %v1191
        %v1265 = vmul.f32 %v1177, %v1191
        %v1266 = vmul.f32 %v1178, %v1191
        %v1267 = vmul.f32 %v1179, %v1191
        %v1268 = vmul.f32 %v1180, %v1191
        %v1269 = vmul.f32 %v1181, %v1191
        %v1270 = vmul.f32 %v1182, %v1191
        %v1271 = vmul.f32 %v1183, %v1191
        %v1272 = vmul.f32 %v1184, %v1191
        %v1273 = vmul.f32 %v1185, %v1191
        %v1274 = vmul.f32 %v1186, %v1191
        %v1275 = vmul.f32 %v1187, %v1191
        %v1276 = vmul.f32 %v1188, %v1191
        %v1277 = vld [vmem:[%s4] sm:$0x1]
        %v1279 = vperm.slane %v1277, 0
        %v1281 = vadd.f32 %v1193, %v1279
        %v1282 = vadd.f32 %v1194, %v1279
        %v1283 = vadd.f32 %v1195, %v1279
        %v1284 = vadd.f32 %v1196, %v1279
        %v1285 = vadd.f32 %v1197, %v1279
        %v1286 = vadd.f32 %v1198, %v1279
        %v1287 = vadd.f32 %v1199, %v1279
        %v1288 = vadd.f32 %v1200, %v1279
        %v1289 = vadd.f32 %v1201, %v1279
        %v1290 = vadd.f32 %v1202, %v1279
        %v1291 = vadd.f32 %v1203, %v1279
        %v1292 = vadd.f32 %v1204, %v1279
        %v1293 = vadd.f32 %v1205, %v1279
        %v1294 = vadd.f32 %v1206, %v1279
        %v1295 = vadd.f32 %v1207, %v1279
        %v1296 = vadd.f32 %v1208, %v1279
        %v1297 = vadd.f32 %v1209, %v1279
        %v1298 = vadd.f32 %v1210, %v1279
        %v1299 = vadd.f32 %v1211, %v1279
        %v1300 = vadd.f32 %v1212, %v1279
        %v1301 = vadd.f32 %v1213, %v1279
        %v1302 = vadd.f32 %v1214, %v1279
        %v1303 = vadd.f32 %v1215, %v1279
        %v1304 = vadd.f32 %v1216, %v1279
        %v1305 = vadd.f32 %v1217, %v1279
        %v1306 = vadd.f32 %v1218, %v1279
        %v1307 = vadd.f32 %v1219, %v1279
        %v1308 = vadd.f32 %v1220, %v1279
        %v1309 = vadd.f32 %v1221, %v1279
        %v1310 = vadd.f32 %v1222, %v1279
        %v1311 = vadd.f32 %v1223, %v1279
        %v1312 = vadd.f32 %v1224, %v1279
        %v1313 = vadd.f32 %v1225, %v1279
        %v1314 = vadd.f32 %v1226, %v1279
        %v1315 = vadd.f32 %v1227, %v1279
        %v1316 = vadd.f32 %v1228, %v1279
        %v1317 = vadd.f32 %v1229, %v1279
        %v1318 = vadd.f32 %v1230, %v1279
        %v1319 = vadd.f32 %v1231, %v1279
        %v1320 = vadd.f32 %v1232, %v1279
        %v1321 = vadd.f32 %v1233, %v1279
        %v1322 = vadd.f32 %v1234, %v1279
        %v1323 = vadd.f32 %v1235, %v1279
        %v1324 = vadd.f32 %v1236, %v1279
        %v1325 = vadd.f32 %v1237, %v1279
        %v1326 = vadd.f32 %v1238, %v1279
        %v1327 = vadd.f32 %v1239, %v1279
        %v1328 = vadd.f32 %v1240, %v1279
        %v1329 = vadd.f32 %v1241, %v1279
        %v1330 = vadd.f32 %v1242, %v1279
        %v1331 = vadd.f32 %v1243, %v1279
        %v1332 = vadd.f32 %v1244, %v1279
        %v1333 = vadd.f32 %v1245, %v1279
        %v1334 = vadd.f32 %v1246, %v1279
        %v1335 = vadd.f32 %v1247, %v1279
        %v1336 = vadd.f32 %v1248, %v1279
        %v1337 = vadd.f32 %v1249, %v1279
        %v1338 = vadd.f32 %v1250, %v1279
        %v1339 = vadd.f32 %v1251, %v1279
        %v1340 = vadd.f32 %v1252, %v1279
        %v1341 = vadd.f32 %v1253, %v1279
        %v1342 = vadd.f32 %v1254, %v1279
        %v1343 = vadd.f32 %v1255, %v1279
        %v1344 = vadd.f32 %v1256, %v1279
        %v1345 = vadd.f32 %v1257, %v1279
        %v1346 = vadd.f32 %v1258, %v1279
        %v1347 = vadd.f32 %v1259, %v1279
        %v1348 = vadd.f32 %v1260, %v1279
        %v1349 = vadd.f32 %v1261, %v1279
        %v1350 = vadd.f32 %v1262, %v1279
        %v1351 = vadd.f32 %v1263, %v1279
        %v1352 = vadd.f32 %v1264, %v1279
        %v1353 = vadd.f32 %v1265, %v1279
        %v1354 = vadd.f32 %v1266, %v1279
        %v1355 = vadd.f32 %v1267, %v1279
        %v1356 = vadd.f32 %v1268, %v1279
        %v1357 = vadd.f32 %v1269, %v1279
        %v1358 = vadd.f32 %v1270, %v1279
        %v1359 = vadd.f32 %v1271, %v1279
        %v1360 = vadd.f32 %v1272, %v1279
        %v1361 = vadd.f32 %v1273, %v1279
        %v1362 = vadd.f32 %v1274, %v1279
        %v1363 = vadd.f32 %v1275, %v1279
        %v1364 = vadd.f32 %v1276, %v1279
        %v1449 = vrot.slane %v1281, 4
        %v1450 = vrot.slane %v1282, 4
        %v1451 = vrot.slane %v1283, 4
        %v1452 = vrot.slane %v1284, 4
        %v1453 = vrot.slane %v1285, 4
        %v1454 = vrot.slane %v1286, 4
        %v1455 = vrot.slane %v1287, 4
        %v1456 = vrot.slane %v1288, 4
        %v1457 = vrot.slane %v1289, 4
        %v1458 = vrot.slane %v1290, 4
        %v1459 = vrot.slane %v1291, 4
        %v1460 = vrot.slane %v1292, 4
        %v1461 = vrot.slane %v1293, 4
        %v1462 = vrot.slane %v1294, 4
        %v1463 = vrot.slane %v1295, 4
        %v1464 = vrot.slane %v1296, 4
        %v1465 = vrot.slane %v1297, 4
        %v1466 = vrot.slane %v1298, 4
        %v1467 = vrot.slane %v1299, 4
        %v1468 = vrot.slane %v1300, 4
        %v1469 = vrot.slane %v1301, 4
        %v1470 = vrot.slane %v1302, 4
        %v1471 = vrot.slane %v1303, 4
        %v1472 = vrot.slane %v1304, 4
        %v1473 = vrot.slane %v1305, 4
        %v1474 = vrot.slane %v1306, 4
        %v1475 = vrot.slane %v1307, 4
        %v1476 = vrot.slane %v1308, 4
        %v1477 = vrot.slane %v1309, 4
        %v1478 = vrot.slane %v1310, 4
        %v1479 = vrot.slane %v1311, 4
        %v1480 = vrot.slane %v1312, 4
        %v1481 = vrot.slane %v1313, 4
        %v1482 = vrot.slane %v1314, 4
        %v1483 = vrot.slane %v1315, 4
        %v1484 = vrot.slane %v1316, 4
        %v1485 = vrot.slane %v1317, 4
        %v1486 = vrot.slane %v1318, 4
        %v1487 = vrot.slane %v1319, 4
        %v1488 = vrot.slane %v1320, 4
        %v1489 = vrot.slane %v1321, 4
        %v1490 = vrot.slane %v1322, 4
        %v1491 = vrot.slane %v1323, 4
        %v1492 = vrot.slane %v1324, 4
        %v1493 = vrot.slane %v1325, 4
        %v1494 = vrot.slane %v1326, 4
        %v1495 = vrot.slane %v1327, 4
        %v1496 = vrot.slane %v1328, 4
        %v1497 = vrot.slane %v1329, 4
        %v1498 = vrot.slane %v1330, 4
        %v1499 = vrot.slane %v1331, 4
        %v1500 = vrot.slane %v1332, 4
        %v1501 = vrot.slane %v1333, 4
        %v1502 = vrot.slane %v1334, 4
        %v1503 = vrot.slane %v1335, 4
        %v1504 = vrot.slane %v1336, 4
        %v1505 = vrot.slane %v1337, 4
        %v1506 = vrot.slane %v1338, 4
        %v1507 = vrot.slane %v1339, 4
        %v1508 = vrot.slane %v1340, 4
        %v1509 = vrot.slane %v1341, 4
        %v1510 = vrot.slane %v1342, 4
        %v1511 = vrot.slane %v1343, 4
        %v1512 = vrot.slane %v1344, 4
        %v1513 = vrot.slane %v1345, 4
        %v1514 = vrot.slane %v1346, 4
        %v1515 = vrot.slane %v1347, 4
        %v1516 = vrot.slane %v1348, 4
        %v1517 = vrot.slane %v1349, 4
        %v1518 = vrot.slane %v1350, 4
        %v1519 = vrot.slane %v1351, 4
        %v1520 = vrot.slane %v1352, 4
        %v1521 = vrot.slane %v1353, 4
        %v1522 = vrot.slane %v1354, 4
        %v1523 = vrot.slane %v1355, 4
        %v1524 = vrot.slane %v1356, 4
        %v1525 = vrot.slane %v1357, 4
        %v1526 = vrot.slane %v1358, 4
        %v1527 = vrot.slane %v1359, 4
        %v1528 = vrot.slane %v1360, 4
        %v1529 = vrot.slane %v1361, 4
        %v1530 = vrot.slane %v1362, 4
        %v1531 = vrot.slane %v1363, 4
        %v1532 = vrot.slane %v1364, 4
        %v1617 = vadd.f32 %v1281, %v1452
        %v1618 = vadd.f32 %v1449, %v1285
        %v1619 = vadd.f32 %v1282, %v1453
        %v1620 = vadd.f32 %v1450, %v1286
        %v1621 = vadd.f32 %v1283, %v1454
        %v1622 = vadd.f32 %v1451, %v1287
        %v1623 = vadd.f32 %v1284, %v1455
        %v1624 = vadd.f32 %v1288, %v1459
        %v1625 = vadd.f32 %v1456, %v1292
        %v1626 = vadd.f32 %v1289, %v1460
        %v1627 = vadd.f32 %v1457, %v1293
        %v1628 = vadd.f32 %v1290, %v1461
        %v1629 = vadd.f32 %v1458, %v1294
        %v1630 = vadd.f32 %v1291, %v1462
        %v1631 = vadd.f32 %v1295, %v1466
        %v1632 = vadd.f32 %v1463, %v1299
        %v1633 = vadd.f32 %v1296, %v1467
        %v1634 = vadd.f32 %v1464, %v1300
        %v1635 = vadd.f32 %v1297, %v1468
        %v1636 = vadd.f32 %v1465, %v1301
        %v1637 = vadd.f32 %v1298, %v1469
        %v1638 = vadd.f32 %v1302, %v1473
        %v1639 = vadd.f32 %v1470, %v1306
        %v1640 = vadd.f32 %v1303, %v1474
        %v1641 = vadd.f32 %v1471, %v1307
        %v1642 = vadd.f32 %v1304, %v1475
        %v1643 = vadd.f32 %v1472, %v1308
        %v1644 = vadd.f32 %v1305, %v1476
        %v1645 = vadd.f32 %v1309, %v1480
        %v1646 = vadd.f32 %v1477, %v1313
        %v1647 = vadd.f32 %v1310, %v1481
        %v1648 = vadd.f32 %v1478, %v1314
        %v1649 = vadd.f32 %v1311, %v1482
        %v1650 = vadd.f32 %v1479, %v1315
        %v1651 = vadd.f32 %v1312, %v1483
        %v1652 = vadd.f32 %v1316, %v1487
        %v1653 = vadd.f32 %v1484, %v1320
        %v1654 = vadd.f32 %v1317, %v1488
        %v1655 = vadd.f32 %v1485, %v1321
        %v1656 = vadd.f32 %v1318, %v1489
        %v1657 = vadd.f32 %v1486, %v1322
        %v1658 = vadd.f32 %v1319, %v1490
        %v1659 = vadd.f32 %v1323, %v1494
        %v1660 = vadd.f32 %v1491, %v1327
        %v1661 = vadd.f32 %v1324, %v1495
        %v1662 = vadd.f32 %v1492, %v1328
        %v1663 = vadd.f32 %v1325, %v1496
        %v1664 = vadd.f32 %v1493, %v1329
        %v1665 = vadd.f32 %v1326, %v1497
        %v1666 = vadd.f32 %v1330, %v1501
        %v1667 = vadd.f32 %v1498, %v1334
        %v1668 = vadd.f32 %v1331, %v1502
        %v1669 = vadd.f32 %v1499, %v1335
        %v1670 = vadd.f32 %v1332, %v1503
        %v1671 = vadd.f32 %v1500, %v1336
        %v1672 = vadd.f32 %v1333, %v1504
        %v1673 = vadd.f32 %v1337, %v1508
        %v1674 = vadd.f32 %v1505, %v1341
        %v1675 = vadd.f32 %v1338, %v1509
        %v1676 = vadd.f32 %v1506, %v1342
        %v1677 = vadd.f32 %v1339, %v1510
        %v1678 = vadd.f32 %v1507, %v1343
        %v1679 = vadd.f32 %v1340, %v1511
        %v1680 = vadd.f32 %v1344, %v1515
        %v1681 = vadd.f32 %v1512, %v1348
        %v1682 = vadd.f32 %v1345, %v1516
        %v1683 = vadd.f32 %v1513, %v1349
        %v1684 = vadd.f32 %v1346, %v1517
        %v1685 = vadd.f32 %v1514, %v1350
        %v1686 = vadd.f32 %v1347, %v1518
        %v1687 = vadd.f32 %v1351, %v1522
        %v1688 = vadd.f32 %v1519, %v1355
        %v1689 = vadd.f32 %v1352, %v1523
        %v1690 = vadd.f32 %v1520, %v1356
        %v1691 = vadd.f32 %v1353, %v1524
        %v1692 = vadd.f32 %v1521, %v1357
        %v1693 = vadd.f32 %v1354, %v1525
        %v1694 = vadd.f32 %v1358, %v1529
        %v1695 = vadd.f32 %v1526, %v1362
        %v1696 = vadd.f32 %v1359, %v1530
        %v1697 = vadd.f32 %v1527, %v1363
        %v1698 = vadd.f32 %v1360, %v1531
        %v1699 = vadd.f32 %v1528, %v1364
        %v1700 = vadd.f32 %v1361, %v1532
        %v1785 = vrot.slane %v1617, 2
        %v1786 = vrot.slane %v1618, 2
        %v1787 = vrot.slane %v1619, 2
        %v1788 = vrot.slane %v1620, 2
        %v1789 = vrot.slane %v1621, 2
        %v1790 = vrot.slane %v1622, 2
        %v1791 = vrot.slane %v1623, 2
        %v1792 = vrot.slane %v1624, 2
        %v1793 = vrot.slane %v1625, 2
        %v1794 = vrot.slane %v1626, 2
        %v1795 = vrot.slane %v1627, 2
        %v1796 = vrot.slane %v1628, 2
        %v1797 = vrot.slane %v1629, 2
        %v1798 = vrot.slane %v1630, 2
        %v1799 = vrot.slane %v1631, 2
        %v1800 = vrot.slane %v1632, 2
        %v1801 = vrot.slane %v1633, 2
        %v1802 = vrot.slane %v1634, 2
        %v1803 = vrot.slane %v1635, 2
        %v1804 = vrot.slane %v1636, 2
        %v1805 = vrot.slane %v1637, 2
        %v1806 = vrot.slane %v1638, 2
        %v1807 = vrot.slane %v1639, 2
        %v1808 = vrot.slane %v1640, 2
        %v1809 = vrot.slane %v1641, 2
        %v1810 = vrot.slane %v1642, 2
        %v1811 = vrot.slane %v1643, 2
        %v1812 = vrot.slane %v1644, 2
        %v1813 = vrot.slane %v1645, 2
        %v1814 = vrot.slane %v1646, 2
        %v1815 = vrot.slane %v1647, 2
        %v1816 = vrot.slane %v1648, 2
        %v1817 = vrot.slane %v1649, 2
        %v1818 = vrot.slane %v1650, 2
        %v1819 = vrot.slane %v1651, 2
        %v1820 = vrot.slane %v1652, 2
        %v1821 = vrot.slane %v1653, 2
        %v1822 = vrot.slane %v1654, 2
        %v1823 = vrot.slane %v1655, 2
        %v1824 = vrot.slane %v1656, 2
        %v1825 = vrot.slane %v1657, 2
        %v1826 = vrot.slane %v1658, 2
        %v1827 = vrot.slane %v1659, 2
        %v1828 = vrot.slane %v1660, 2
        %v1829 = vrot.slane %v1661, 2
        %v1830 = vrot.slane %v1662, 2
        %v1831 = vrot.slane %v1663, 2
        %v1832 = vrot.slane %v1664, 2
        %v1833 = vrot.slane %v1665, 2
        %v1834 = vrot.slane %v1666, 2
        %v1835 = vrot.slane %v1667, 2
        %v1836 = vrot.slane %v1668, 2
        %v1837 = vrot.slane %v1669, 2
        %v1838 = vrot.slane %v1670, 2
        %v1839 = vrot.slane %v1671, 2
        %v1840 = vrot.slane %v1672, 2
        %v1841 = vrot.slane %v1673, 2
        %v1842 = vrot.slane %v1674, 2
        %v1843 = vrot.slane %v1675, 2
        %v1844 = vrot.slane %v1676, 2
        %v1845 = vrot.slane %v1677, 2
        %v1846 = vrot.slane %v1678, 2
        %v1847 = vrot.slane %v1679, 2
        %v1848 = vrot.slane %v1680, 2
        %v1849 = vrot.slane %v1681, 2
        %v1850 = vrot.slane %v1682, 2
        %v1851 = vrot.slane %v1683, 2
        %v1852 = vrot.slane %v1684, 2
        %v1853 = vrot.slane %v1685, 2
        %v1854 = vrot.slane %v1686, 2
        %v1855 = vrot.slane %v1687, 2
        %v1856 = vrot.slane %v1688, 2
        %v1857 = vrot.slane %v1689, 2
        %v1858 = vrot.slane %v1690, 2
        %v1859 = vrot.slane %v1691, 2
        %v1860 = vrot.slane %v1692, 2
        %v1861 = vrot.slane %v1693, 2
        %v1862 = vrot.slane %v1694, 2
        %v1863 = vrot.slane %v1695, 2
        %v1864 = vrot.slane %v1696, 2
        %v1865 = vrot.slane %v1697, 2
        %v1866 = vrot.slane %v1698, 2
        %v1867 = vrot.slane %v1699, 2
        %v1868 = vrot.slane %v1700, 2
        %vm1869 = vcmask 1041408
        %v1870 = vsel %vm1869, %v1617, %v1785
        %vm1871 = vcmask 1043458
        %v1872 = vsel %vm1871, %v1617, %v1785
        %v1873 = vrot.slane %v1872, 2
        %v1874 = vsel %vm1869, %v1618, %v1786
        %v1875 = vsel %vm1871, %v1618, %v1786
        %v1876 = vrot.slane %v1875, 2
        %v1877 = vsel %vm1869, %v1619, %v1787
        %v1878 = vsel %vm1871, %v1619, %v1787
        %v1879 = vrot.slane %v1878, 2
        %v1880 = vsel %vm1869, %v1620, %v1788
        %v1881 = vsel %vm1871, %v1620, %v1788
        %v1882 = vrot.slane %v1881, 2
        %v1883 = vsel %vm1869, %v1621, %v1789
        %v1884 = vsel %vm1871, %v1621, %v1789
        %v1885 = vrot.slane %v1884, 2
        %v1886 = vsel %vm1869, %v1622, %v1790
        %v1887 = vsel %vm1871, %v1622, %v1790
        %v1888 = vrot.slane %v1887, 2
        %v1889 = vsel %vm1869, %v1623, %v1791
        %v1890 = vsel %vm1871, %v1623, %v1791
        %v1891 = vrot.slane %v1890, 2
        %v1892 = vsel %vm1869, %v1624, %v1792
        %v1893 = vsel %vm1871, %v1624, %v1792
        %v1894 = vrot.slane %v1893, 2
        %v1895 = vsel %vm1869, %v1625, %v1793
        %v1896 = vsel %vm1871, %v1625, %v1793
        %v1897 = vrot.slane %v1896, 2
        %v1898 = vsel %vm1869, %v1626, %v1794
        %v1899 = vsel %vm1871, %v1626, %v1794
        %v1900 = vrot.slane %v1899, 2
        %v1901 = vsel %vm1869, %v1627, %v1795
        %v1902 = vsel %vm1871, %v1627, %v1795
        %v1903 = vrot.slane %v1902, 2
        %v1904 = vsel %vm1869, %v1628, %v1796
        %v1905 = vsel %vm1871, %v1628, %v1796
        %v1906 = vrot.slane %v1905, 2
        %v1907 = vsel %vm1869, %v1629, %v1797
        %v1908 = vsel %vm1871, %v1629, %v1797
        %v1909 = vrot.slane %v1908, 2
        %v1910 = vsel %vm1869, %v1630, %v1798
        %v1911 = vsel %vm1871, %v1630, %v1798
        %v1912 = vrot.slane %v1911, 2
        %v1913 = vsel %vm1869, %v1631, %v1799
        %v1914 = vsel %vm1871, %v1631, %v1799
        %v1915 = vrot.slane %v1914, 2
        %v1916 = vsel %vm1869, %v1632, %v1800
        %v1917 = vsel %vm1871, %v1632, %v1800
        %v1918 = vrot.slane %v1917, 2
        %v1919 = vsel %vm1869, %v1633, %v1801
        %v1920 = vsel %vm1871, %v1633, %v1801
        %v1921 = vrot.slane %v1920, 2
        %v1922 = vsel %vm1869, %v1634, %v1802
        %v1923 = vsel %vm1871, %v1634, %v1802
        %v1924 = vrot.slane %v1923, 2
        %v1925 = vsel %vm1869, %v1635, %v1803
        %v1926 = vsel %vm1871, %v1635, %v1803
        %v1927 = vrot.slane %v1926, 2
        %v1928 = vsel %vm1869, %v1636, %v1804
        %v1929 = vsel %vm1871, %v1636, %v1804
        %v1930 = vrot.slane %v1929, 2
        %v1931 = vsel %vm1869, %v1637, %v1805
        %v1932 = vsel %vm1871, %v1637, %v1805
        %v1933 = vrot.slane %v1932, 2
        %v1934 = vsel %vm1869, %v1638, %v1806
        %v1935 = vsel %vm1871, %v1638, %v1806
        %v1936 = vrot.slane %v1935, 2
        %v1937 = vsel %vm1869, %v1639, %v1807
        %v1938 = vsel %vm1871, %v1639, %v1807
        %v1939 = vrot.slane %v1938, 2
        %v1940 = vsel %vm1869, %v1640, %v1808
        %v1941 = vsel %vm1871, %v1640, %v1808
        %v1942 = vrot.slane %v1941, 2
        %v1943 = vsel %vm1869, %v1641, %v1809
        %v1944 = vsel %vm1871, %v1641, %v1809
        %v1945 = vrot.slane %v1944, 2
        %v1946 = vsel %vm1869, %v1642, %v1810
        %v1947 = vsel %vm1871, %v1642, %v1810
        %v1948 = vrot.slane %v1947, 2
        %v1949 = vsel %vm1869, %v1643, %v1811
        %v1950 = vsel %vm1871, %v1643, %v1811
        %v1951 = vrot.slane %v1950, 2
        %v1952 = vsel %vm1869, %v1644, %v1812
        %v1953 = vsel %vm1871, %v1644, %v1812
        %v1954 = vrot.slane %v1953, 2
        %v1955 = vsel %vm1869, %v1645, %v1813
        %v1956 = vsel %vm1871, %v1645, %v1813
        %v1957 = vrot.slane %v1956, 2
        %v1958 = vsel %vm1869, %v1646, %v1814
        %v1959 = vsel %vm1871, %v1646, %v1814
        %v1960 = vrot.slane %v1959, 2
        %v1961 = vsel %vm1869, %v1647, %v1815
        %v1962 = vsel %vm1871, %v1647, %v1815
        %v1963 = vrot.slane %v1962, 2
        %v1964 = vsel %vm1869, %v1648, %v1816
        %v1965 = vsel %vm1871, %v1648, %v1816
        %v1966 = vrot.slane %v1965, 2
        %v1967 = vsel %vm1869, %v1649, %v1817
        %v1968 = vsel %vm1871, %v1649, %v1817
        %v1969 = vrot.slane %v1968, 2
        %v1970 = vsel %vm1869, %v1650, %v1818
        %v1971 = vsel %vm1871, %v1650, %v1818
        %v1972 = vrot.slane %v1971, 2
        %v1973 = vsel %vm1869, %v1651, %v1819
        %v1974 = vsel %vm1871, %v1651, %v1819
        %v1975 = vrot.slane %v1974, 2
        %v1976 = vsel %vm1869, %v1652, %v1820
        %v1977 = vsel %vm1871, %v1652, %v1820
        %v1978 = vrot.slane %v1977, 2
        %v1979 = vsel %vm1869, %v1653, %v1821
        %v1980 = vsel %vm1871, %v1653, %v1821
        %v1981 = vrot.slane %v1980, 2
        %v1982 = vsel %vm1869, %v1654, %v1822
        %v1983 = vsel %vm1871, %v1654, %v1822
        %v1984 = vrot.slane %v1983, 2
        %v1985 = vsel %vm1869, %v1655, %v1823
        %v1986 = vsel %vm1871, %v1655, %v1823
        %v1987 = vrot.slane %v1986, 2
        %v1988 = vsel %vm1869, %v1656, %v1824
        %v1989 = vsel %vm1871, %v1656, %v1824
        %v1990 = vrot.slane %v1989, 2
        %v1991 = vsel %vm1869, %v1657, %v1825
        %v1992 = vsel %vm1871, %v1657, %v1825
        %v1993 = vrot.slane %v1992, 2
        %v1994 = vsel %vm1869, %v1658, %v1826
        %v1995 = vsel %vm1871, %v1658, %v1826
        %v1996 = vrot.slane %v1995, 2
        %v1997 = vsel %vm1869, %v1659, %v1827
        %v1998 = vsel %vm1871, %v1659, %v1827
        %v1999 = vrot.slane %v1998, 2
        %v2000 = vsel %vm1869, %v1660, %v1828
        %v2001 = vsel %vm1871, %v1660, %v1828
        %v2002 = vrot.slane %v2001, 2
        %v2003 = vsel %vm1869, %v1661, %v1829
        %v2004 = vsel %vm1871, %v1661, %v1829
        %v2005 = vrot.slane %v2004, 2
        %v2006 = vsel %vm1869, %v1662, %v1830
        %v2007 = vsel %vm1871, %v1662, %v1830
        %v2008 = vrot.slane %v2007, 2
        %v2009 = vsel %vm1869, %v1663, %v1831
        %v2010 = vsel %vm1871, %v1663, %v1831
        %v2011 = vrot.slane %v2010, 2
        %v2012 = vsel %vm1869, %v1664, %v1832
        %v2013 = vsel %vm1871, %v1664, %v1832
        %v2014 = vrot.slane %v2013, 2
        %v2015 = vsel %vm1869, %v1665, %v1833
        %v2016 = vsel %vm1871, %v1665, %v1833
        %v2017 = vrot.slane %v2016, 2
        %v2018 = vsel %vm1869, %v1666, %v1834
        %v2019 = vsel %vm1871, %v1666, %v1834
        %v2020 = vrot.slane %v2019, 2
        %v2021 = vsel %vm1869, %v1667, %v1835
        %v2022 = vsel %vm1871, %v1667, %v1835
        %v2023 = vrot.slane %v2022, 2
        %v2024 = vsel %vm1869, %v1668, %v1836
        %v2025 = vsel %vm1871, %v1668, %v1836
        %v2026 = vrot.slane %v2025, 2
        %v2027 = vsel %vm1869, %v1669, %v1837
        %v2028 = vsel %vm1871, %v1669, %v1837
        %v2029 = vrot.slane %v2028, 2
        %v2030 = vsel %vm1869, %v1670, %v1838
        %v2031 = vsel %vm1871, %v1670, %v1838
        %v2032 = vrot.slane %v2031, 2
        %v2033 = vsel %vm1869, %v1671, %v1839
        %v2034 = vsel %vm1871, %v1671, %v1839
        %v2035 = vrot.slane %v2034, 2
        %v2036 = vsel %vm1869, %v1672, %v1840
        %v2037 = vsel %vm1871, %v1672, %v1840
        %v2038 = vrot.slane %v2037, 2
        %v2039 = vsel %vm1869, %v1673, %v1841
        %v2040 = vsel %vm1871, %v1673, %v1841
        %v2041 = vrot.slane %v2040, 2
        %v2042 = vsel %vm1869, %v1674, %v1842
        %v2043 = vsel %vm1871, %v1674, %v1842
        %v2044 = vrot.slane %v2043, 2
        %v2045 = vsel %vm1869, %v1675, %v1843
        %v2046 = vsel %vm1871, %v1675, %v1843
        %v2047 = vrot.slane %v2046, 2
        %v2048 = vsel %vm1869, %v1676, %v1844
        %v2049 = vsel %vm1871, %v1676, %v1844
        %v2050 = vrot.slane %v2049, 2
        %v2051 = vsel %vm1869, %v1677, %v1845
        %v2052 = vsel %vm1871, %v1677, %v1845
        %v2053 = vrot.slane %v2052, 2
        %v2054 = vsel %vm1869, %v1678, %v1846
        %v2055 = vsel %vm1871, %v1678, %v1846
        %v2056 = vrot.slane %v2055, 2
        %v2057 = vsel %vm1869, %v1679, %v1847
        %v2058 = vsel %vm1871, %v1679, %v1847
        %v2059 = vrot.slane %v2058, 2
        %v2060 = vsel %vm1869, %v1680, %v1848
        %v2061 = vsel %vm1871, %v1680, %v1848
        %v2062 = vrot.slane %v2061, 2
        %v2063 = vsel %vm1869, %v1681, %v1849
        %v2064 = vsel %vm1871, %v1681, %v1849
        %v2065 = vrot.slane %v2064, 2
        %v2066 = vsel %vm1869, %v1682, %v1850
        %v2067 = vsel %vm1871, %v1682, %v1850
        %v2068 = vrot.slane %v2067, 2
        %v2069 = vsel %vm1869, %v1683, %v1851
        %v2070 = vsel %vm1871, %v1683, %v1851
        %v2071 = vrot.slane %v2070, 2
        %v2072 = vsel %vm1869, %v1684, %v1852
        %v2073 = vsel %vm1871, %v1684, %v1852
        %v2074 = vrot.slane %v2073, 2
        %v2075 = vsel %vm1869, %v1685, %v1853
        %v2076 = vsel %vm1871, %v1685, %v1853
        %v2077 = vrot.slane %v2076, 2
        %v2078 = vsel %vm1869, %v1686, %v1854
        %v2079 = vsel %vm1871, %v1686, %v1854
        %v2080 = vrot.slane %v2079, 2
        %v2081 = vsel %vm1869, %v1687, %v1855
        %v2082 = vsel %vm1871, %v1687, %v1855
        %v2083 = vrot.slane %v2082, 2
        %v2084 = vsel %vm1869, %v1688, %v1856
        %v2085 = vsel %vm1871, %v1688, %v1856
        %v2086 = vrot.slane %v2085, 2
        %v2087 = vsel %vm1869, %v1689, %v1857
        %v2088 = vsel %vm1871, %v1689, %v1857
        %v2089 = vrot.slane %v2088, 2
        %v2090 = vsel %vm1869, %v1690, %v1858
        %v2091 = vsel %vm1871, %v1690, %v1858
        %v2092 = vrot.slane %v2091, 2
        %v2093 = vsel %vm1869, %v1691, %v1859
        %v2094 = vsel %vm1871, %v1691, %v1859
        %v2095 = vrot.slane %v2094, 2
        %v2096 = vsel %vm1869, %v1692, %v1860
        %v2097 = vsel %vm1871, %v1692, %v1860
        %v2098 = vrot.slane %v2097, 2
        %v2099 = vsel %vm1869, %v1693, %v1861
        %v2100 = vsel %vm1871, %v1693, %v1861
        %v2101 = vrot.slane %v2100, 2
        %v2102 = vsel %vm1869, %v1694, %v1862
        %v2103 = vsel %vm1871, %v1694, %v1862
        %v2104 = vrot.slane %v2103, 2
        %v2105 = vsel %vm1869, %v1695, %v1863
        %v2106 = vsel %vm1871, %v1695, %v1863
        %v2107 = vrot.slane %v2106, 2
        %v2108 = vsel %vm1869, %v1696, %v1864
        %v2109 = vsel %vm1871, %v1696, %v1864
        %v2110 = vrot.slane %v2109, 2
        %v2111 = vsel %vm1869, %v1697, %v1865
        %v2112 = vsel %vm1871, %v1697, %v1865
        %v2113 = vrot.slane %v2112, 2
        %v2114 = vsel %vm1869, %v1698, %v1866
        %v2115 = vsel %vm1871, %v1698, %v1866
        %v2116 = vrot.slane %v2115, 2
        %v2117 = vsel %vm1869, %v1699, %v1867
        %v2118 = vsel %vm1871, %v1699, %v1867
        %v2119 = vrot.slane %v2118, 2
        %v2120 = vsel %vm1869, %v1700, %v1868
        %v2121 = vsel %vm1871, %v1700, %v1868
        %v2122 = vrot.slane %v2121, 2
        %v2291 = vrot.slane %v1870, 7
        %v2292 = vrot.slane %v2291, 2
        %v2293 = vrot.slane %v1873, 7
        %v2294 = vrot.slane %v2293, 2
        %v2295 = vrot.slane %v1874, 7
        %v2296 = vrot.slane %v2295, 2
        %v2297 = vrot.slane %v1876, 7
        %v2298 = vrot.slane %v2297, 2
        %v2299 = vrot.slane %v1877, 7
        %v2300 = vrot.slane %v2299, 2
        %v2301 = vrot.slane %v1879, 7
        %v2302 = vrot.slane %v2301, 2
        %v2303 = vrot.slane %v1880, 7
        %v2304 = vrot.slane %v2303, 2
        %v2305 = vrot.slane %v1882, 7
        %v2306 = vrot.slane %v2305, 2
        %v2307 = vrot.slane %v1883, 7
        %v2308 = vrot.slane %v2307, 2
        %v2309 = vrot.slane %v1885, 7
        %v2310 = vrot.slane %v2309, 2
        %v2311 = vrot.slane %v1886, 7
        %v2312 = vrot.slane %v2311, 2
        %v2313 = vrot.slane %v1888, 7
        %v2314 = vrot.slane %v2313, 2
        %v2315 = vrot.slane %v1889, 7
        %v2316 = vrot.slane %v2315, 2
        %v2317 = vrot.slane %v1891, 7
        %v2318 = vrot.slane %v2317, 2
        %v2319 = vrot.slane %v1892, 7
        %v2320 = vrot.slane %v2319, 2
        %v2321 = vrot.slane %v1894, 7
        %v2322 = vrot.slane %v2321, 2
        %v2323 = vrot.slane %v1895, 7
        %v2324 = vrot.slane %v2323, 2
        %v2325 = vrot.slane %v1897, 7
        %v2326 = vrot.slane %v2325, 2
        %v2327 = vrot.slane %v1898, 7
        %v2328 = vrot.slane %v2327, 2
        %v2329 = vrot.slane %v1900, 7
        %v2330 = vrot.slane %v2329, 2
        %v2331 = vrot.slane %v1901, 7
        %v2332 = vrot.slane %v2331, 2
        %v2333 = vrot.slane %v1903, 7
        %v2334 = vrot.slane %v2333, 2
        %v2335 = vrot.slane %v1904, 7
        %v2336 = vrot.slane %v2335, 2
        %v2337 = vrot.slane %v1906, 7
        %v2338 = vrot.slane %v2337, 2
        %v2339 = vrot.slane %v1907, 7
        %v2340 = vrot.slane %v2339, 2
        %v2341 = vrot.slane %v1909, 7
        %v2342 = vrot.slane %v2341, 2
        %v2343 = vrot.slane %v1910, 7
        %v2344 = vrot.slane %v2343, 2
        %v2345 = vrot.slane %v1912, 7
        %v2346 = vrot.slane %v2345, 2
        %v2347 = vrot.slane %v1913, 7
        %v2348 = vrot.slane %v2347, 2
        %v2349 = vrot.slane %v1915, 7
        %v2350 = vrot.slane %v2349, 2
        %v2351 = vrot.slane %v1916, 7
        %v2352 = vrot.slane %v2351, 2
        %v2353 = vrot.slane %v1918, 7
        %v2354 = vrot.slane %v2353, 2
        %v2355 = vrot.slane %v1919, 7
        %v2356 = vrot.slane %v2355, 2
        %v2357 = vrot.slane %v1921, 7
        %v2358 = vrot.slane %v2357, 2
        %v2359 = vrot.slane %v1922, 7
        %v2360 = vrot.slane %v2359, 2
        %v2361 = vrot.slane %v1924, 7
        %v2362 = vrot.slane %v2361, 2
        %v2363 = vrot.slane %v1925, 7
        %v2364 = vrot.slane %v2363, 2
        %v2365 = vrot.slane %v1927, 7
        %v2366 = vrot.slane %v2365, 2
        %v2367 = vrot.slane %v1928, 7
        %v2368 = vrot.slane %v2367, 2
        %v2369 = vrot.slane %v1930, 7
        %v2370 = vrot.slane %v2369, 2
        %v2371 = vrot.slane %v1931, 7
        %v2372 = vrot.slane %v2371, 2
        %v2373 = vrot.slane %v1933, 7
        %v2374 = vrot.slane %v2373, 2
        %v2375 = vrot.slane %v1934, 7
        %v2376 = vrot.slane %v2375, 2
        %v2377 = vrot.slane %v1936, 7
        %v2378 = vrot.slane %v2377, 2
        %v2379 = vrot.slane %v1937, 7
        %v2380 = vrot.slane %v2379, 2
        %v2381 = vrot.slane %v1939, 7
        %v2382 = vrot.slane %v2381, 2
        %v2383 = vrot.slane %v1940, 7
        %v2384 = vrot.slane %v2383, 2
        %v2385 = vrot.slane %v1942, 7
        %v2386 = vrot.slane %v2385, 2
        %v2387 = vrot.slane %v1943, 7
        %v2388 = vrot.slane %v2387, 2
        %v2389 = vrot.slane %v1945, 7
        %v2390 = vrot.slane %v2389, 2
        %v2391 = vrot.slane %v1946, 7
        %v2392 = vrot.slane %v2391, 2
        %v2393 = vrot.slane %v1948, 7
        %v2394 = vrot.slane %v2393, 2
        %v2395 = vrot.slane %v1949, 7
        %v2396 = vrot.slane %v2395, 2
        %v2397 = vrot.slane %v1951, 7
        %v2398 = vrot.slane %v2397, 2
        %v2399 = vrot.slane %v1952, 7
        %v2400 = vrot.slane %v2399, 2
        %v2401 = vrot.slane %v1954, 7
        %v2402 = vrot.slane %v2401, 2
        %v2403 = vrot.slane %v1955, 7
        %v2404 = vrot.slane %v2403, 2
        %v2405 = vrot.slane %v1957, 7
        %v2406 = vrot.slane %v2405, 2
        %v2407 = vrot.slane %v1958, 7
        %v2408 = vrot.slane %v2407, 2
        %v2409 = vrot.slane %v1960, 7
        %v2410 = vrot.slane %v2409, 2
        %v2411 = vrot.slane %v1961, 7
        %v2412 = vrot.slane %v2411, 2
        %v2413 = vrot.slane %v1963, 7
        %v2414 = vrot.slane %v2413, 2
        %v2415 = vrot.slane %v1964, 7
        %v2416 = vrot.slane %v2415, 2
        %v2417 = vrot.slane %v1966, 7
        %v2418 = vrot.slane %v2417, 2
        %v2419 = vrot.slane %v1967, 7
        %v2420 = vrot.slane %v2419, 2
        %v2421 = vrot.slane %v1969, 7
        %v2422 = vrot.slane %v2421, 2
        %v2423 = vrot.slane %v1970, 7
        %v2424 = vrot.slane %v2423, 2
        %v2425 = vrot.slane %v1972, 7
        %v2426 = vrot.slane %v2425, 2
        %v2427 = vrot.slane %v1973, 7
        %v2428 = vrot.slane %v2427, 2
        %v2429 = vrot.slane %v1975, 7
        %v2430 = vrot.slane %v2429, 2
        %v2431 = vrot.slane %v1976, 7
        %v2432 = vrot.slane %v2431, 2
        %v2433 = vrot.slane %v1978, 7
        %v2434 = vrot.slane %v2433, 2
        %v2435 = vrot.slane %v1979, 7
        %v2436 = vrot.slane %v2435, 2
        %v2437 = vrot.slane %v1981, 7
        %v2438 = vrot.slane %v2437, 2
        %v2439 = vrot.slane %v1982, 7
        %v2440 = vrot.slane %v2439, 2
        %v2441 = vrot.slane %v1984, 7
        %v2442 = vrot.slane %v2441, 2
        %v2443 = vrot.slane %v1985, 7
        %v2444 = vrot.slane %v2443, 2
        %v2445 = vrot.slane %v1987, 7
        %v2446 = vrot.slane %v2445, 2
        %v2447 = vrot.slane %v1988, 7
        %v2448 = vrot.slane %v2447, 2
        %v2449 = vrot.slane %v1990, 7
        %v2450 = vrot.slane %v2449, 2
        %v2451 = vrot.slane %v1991, 7
        %v2452 = vrot.slane %v2451, 2
        %v2453 = vrot.slane %v1993, 7
        %v2454 = vrot.slane %v2453, 2
        %v2455 = vrot.slane %v1994, 7
        %v2456 = vrot.slane %v2455, 2
        %v2457 = vrot.slane %v1996, 7
        %v2458 = vrot.slane %v2457, 2
        %v2459 = vrot.slane %v1997, 7
        %v2460 = vrot.slane %v2459, 2
        %v2461 = vrot.slane %v1999, 7
        %v2462 = vrot.slane %v2461, 2
        %v2463 = vrot.slane %v2000, 7
        %v2464 = vrot.slane %v2463, 2
        %v2465 = vrot.slane %v2002, 7
        %v2466 = vrot.slane %v2465, 2
        %v2467 = vrot.slane %v2003, 7
        %v2468 = vrot.slane %v2467, 2
        %v2469 = vrot.slane %v2005, 7
        %v2470 = vrot.slane %v2469, 2
        %v2471 = vrot.slane %v2006, 7
        %v2472 = vrot.slane %v2471, 2
        %v2473 = vrot.slane %v2008, 7
        %v2474 = vrot.slane %v2473, 2
        %v2475 = vrot.slane %v2009, 7
        %v2476 = vrot.slane %v2475, 2
        %v2477 = vrot.slane %v2011, 7
        %v2478 = vrot.slane %v2477, 2
        %v2479 = vrot.slane %v2012, 7
        %v2480 = vrot.slane %v2479, 2
        %v2481 = vrot.slane %v2014, 7
        %v2482 = vrot.slane %v2481, 2
        %v2483 = vrot.slane %v2015, 7
        %v2484 = vrot.slane %v2483, 2
        %v2485 = vrot.slane %v2017, 7
        %v2486 = vrot.slane %v2485, 2
        %v2487 = vrot.slane %v2018, 7
        %v2488 = vrot.slane %v2487, 2
        %v2489 = vrot.slane %v2020, 7
        %v2490 = vrot.slane %v2489, 2
        %v2491 = vrot.slane %v2021, 7
        %v2492 = vrot.slane %v2491, 2
        %v2493 = vrot.slane %v2023, 7
        %v2494 = vrot.slane %v2493, 2
        %v2495 = vrot.slane %v2024, 7
        %v2496 = vrot.slane %v2495, 2
        %v2497 = vrot.slane %v2026, 7
        %v2498 = vrot.slane %v2497, 2
        %v2499 = vrot.slane %v2027, 7
        %v2500 = vrot.slane %v2499, 2
        %v2501 = vrot.slane %v2029, 7
        %v2502 = vrot.slane %v2501, 2
        %v2503 = vrot.slane %v2030, 7
        %v2504 = vrot.slane %v2503, 2
        %v2505 = vrot.slane %v2032, 7
        %v2506 = vrot.slane %v2505, 2
        %v2507 = vrot.slane %v2033, 7
        %v2508 = vrot.slane %v2507, 2
        %v2509 = vrot.slane %v2035, 7
        %v2510 = vrot.slane %v2509, 2
        %v2511 = vrot.slane %v2036, 7
        %v2512 = vrot.slane %v2511, 2
        %v2513 = vrot.slane %v2038, 7
        %v2514 = vrot.slane %v2513, 2
        %v2515 = vrot.slane %v2039, 7
        %v2516 = vrot.slane %v2515, 2
        %v2517 = vrot.slane %v2041, 7
        %v2518 = vrot.slane %v2517, 2
        %v2519 = vrot.slane %v2042, 7
        %v2520 = vrot.slane %v2519, 2
        %v2521 = vrot.slane %v2044, 7
        %v2522 = vrot.slane %v2521, 2
        %v2523 = vrot.slane %v2045, 7
        %v2524 = vrot.slane %v2523, 2
        %v2525 = vrot.slane %v2047, 7
        %v2526 = vrot.slane %v2525, 2
        %v2527 = vrot.slane %v2048, 7
        %v2528 = vrot.slane %v2527, 2
        %v2529 = vrot.slane %v2050, 7
        %v2530 = vrot.slane %v2529, 2
        %v2531 = vrot.slane %v2051, 7
        %v2532 = vrot.slane %v2531, 2
        %v2533 = vrot.slane %v2053, 7
        %v2534 = vrot.slane %v2533, 2
        %v2535 = vrot.slane %v2054, 7
        %v2536 = vrot.slane %v2535, 2
        %v2537 = vrot.slane %v2056, 7
        %v2538 = vrot.slane %v2537, 2
        %v2539 = vrot.slane %v2057, 7
        %v2540 = vrot.slane %v2539, 2
        %v2541 = vrot.slane %v2059, 7
        %v2542 = vrot.slane %v2541, 2
        %v2543 = vrot.slane %v2060, 7
        %v2544 = vrot.slane %v2543, 2
        %v2545 = vrot.slane %v2062, 7
        %v2546 = vrot.slane %v2545, 2
        %v2547 = vrot.slane %v2063, 7
        %v2548 = vrot.slane %v2547, 2
        %v2549 = vrot.slane %v2065, 7
        %v2550 = vrot.slane %v2549, 2
        %v2551 = vrot.slane %v2066, 7
        %v2552 = vrot.slane %v2551, 2
        %v2553 = vrot.slane %v2068, 7
        %v2554 = vrot.slane %v2553, 2
        %v2555 = vrot.slane %v2069, 7
        %v2556 = vrot.slane %v2555, 2
        %v2557 = vrot.slane %v2071, 7
        %v2558 = vrot.slane %v2557, 2
        %v2559 = vrot.slane %v2072, 7
        %v2560 = vrot.slane %v2559, 2
        %v2561 = vrot.slane %v2074, 7
        %v2562 = vrot.slane %v2561, 2
        %v2563 = vrot.slane %v2075, 7
        %v2564 = vrot.slane %v2563, 2
        %v2565 = vrot.slane %v2077, 7
        %v2566 = vrot.slane %v2565, 2
        %v2567 = vrot.slane %v2078, 7
        %v2568 = vrot.slane %v2567, 2
        %v2569 = vrot.slane %v2080, 7
        %v2570 = vrot.slane %v2569, 2
        %v2571 = vrot.slane %v2081, 7
        %v2572 = vrot.slane %v2571, 2
        %v2573 = vrot.slane %v2083, 7
        %v2574 = vrot.slane %v2573, 2
        %v2575 = vrot.slane %v2084, 7
        %v2576 = vrot.slane %v2575, 2
        %v2577 = vrot.slane %v2086, 7
        %v2578 = vrot.slane %v2577, 2
        %v2579 = vrot.slane %v2087, 7
        %v2580 = vrot.slane %v2579, 2
        %v2581 = vrot.slane %v2089, 7
        %v2582 = vrot.slane %v2581, 2
        %v2583 = vrot.slane %v2090, 7
        %v2584 = vrot.slane %v2583, 2
        %v2585 = vrot.slane %v2092, 7
        %v2586 = vrot.slane %v2585, 2
        %v2587 = vrot.slane %v2093, 7
        %v2588 = vrot.slane %v2587, 2
        %v2589 = vrot.slane %v2095, 7
        %v2590 = vrot.slane %v2589, 2
        %v2591 = vrot.slane %v2096, 7
        %v2592 = vrot.slane %v2591, 2
        %v2593 = vrot.slane %v2098, 7
        %v2594 = vrot.slane %v2593, 2
        %v2595 = vrot.slane %v2099, 7
        %v2596 = vrot.slane %v2595, 2
        %v2597 = vrot.slane %v2101, 7
        %v2598 = vrot.slane %v2597, 2
        %v2599 = vrot.slane %v2102, 7
        %v2600 = vrot.slane %v2599, 2
        %v2601 = vrot.slane %v2104, 7
        %v2602 = vrot.slane %v2601, 2
        %v2603 = vrot.slane %v2105, 7
        %v2604 = vrot.slane %v2603, 2
        %v2605 = vrot.slane %v2107, 7
        %v2606 = vrot.slane %v2605, 2
        %v2607 = vrot.slane %v2108, 7
        %v2608 = vrot.slane %v2607, 2
        %v2609 = vrot.slane %v2110, 7
        %v2610 = vrot.slane %v2609, 2
        %v2611 = vrot.slane %v2111, 7
        %v2612 = vrot.slane %v2611, 2
        %v2613 = vrot.slane %v2113, 7
        %v2614 = vrot.slane %v2613, 2
        %v2615 = vrot.slane %v2114, 7
        %v2616 = vrot.slane %v2615, 2
        %v2617 = vrot.slane %v2116, 7
        %v2618 = vrot.slane %v2617, 2
        %v2619 = vrot.slane %v2117, 7
        %v2620 = vrot.slane %v2619, 2
        %v2621 = vrot.slane %v2119, 7
        %v2622 = vrot.slane %v2621, 2
        %v2623 = vrot.slane %v2120, 7
        %v2624 = vrot.slane %v2623, 2
        %v2625 = vrot.slane %v2122, 7
        %v2626 = vrot.slane %v2625, 2
        %v2795 = vadd.f32 %v1870, %v2292
        %v2796 = vadd.f32 %v1873, %v2294
        %v2797 = vadd.f32 %v1874, %v2296
        %v2798 = vadd.f32 %v1876, %v2298
        %v2799 = vadd.f32 %v1877, %v2300
        %v2800 = vadd.f32 %v1879, %v2302
        %v2801 = vadd.f32 %v1880, %v2304
        %v2802 = vadd.f32 %v1882, %v2306
        %v2803 = vadd.f32 %v1883, %v2308
        %v2804 = vadd.f32 %v1885, %v2310
        %v2805 = vadd.f32 %v1886, %v2312
        %v2806 = vadd.f32 %v1888, %v2314
        %v2807 = vadd.f32 %v1889, %v2316
        %v2808 = vadd.f32 %v1891, %v2318
        %v2809 = vadd.f32 %v1892, %v2320
        %v2810 = vadd.f32 %v1894, %v2322
        %v2811 = vadd.f32 %v1895, %v2324
        %v2812 = vadd.f32 %v1897, %v2326
        %v2813 = vadd.f32 %v1898, %v2328
        %v2814 = vadd.f32 %v1900, %v2330
        %v2815 = vadd.f32 %v1901, %v2332
        %v2816 = vadd.f32 %v1903, %v2334
        %v2817 = vadd.f32 %v1904, %v2336
        %v2818 = vadd.f32 %v1906, %v2338
        %v2819 = vadd.f32 %v1907, %v2340
        %v2820 = vadd.f32 %v1909, %v2342
        %v2821 = vadd.f32 %v1910, %v2344
        %v2822 = vadd.f32 %v1912, %v2346
        %v2823 = vadd.f32 %v1913, %v2348
        %v2824 = vadd.f32 %v1915, %v2350
        %v2825 = vadd.f32 %v1916, %v2352
        %v2826 = vadd.f32 %v1918, %v2354
        %v2827 = vadd.f32 %v1919, %v2356
        %v2828 = vadd.f32 %v1921, %v2358
        %v2829 = vadd.f32 %v1922, %v2360
        %v2830 = vadd.f32 %v1924, %v2362
        %v2831 = vadd.f32 %v1925, %v2364
        %v2832 = vadd.f32 %v1927, %v2366
        %v2833 = vadd.f32 %v1928, %v2368
        %v2834 = vadd.f32 %v1930, %v2370
        %v2835 = vadd.f32 %v1931, %v2372
        %v2836 = vadd.f32 %v1933, %v2374
        %v2837 = vadd.f32 %v1934, %v2376
        %v2838 = vadd.f32 %v1936, %v2378
        %v2839 = vadd.f32 %v1937, %v2380
        %v2840 = vadd.f32 %v1939, %v2382
        %v2841 = vadd.f32 %v1940, %v2384
        %v2842 = vadd.f32 %v1942, %v2386
        %v2843 = vadd.f32 %v1943, %v2388
        %v2844 = vadd.f32 %v1945, %v2390
        %v2845 = vadd.f32 %v1946, %v2392
        %v2846 = vadd.f32 %v1948, %v2394
        %v2847 = vadd.f32 %v1949, %v2396
        %v2848 = vadd.f32 %v1951, %v2398
        %v2849 = vadd.f32 %v1952, %v2400
        %v2850 = vadd.f32 %v1954, %v2402
        %v2851 = vadd.f32 %v1955, %v2404
        %v2852 = vadd.f32 %v1957, %v2406
        %v2853 = vadd.f32 %v1958, %v2408
        %v2854 = vadd.f32 %v1960, %v2410
        %v2855 = vadd.f32 %v1961, %v2412
        %v2856 = vadd.f32 %v1963, %v2414
        %v2857 = vadd.f32 %v1964, %v2416
        %v2858 = vadd.f32 %v1966, %v2418
        %v2859 = vadd.f32 %v1967, %v2420
        %v2860 = vadd.f32 %v1969, %v2422
        %v2861 = vadd.f32 %v1970, %v2424
        %v2862 = vadd.f32 %v1972, %v2426
        %v2863 = vadd.f32 %v1973, %v2428
        %v2864 = vadd.f32 %v1975, %v2430
        %v2865 = vadd.f32 %v1976, %v2432
        %v2866 = vadd.f32 %v1978, %v2434
        %v2867 = vadd.f32 %v1979, %v2436
        %v2868 = vadd.f32 %v1981, %v2438
        %v2869 = vadd.f32 %v1982, %v2440
        %v2870 = vadd.f32 %v1984, %v2442
        %v2871 = vadd.f32 %v1985, %v2444
        %v2872 = vadd.f32 %v1987, %v2446
        %v2873 = vadd.f32 %v1988, %v2448
        %v2874 = vadd.f32 %v1990, %v2450
        %v2875 = vadd.f32 %v1991, %v2452
        %v2876 = vadd.f32 %v1993, %v2454
        %v2877 = vadd.f32 %v1994, %v2456
        %v2878 = vadd.f32 %v1996, %v2458
        %v2879 = vadd.f32 %v1997, %v2460
        %v2880 = vadd.f32 %v1999, %v2462
        %v2881 = vadd.f32 %v2000, %v2464
        %v2882 = vadd.f32 %v2002, %v2466
        %v2883 = vadd.f32 %v2003, %v2468
        %v2884 = vadd.f32 %v2005, %v2470
        %v2885 = vadd.f32 %v2006, %v2472
        %v2886 = vadd.f32 %v2008, %v2474
        %v2887 = vadd.f32 %v2009, %v2476
        %v2888 = vadd.f32 %v2011, %v2478
        %v2889 = vadd.f32 %v2012, %v2480
        %v2890 = vadd.f32 %v2014, %v2482
        %v2891 = vadd.f32 %v2015, %v2484
        %v2892 = vadd.f32 %v2017, %v2486
        %v2893 = vadd.f32 %v2018, %v2488
        %v2894 = vadd.f32 %v2020, %v2490
        %v2895 = vadd.f32 %v2021, %v2492
        %v2896 = vadd.f32 %v2023, %v2494
        %v2897 = vadd.f32 %v2024, %v2496
        %v2898 = vadd.f32 %v2026, %v2498
        %v2899 = vadd.f32 %v2027, %v2500
        %v2900 = vadd.f32 %v2029, %v2502
        %v2901 = vadd.f32 %v2030, %v2504
        %v2902 = vadd.f32 %v2032, %v2506
        %v2903 = vadd.f32 %v2033, %v2508
        %v2904 = vadd.f32 %v2035, %v2510
        %v2905 = vadd.f32 %v2036, %v2512
        %v2906 = vadd.f32 %v2038, %v2514
        %v2907 = vadd.f32 %v2039, %v2516
        %v2908 = vadd.f32 %v2041, %v2518
        %v2909 = vadd.f32 %v2042, %v2520
        %v2910 = vadd.f32 %v2044, %v2522
        %v2911 = vadd.f32 %v2045, %v2524
        %v2912 = vadd.f32 %v2047, %v2526
        %v2913 = vadd.f32 %v2048, %v2528
        %v2914 = vadd.f32 %v2050, %v2530
        %v2915 = vadd.f32 %v2051, %v2532
        %v2916 = vadd.f32 %v2053, %v2534
        %v2917 = vadd.f32 %v2054, %v2536
        %v2918 = vadd.f32 %v2056, %v2538
        %v2919 = vadd.f32 %v2057, %v2540
        %v2920 = vadd.f32 %v2059, %v2542
        %v2921 = vadd.f32 %v2060, %v2544
        %v2922 = vadd.f32 %v2062, %v2546
        %v2923 = vadd.f32 %v2063, %v2548
        %v2924 = vadd.f32 %v2065, %v2550
        %v2925 = vadd.f32 %v2066, %v2552
        %v2926 = vadd.f32 %v2068, %v2554
        %v2927 = vadd.f32 %v2069, %v2556
        %v2928 = vadd.f32 %v2071, %v2558
        %v2929 = vadd.f32 %v2072, %v2560
        %v2930 = vadd.f32 %v2074, %v2562
        %v2931 = vadd.f32 %v2075, %v2564
        %v2932 = vadd.f32 %v2077, %v2566
        %v2933 = vadd.f32 %v2078, %v2568
        %v2934 = vadd.f32 %v2080, %v2570
        %v2935 = vadd.f32 %v2081, %v2572
        %v2936 = vadd.f32 %v2083, %v2574
        %v2937 = vadd.f32 %v2084, %v2576
        %v2938 = vadd.f32 %v2086, %v2578
        %v2939 = vadd.f32 %v2087, %v2580
        %v2940 = vadd.f32 %v2089, %v2582
        %v2941 = vadd.f32 %v2090, %v2584
        %v2942 = vadd.f32 %v2092, %v2586
        %v2943 = vadd.f32 %v2093, %v2588
        %v2944 = vadd.f32 %v2095, %v2590
        %v2945 = vadd.f32 %v2096, %v2592
        %v2946 = vadd.f32 %v2098, %v2594
        %v2947 = vadd.f32 %v2099, %v2596
        %v2948 = vadd.f32 %v2101, %v2598
        %v2949 = vadd.f32 %v2102, %v2600
        %v2950 = vadd.f32 %v2104, %v2602
        %v2951 = vadd.f32 %v2105, %v2604
        %v2952 = vadd.f32 %v2107, %v2606
        %v2953 = vadd.f32 %v2108, %v2608
        %v2954 = vadd.f32 %v2110, %v2610
        %v2955 = vadd.f32 %v2111, %v2612
        %v2956 = vadd.f32 %v2113, %v2614
        %v2957 = vadd.f32 %v2114, %v2616
        %v2958 = vadd.f32 %v2116, %v2618
        %v2959 = vadd.f32 %v2117, %v2620
        %v2960 = vadd.f32 %v2119, %v2622
        %v2961 = vadd.f32 %v2120, %v2624
        %v2962 = vadd.f32 %v2122, %v2626
        %v2963 = vmul.f32 %v2795, 0.25
        %v2964 = vmul.f32 %v2796, 0.25
        %v2965 = vmul.f32 %v2797, 0.25
        %v2966 = vmul.f32 %v2798, 0.25
        %v2967 = vmul.f32 %v2799, 0.25
        %v2968 = vmul.f32 %v2800, 0.25
        %v2969 = vmul.f32 %v2801, 0.25
        %v2970 = vmul.f32 %v2802, 0.25
        %v2971 = vmul.f32 %v2803, 0.25
        %v2972 = vmul.f32 %v2804, 0.25
        %v2973 = vmul.f32 %v2805, 0.25
        %v2974 = vmul.f32 %v2806, 0.25
        %v2975 = vmul.f32 %v2807, 0.25
        %v2976 = vmul.f32 %v2808, 0.25
        %v2977 = vmul.f32 %v2809, 0.25
        %v2978 = vmul.f32 %v2810, 0.25
        %v2979 = vmul.f32 %v2811, 0.25
        %v2980 = vmul.f32 %v2812, 0.25
        %v2981 = vmul.f32 %v2813, 0.25
        %v2982 = vmul.f32 %v2814, 0.25
        %v2983 = vmul.f32 %v2815, 0.25
        %v2984 = vmul.f32 %v2816, 0.25
        %v2985 = vmul.f32 %v2817, 0.25
        %v2986 = vmul.f32 %v2818, 0.25
        %v2987 = vmul.f32 %v2819, 0.25
        %v2988 = vmul.f32 %v2820, 0.25
        %v2989 = vmul.f32 %v2821, 0.25
        %v2990 = vmul.f32 %v2822, 0.25
        %v2991 = vmul.f32 %v2823, 0.25
        %v2992 = vmul.f32 %v2824, 0.25
        %v2993 = vmul.f32 %v2825, 0.25
        %v2994 = vmul.f32 %v2826, 0.25
        %v2995 = vmul.f32 %v2827, 0.25
        %v2996 = vmul.f32 %v2828, 0.25
        %v2997 = vmul.f32 %v2829, 0.25
        %v2998 = vmul.f32 %v2830, 0.25
        %v2999 = vmul.f32 %v2831, 0.25
        %v3000 = vmul.f32 %v2832, 0.25
        %v3001 = vmul.f32 %v2833, 0.25
        %v3002 = vmul.f32 %v2834, 0.25
        %v3003 = vmul.f32 %v2835, 0.25
        %v3004 = vmul.f32 %v2836, 0.25
        %v3005 = vmul.f32 %v2837, 0.25
        %v3006 = vmul.f32 %v2838, 0.25
        %v3007 = vmul.f32 %v2839, 0.25
        %v3008 = vmul.f32 %v2840, 0.25
        %v3009 = vmul.f32 %v2841, 0.25
        %v3010 = vmul.f32 %v2842, 0.25
        %v3011 = vmul.f32 %v2843, 0.25
        %v3012 = vmul.f32 %v2844, 0.25
        %v3013 = vmul.f32 %v2845, 0.25
        %v3014 = vmul.f32 %v2846, 0.25
        %v3015 = vmul.f32 %v2847, 0.25
        %v3016 = vmul.f32 %v2848, 0.25
        %v3017 = vmul.f32 %v2849, 0.25
        %v3018 = vmul.f32 %v2850, 0.25
        %v3019 = vmul.f32 %v2851, 0.25
        %v3020 = vmul.f32 %v2852, 0.25
        %v3021 = vmul.f32 %v2853, 0.25
        %v3022 = vmul.f32 %v2854, 0.25
        %v3023 = vmul.f32 %v2855, 0.25
        %v3024 = vmul.f32 %v2856, 0.25
        %v3025 = vmul.f32 %v2857, 0.25
        %v3026 = vmul.f32 %v2858, 0.25
        %v3027 = vmul.f32 %v2859, 0.25
        %v3028 = vmul.f32 %v2860, 0.25
        %v3029 = vmul.f32 %v2861, 0.25
        %v3030 = vmul.f32 %v2862, 0.25
        %v3031 = vmul.f32 %v2863, 0.25
        %v3032 = vmul.f32 %v2864, 0.25
        %v3033 = vmul.f32 %v2865, 0.25
        %v3034 = vmul.f32 %v2866, 0.25
        %v3035 = vmul.f32 %v2867, 0.25
        %v3036 = vmul.f32 %v2868, 0.25
        %v3037 = vmul.f32 %v2869, 0.25
        %v3038 = vmul.f32 %v2870, 0.25
        %v3039 = vmul.f32 %v2871, 0.25
        %v3040 = vmul.f32 %v2872, 0.25
        %v3041 = vmul.f32 %v2873, 0.25
        %v3042 = vmul.f32 %v2874, 0.25
        %v3043 = vmul.f32 %v2875, 0.25
        %v3044 = vmul.f32 %v2876, 0.25
        %v3045 = vmul.f32 %v2877, 0.25
        %v3046 = vmul.f32 %v2878, 0.25
        %v3047 = vmul.f32 %v2879, 0.25
        %v3048 = vmul.f32 %v2880, 0.25
        %v3049 = vmul.f32 %v2881, 0.25
        %v3050 = vmul.f32 %v2882, 0.25
        %v3051 = vmul.f32 %v2883, 0.25
        %v3052 = vmul.f32 %v2884, 0.25
        %v3053 = vmul.f32 %v2885, 0.25
        %v3054 = vmul.f32 %v2886, 0.25
        %v3055 = vmul.f32 %v2887, 0.25
        %v3056 = vmul.f32 %v2888, 0.25
        %v3057 = vmul.f32 %v2889, 0.25
        %v3058 = vmul.f32 %v2890, 0.25
        %v3059 = vmul.f32 %v2891, 0.25
        %v3060 = vmul.f32 %v2892, 0.25
        %v3061 = vmul.f32 %v2893, 0.25
        %v3062 = vmul.f32 %v2894, 0.25
        %v3063 = vmul.f32 %v2895, 0.25
        %v3064 = vmul.f32 %v2896, 0.25
        %v3065 = vmul.f32 %v2897, 0.25
        %v3066 = vmul.f32 %v2898, 0.25
        %v3067 = vmul.f32 %v2899, 0.25
        %v3068 = vmul.f32 %v2900, 0.25
        %v3069 = vmul.f32 %v2901, 0.25
        %v3070 = vmul.f32 %v2902, 0.25
        %v3071 = vmul.f32 %v2903, 0.25
        %v3072 = vmul.f32 %v2904, 0.25
        %v3073 = vmul.f32 %v2905, 0.25
        %v3074 = vmul.f32 %v2906, 0.25
        %v3075 = vmul.f32 %v2907, 0.25
        %v3076 = vmul.f32 %v2908, 0.25
        %v3077 = vmul.f32 %v2909, 0.25
        %v3078 = vmul.f32 %v2910, 0.25
        %v3079 = vmul.f32 %v2911, 0.25
        %v3080 = vmul.f32 %v2912, 0.25
        %v3081 = vmul.f32 %v2913, 0.25
        %v3082 = vmul.f32 %v2914, 0.25
        %v3083 = vmul.f32 %v2915, 0.25
        %v3084 = vmul.f32 %v2916, 0.25
        %v3085 = vmul.f32 %v2917, 0.25
        %v3086 = vmul.f32 %v2918, 0.25
        %v3087 = vmul.f32 %v2919, 0.25
        %v3088 = vmul.f32 %v2920, 0.25
        %v3089 = vmul.f32 %v2921, 0.25
        %v3090 = vmul.f32 %v2922, 0.25
        %v3091 = vmul.f32 %v2923, 0.25
        %v3092 = vmul.f32 %v2924, 0.25
        %v3093 = vmul.f32 %v2925, 0.25
        %v3094 = vmul.f32 %v2926, 0.25
        %v3095 = vmul.f32 %v2927, 0.25
        %v3096 = vmul.f32 %v2928, 0.25
        %v3097 = vmul.f32 %v2929, 0.25
        %v3098 = vmul.f32 %v2930, 0.25
        %v3099 = vmul.f32 %v2931, 0.25
        %v3100 = vmul.f32 %v2932, 0.25
        %v3101 = vmul.f32 %v2933, 0.25
        %v3102 = vmul.f32 %v2934, 0.25
        %v3103 = vmul.f32 %v2935, 0.25
        %v3104 = vmul.f32 %v2936, 0.25
        %v3105 = vmul.f32 %v2937, 0.25
        %v3106 = vmul.f32 %v2938, 0.25
        %v3107 = vmul.f32 %v2939, 0.25
        %v3108 = vmul.f32 %v2940, 0.25
        %v3109 = vmul.f32 %v2941, 0.25
        %v3110 = vmul.f32 %v2942, 0.25
        %v3111 = vmul.f32 %v2943, 0.25
        %v3112 = vmul.f32 %v2944, 0.25
        %v3113 = vmul.f32 %v2945, 0.25
        %v3114 = vmul.f32 %v2946, 0.25
        %v3115 = vmul.f32 %v2947, 0.25
        %v3116 = vmul.f32 %v2948, 0.25
        %v3117 = vmul.f32 %v2949, 0.25
        %v3118 = vmul.f32 %v2950, 0.25
        %v3119 = vmul.f32 %v2951, 0.25
        %v3120 = vmul.f32 %v2952, 0.25
        %v3121 = vmul.f32 %v2953, 0.25
        %v3122 = vmul.f32 %v2954, 0.25
        %v3123 = vmul.f32 %v2955, 0.25
        %v3124 = vmul.f32 %v2956, 0.25
        %v3125 = vmul.f32 %v2957, 0.25
        %v3126 = vmul.f32 %v2958, 0.25
        %v3127 = vmul.f32 %v2959, 0.25
        %v3128 = vmul.f32 %v2960, 0.25
        %v3129 = vmul.f32 %v2961, 0.25
        %v3130 = vmul.f32 %v2962, 0.25
        %v3131 = vpack.c.bf16 %v2963, %v2963
        %v3132 = vpack.c.bf16 %v2964, %v2964
        %v3133 = vpack.c.bf16 %v2965, %v2965
        %v3134 = vpack.c.bf16 %v2966, %v2966
        %v3135 = vpack.c.bf16 %v2967, %v2967
        %v3136 = vpack.c.bf16 %v2968, %v2968
        %v3137 = vpack.c.bf16 %v2969, %v2969
        %v3138 = vpack.c.bf16 %v2970, %v2970
        %v3139 = vpack.c.bf16 %v2971, %v2971
        %v3140 = vpack.c.bf16 %v2972, %v2972
        %v3141 = vpack.c.bf16 %v2973, %v2973
        %v3142 = vpack.c.bf16 %v2974, %v2974
        %v3143 = vpack.c.bf16 %v2975, %v2975
        %v3144 = vpack.c.bf16 %v2976, %v2976
        %v3145 = vpack.c.bf16 %v2977, %v2977
        %v3146 = vpack.c.bf16 %v2978, %v2978
        %v3147 = vpack.c.bf16 %v2979, %v2979
        %v3148 = vpack.c.bf16 %v2980, %v2980
        %v3149 = vpack.c.bf16 %v2981, %v2981
        %v3150 = vpack.c.bf16 %v2982, %v2982
        %v3151 = vpack.c.bf16 %v2983, %v2983
        %v3152 = vpack.c.bf16 %v2984, %v2984
        %v3153 = vpack.c.bf16 %v2985, %v2985
        %v3154 = vpack.c.bf16 %v2986, %v2986
        %v3155 = vpack.c.bf16 %v2987, %v2987
        %v3156 = vpack.c.bf16 %v2988, %v2988
        %v3157 = vpack.c.bf16 %v2989, %v2989
        %v3158 = vpack.c.bf16 %v2990, %v2990
        %v3159 = vpack.c.bf16 %v2991, %v2991
        %v3160 = vpack.c.bf16 %v2992, %v2992
        %v3161 = vpack.c.bf16 %v2993, %v2993
        %v3162 = vpack.c.bf16 %v2994, %v2994
        %v3163 = vpack.c.bf16 %v2995, %v2995
        %v3164 = vpack.c.bf16 %v2996, %v2996
        %v3165 = vpack.c.bf16 %v2997, %v2997
        %v3166 = vpack.c.bf16 %v2998, %v2998
        %v3167 = vpack.c.bf16 %v2999, %v2999
        %v3168 = vpack.c.bf16 %v3000, %v3000
        %v3169 = vpack.c.bf16 %v3001, %v3001
        %v3170 = vpack.c.bf16 %v3002, %v3002
        %v3171 = vpack.c.bf16 %v3003, %v3003
        %v3172 = vpack.c.bf16 %v3004, %v3004
        %v3173 = vpack.c.bf16 %v3005, %v3005
        %v3174 = vpack.c.bf16 %v3006, %v3006
        %v3175 = vpack.c.bf16 %v3007, %v3007
        %v3176 = vpack.c.bf16 %v3008, %v3008
        %v3177 = vpack.c.bf16 %v3009, %v3009
        %v3178 = vpack.c.bf16 %v3010, %v3010
        %v3179 = vpack.c.bf16 %v3011, %v3011
        %v3180 = vpack.c.bf16 %v3012, %v3012
        %v3181 = vpack.c.bf16 %v3013, %v3013
        %v3182 = vpack.c.bf16 %v3014, %v3014
        %v3183 = vpack.c.bf16 %v3015, %v3015
        %v3184 = vpack.c.bf16 %v3016, %v3016
        %v3185 = vpack.c.bf16 %v3017, %v3017
        %v3186 = vpack.c.bf16 %v3018, %v3018
        %v3187 = vpack.c.bf16 %v3019, %v3019
        %v3188 = vpack.c.bf16 %v3020, %v3020
        %v3189 = vpack.c.bf16 %v3021, %v3021
        %v3190 = vpack.c.bf16 %v3022, %v3022
        %v3191 = vpack.c.bf16 %v3023, %v3023
        %v3192 = vpack.c.bf16 %v3024, %v3024
        %v3193 = vpack.c.bf16 %v3025, %v3025
        %v3194 = vpack.c.bf16 %v3026, %v3026
        %v3195 = vpack.c.bf16 %v3027, %v3027
        %v3196 = vpack.c.bf16 %v3028, %v3028
        %v3197 = vpack.c.bf16 %v3029, %v3029
        %v3198 = vpack.c.bf16 %v3030, %v3030
        %v3199 = vpack.c.bf16 %v3031, %v3031
        %v3200 = vpack.c.bf16 %v3032, %v3032
        %v3201 = vpack.c.bf16 %v3033, %v3033
        %v3202 = vpack.c.bf16 %v3034, %v3034
        %v3203 = vpack.c.bf16 %v3035, %v3035
        %v3204 = vpack.c.bf16 %v3036, %v3036
        %v3205 = vpack.c.bf16 %v3037, %v3037
        %v3206 = vpack.c.bf16 %v3038, %v3038
        %v3207 = vpack.c.bf16 %v3039, %v3039
        %v3208 = vpack.c.bf16 %v3040, %v3040
        %v3209 = vpack.c.bf16 %v3041, %v3041
        %v3210 = vpack.c.bf16 %v3042, %v3042
        %v3211 = vpack.c.bf16 %v3043, %v3043
        %v3212 = vpack.c.bf16 %v3044, %v3044
        %v3213 = vpack.c.bf16 %v3045, %v3045
        %v3214 = vpack.c.bf16 %v3046, %v3046
        %v3215 = vpack.c.bf16 %v3047, %v3047
        %v3216 = vpack.c.bf16 %v3048, %v3048
        %v3217 = vpack.c.bf16 %v3049, %v3049
        %v3218 = vpack.c.bf16 %v3050, %v3050
        %v3219 = vpack.c.bf16 %v3051, %v3051
        %v3220 = vpack.c.bf16 %v3052, %v3052
        %v3221 = vpack.c.bf16 %v3053, %v3053
        %v3222 = vpack.c.bf16 %v3054, %v3054
        %v3223 = vpack.c.bf16 %v3055, %v3055
        %v3224 = vpack.c.bf16 %v3056, %v3056
        %v3225 = vpack.c.bf16 %v3057, %v3057
        %v3226 = vpack.c.bf16 %v3058, %v3058
        %v3227 = vpack.c.bf16 %v3059, %v3059
        %v3228 = vpack.c.bf16 %v3060, %v3060
        %v3229 = vpack.c.bf16 %v3061, %v3061
        %v3230 = vpack.c.bf16 %v3062, %v3062
        %v3231 = vpack.c.bf16 %v3063, %v3063
        %v3232 = vpack.c.bf16 %v3064, %v3064
        %v3233 = vpack.c.bf16 %v3065, %v3065
        %v3234 = vpack.c.bf16 %v3066, %v3066
        %v3235 = vpack.c.bf16 %v3067, %v3067
        %v3236 = vpack.c.bf16 %v3068, %v3068
        %v3237 = vpack.c.bf16 %v3069, %v3069
        %v3238 = vpack.c.bf16 %v3070, %v3070
        %v3239 = vpack.c.bf16 %v3071, %v3071
        %v3240 = vpack.c.bf16 %v3072, %v3072
        %v3241 = vpack.c.bf16 %v3073, %v3073
        %v3242 = vpack.c.bf16 %v3074, %v3074
        %v3243 = vpack.c.bf16 %v3075, %v3075
        %v3244 = vpack.c.bf16 %v3076, %v3076
        %v3245 = vpack.c.bf16 %v3077, %v3077
        %v3246 = vpack.c.bf16 %v3078, %v3078
        %v3247 = vpack.c.bf16 %v3079, %v3079
        %v3248 = vpack.c.bf16 %v3080, %v3080
        %v3249 = vpack.c.bf16 %v3081, %v3081
        %v3250 = vpack.c.bf16 %v3082, %v3082
        %v3251 = vpack.c.bf16 %v3083, %v3083
        %v3252 = vpack.c.bf16 %v3084, %v3084
        %v3253 = vpack.c.bf16 %v3085, %v3085
        %v3254 = vpack.c.bf16 %v3086, %v3086
        %v3255 = vpack.c.bf16 %v3087, %v3087
        %v3256 = vpack.c.bf16 %v3088, %v3088
        %v3257 = vpack.c.bf16 %v3089, %v3089
        %v3258 = vpack.c.bf16 %v3090, %v3090
        %v3259 = vpack.c.bf16 %v3091, %v3091
        %v3260 = vpack.c.bf16 %v3092, %v3092
        %v3261 = vpack.c.bf16 %v3093, %v3093
        %v3262 = vpack.c.bf16 %v3094, %v3094
        %v3263 = vpack.c.bf16 %v3095, %v3095
        %v3264 = vpack.c.bf16 %v3096, %v3096
        %v3265 = vpack.c.bf16 %v3097, %v3097
        %v3266 = vpack.c.bf16 %v3098, %v3098
        %v3267 = vpack.c.bf16 %v3099, %v3099
        %v3268 = vpack.c.bf16 %v3100, %v3100
        %v3269 = vpack.c.bf16 %v3101, %v3101
        %v3270 = vpack.c.bf16 %v3102, %v3102
        %v3271 = vpack.c.bf16 %v3103, %v3103
        %v3272 = vpack.c.bf16 %v3104, %v3104
        %v3273 = vpack.c.bf16 %v3105, %v3105
        %v3274 = vpack.c.bf16 %v3106, %v3106
        %v3275 = vpack.c.bf16 %v3107, %v3107
        %v3276 = vpack.c.bf16 %v3108, %v3108
        %v3277 = vpack.c.bf16 %v3109, %v3109
        %v3278 = vpack.c.bf16 %v3110, %v3110
        %v3279 = vpack.c.bf16 %v3111, %v3111
        %v3280 = vpack.c.bf16 %v3112, %v3112
        %v3281 = vpack.c.bf16 %v3113, %v3113
        %v3282 = vpack.c.bf16 %v3114, %v3114
        %v3283 = vpack.c.bf16 %v3115, %v3115
        %v3284 = vpack.c.bf16 %v3116, %v3116
        %v3285 = vpack.c.bf16 %v3117, %v3117
        %v3286 = vpack.c.bf16 %v3118, %v3118
        %v3287 = vpack.c.bf16 %v3119, %v3119
        %v3288 = vpack.c.bf16 %v3120, %v3120
        %v3289 = vpack.c.bf16 %v3121, %v3121
        %v3290 = vpack.c.bf16 %v3122, %v3122
        %v3291 = vpack.c.bf16 %v3123, %v3123
        %v3292 = vpack.c.bf16 %v3124, %v3124
        %v3293 = vpack.c.bf16 %v3125, %v3125
        %v3294 = vpack.c.bf16 %v3126, %v3126
        %v3295 = vpack.c.bf16 %v3127, %v3127
        %v3296 = vpack.c.bf16 %v3128, %v3128
        %v3297 = vpack.c.bf16 %v3129, %v3129
        %v3298 = vpack.c.bf16 %v3130, %v3130
        %v3467 = vunpack.c.l.b16 %v3131
        %v3468 = vunpack.c.l.b16 %v3132
        %v3469 = vunpack.c.l.b16 %v3133
        %v3470 = vunpack.c.l.b16 %v3134
        %v3471 = vunpack.c.l.b16 %v3135
        %v3472 = vunpack.c.l.b16 %v3136
        %v3473 = vunpack.c.l.b16 %v3137
        %v3474 = vunpack.c.l.b16 %v3138
        %v3475 = vunpack.c.l.b16 %v3139
        %v3476 = vunpack.c.l.b16 %v3140
        %v3477 = vunpack.c.l.b16 %v3141
        %v3478 = vunpack.c.l.b16 %v3142
        %v3479 = vunpack.c.l.b16 %v3143
        %v3480 = vunpack.c.l.b16 %v3144
        %v3481 = vunpack.c.l.b16 %v3145
        %v3482 = vunpack.c.l.b16 %v3146
        %v3483 = vunpack.c.l.b16 %v3147
        %v3484 = vunpack.c.l.b16 %v3148
        %v3485 = vunpack.c.l.b16 %v3149
        %v3486 = vunpack.c.l.b16 %v3150
        %v3487 = vunpack.c.l.b16 %v3151
        %v3488 = vunpack.c.l.b16 %v3152
        %v3489 = vunpack.c.l.b16 %v3153
        %v3490 = vunpack.c.l.b16 %v3154
        %v3491 = vunpack.c.l.b16 %v3155
        %v3492 = vunpack.c.l.b16 %v3156
        %v3493 = vunpack.c.l.b16 %v3157
        %v3494 = vunpack.c.l.b16 %v3158
        %v3495 = vunpack.c.l.b16 %v3159
        %v3496 = vunpack.c.l.b16 %v3160
        %v3497 = vunpack.c.l.b16 %v3161
        %v3498 = vunpack.c.l.b16 %v3162
        %v3499 = vunpack.c.l.b16 %v3163
        %v3500 = vunpack.c.l.b16 %v3164
        %v3501 = vunpack.c.l.b16 %v3165
        %v3502 = vunpack.c.l.b16 %v3166
        %v3503 = vunpack.c.l.b16 %v3167
        %v3504 = vunpack.c.l.b16 %v3168
        %v3505 = vunpack.c.l.b16 %v3169
        %v3506 = vunpack.c.l.b16 %v3170
        %v3507 = vunpack.c.l.b16 %v3171
        %v3508 = vunpack.c.l.b16 %v3172
        %v3509 = vunpack.c.l.b16 %v3173
        %v3510 = vunpack.c.l.b16 %v3174
        %v3511 = vunpack.c.l.b16 %v3175
        %v3512 = vunpack.c.l.b16 %v3176
        %v3513 = vunpack.c.l.b16 %v3177
        %v3514 = vunpack.c.l.b16 %v3178
        %v3515 = vunpack.c.l.b16 %v3179
        %v3516 = vunpack.c.l.b16 %v3180
        %v3517 = vunpack.c.l.b16 %v3181
        %v3518 = vunpack.c.l.b16 %v3182
        %v3519 = vunpack.c.l.b16 %v3183
        %v3520 = vunpack.c.l.b16 %v3184
        %v3521 = vunpack.c.l.b16 %v3185
        %v3522 = vunpack.c.l.b16 %v3186
        %v3523 = vunpack.c.l.b16 %v3187
        %v3524 = vunpack.c.l.b16 %v3188
        %v3525 = vunpack.c.l.b16 %v3189
        %v3526 = vunpack.c.l.b16 %v3190
        %v3527 = vunpack.c.l.b16 %v3191
        %v3528 = vunpack.c.l.b16 %v3192
        %v3529 = vunpack.c.l.b16 %v3193
        %v3530 = vunpack.c.l.b16 %v3194
        %v3531 = vunpack.c.l.b16 %v3195
        %v3532 = vunpack.c.l.b16 %v3196
        %v3533 = vunpack.c.l.b16 %v3197
        %v3534 = vunpack.c.l.b16 %v3198
        %v3535 = vunpack.c.l.b16 %v3199
        %v3536 = vunpack.c.l.b16 %v3200
        %v3537 = vunpack.c.l.b16 %v3201
        %v3538 = vunpack.c.l.b16 %v3202
        %v3539 = vunpack.c.l.b16 %v3203
        %v3540 = vunpack.c.l.b16 %v3204
        %v3541 = vunpack.c.l.b16 %v3205
        %v3542 = vunpack.c.l.b16 %v3206
        %v3543 = vunpack.c.l.b16 %v3207
        %v3544 = vunpack.c.l.b16 %v3208
        %v3545 = vunpack.c.l.b16 %v3209
        %v3546 = vunpack.c.l.b16 %v3210
        %v3547 = vunpack.c.l.b16 %v3211
        %v3548 = vunpack.c.l.b16 %v3212
        %v3549 = vunpack.c.l.b16 %v3213
        %v3550 = vunpack.c.l.b16 %v3214
        %v3551 = vunpack.c.l.b16 %v3215
        %v3552 = vunpack.c.l.b16 %v3216
        %v3553 = vunpack.c.l.b16 %v3217
        %v3554 = vunpack.c.l.b16 %v3218
        %v3555 = vunpack.c.l.b16 %v3219
        %v3556 = vunpack.c.l.b16 %v3220
        %v3557 = vunpack.c.l.b16 %v3221
        %v3558 = vunpack.c.l.b16 %v3222
        %v3559 = vunpack.c.l.b16 %v3223
        %v3560 = vunpack.c.l.b16 %v3224
        %v3561 = vunpack.c.l.b16 %v3225
        %v3562 = vunpack.c.l.b16 %v3226
        %v3563 = vunpack.c.l.b16 %v3227
        %v3564 = vunpack.c.l.b16 %v3228
        %v3565 = vunpack.c.l.b16 %v3229
        %v3566 = vunpack.c.l.b16 %v3230
        %v3567 = vunpack.c.l.b16 %v3231
        %v3568 = vunpack.c.l.b16 %v3232
        %v3569 = vunpack.c.l.b16 %v3233
        %v3570 = vunpack.c.l.b16 %v3234
        %v3571 = vunpack.c.l.b16 %v3235
        %v3572 = vunpack.c.l.b16 %v3236
        %v3573 = vunpack.c.l.b16 %v3237
        %v3574 = vunpack.c.l.b16 %v3238
        %v3575 = vunpack.c.l.b16 %v3239
        %v3576 = vunpack.c.l.b16 %v3240
        %v3577 = vunpack.c.l.b16 %v3241
        %v3578 = vunpack.c.l.b16 %v3242
        %v3579 = vunpack.c.l.b16 %v3243
        %v3580 = vunpack.c.l.b16 %v3244
        %v3581 = vunpack.c.l.b16 %v3245
        %v3582 = vunpack.c.l.b16 %v3246
        %v3583 = vunpack.c.l.b16 %v3247
        %v3584 = vunpack.c.l.b16 %v3248
        %v3585 = vunpack.c.l.b16 %v3249
        %v3586 = vunpack.c.l.b16 %v3250
        %v3587 = vunpack.c.l.b16 %v3251
        %v3588 = vunpack.c.l.b16 %v3252
        %v3589 = vunpack.c.l.b16 %v3253
        %v3590 = vunpack.c.l.b16 %v3254
        %v3591 = vunpack.c.l.b16 %v3255
        %v3592 = vunpack.c.l.b16 %v3256
        %v3593 = vunpack.c.l.b16 %v3257
        %v3594 = vunpack.c.l.b16 %v3258
        %v3595 = vunpack.c.l.b16 %v3259
        %v3596 = vunpack.c.l.b16 %v3260
        %v3597 = vunpack.c.l.b16 %v3261
        %v3598 = vunpack.c.l.b16 %v3262
        %v3599 = vunpack.c.l.b16 %v3263
        %v3600 = vunpack.c.l.b16 %v3264
        %v3601 = vunpack.c.l.b16 %v3265
        %v3602 = vunpack.c.l.b16 %v3266
        %v3603 = vunpack.c.l.b16 %v3267
        %v3604 = vunpack.c.l.b16 %v3268
        %v3605 = vunpack.c.l.b16 %v3269
        %v3606 = vunpack.c.l.b16 %v3270
        %v3607 = vunpack.c.l.b16 %v3271
        %v3608 = vunpack.c.l.b16 %v3272
        %v3609 = vunpack.c.l.b16 %v3273
        %v3610 = vunpack.c.l.b16 %v3274
        %v3611 = vunpack.c.l.b16 %v3275
        %v3612 = vunpack.c.l.b16 %v3276
        %v3613 = vunpack.c.l.b16 %v3277
        %v3614 = vunpack.c.l.b16 %v3278
        %v3615 = vunpack.c.l.b16 %v3279
        %v3616 = vunpack.c.l.b16 %v3280
        %v3617 = vunpack.c.l.b16 %v3281
        %v3618 = vunpack.c.l.b16 %v3282
        %v3619 = vunpack.c.l.b16 %v3283
        %v3620 = vunpack.c.l.b16 %v3284
        %v3621 = vunpack.c.l.b16 %v3285
        %v3622 = vunpack.c.l.b16 %v3286
        %v3623 = vunpack.c.l.b16 %v3287
        %v3624 = vunpack.c.l.b16 %v3288
        %v3625 = vunpack.c.l.b16 %v3289
        %v3626 = vunpack.c.l.b16 %v3290
        %v3627 = vunpack.c.l.b16 %v3291
        %v3628 = vunpack.c.l.b16 %v3292
        %v3629 = vunpack.c.l.b16 %v3293
        %v3630 = vunpack.c.l.b16 %v3294
        %v3631 = vunpack.c.l.b16 %v3295
        %v3632 = vunpack.c.l.b16 %v3296
        %v3633 = vunpack.c.l.b16 %v3297
        %v3634 = vunpack.c.l.b16 %v3298
        %v3635 = vrot.slane %v3468, 7
        %vm3636 = vcmask 1041409
        %v3637 = vsel %vm3636, %v3635, %v3467
        %v3638 = vrot.slane %v3469, 6
        %vm3639 = vcmask 1042434
        %v3640 = vsel %vm3639, %v3638, %v3637
        %v3641 = vrot.slane %v3470, 5
        %vm3642 = vcmask 1043459
        %v3643 = vsel %vm3642, %v3641, %v3640
        %v3644 = vrot.slane %v3471, 4
        %vm3645 = vcmask 1044484
        %v3646 = vsel %vm3645, %v3644, %v3643
        %v3647 = vrot.slane %v3472, 3
        %vm3648 = vcmask 1045509
        %v3649 = vsel %vm3648, %v3647, %v3646
        %v3650 = vrot.slane %v3473, 2
        %vm3651 = vcmask 1046534
        %v3652 = vsel %vm3651, %v3650, %v3649
        %v3653 = vrot.slane %v3474, 1
        %vm3654 = vcmask 1047559
        %v3655 = vsel %vm3654, %v3653, %v3652
        %v3656 = vrot.slane %v3476, 7
        %v3657 = vsel %vm3636, %v3656, %v3475
        %v3658 = vrot.slane %v3477, 6
        %v3659 = vsel %vm3639, %v3658, %v3657
        %v3660 = vrot.slane %v3478, 5
        %v3661 = vsel %vm3642, %v3660, %v3659
        %v3662 = vrot.slane %v3479, 4
        %v3663 = vsel %vm3645, %v3662, %v3661
        %v3664 = vrot.slane %v3480, 3
        %v3665 = vsel %vm3648, %v3664, %v3663
        %v3666 = vrot.slane %v3481, 2
        %v3667 = vsel %vm3651, %v3666, %v3665
        %v3668 = vrot.slane %v3482, 1
        %v3669 = vsel %vm3654, %v3668, %v3667
        %v3670 = vrot.slane %v3484, 7
        %v3671 = vsel %vm3636, %v3670, %v3483
        %v3672 = vrot.slane %v3485, 6
        %v3673 = vsel %vm3639, %v3672, %v3671
        %v3674 = vrot.slane %v3486, 5
        %v3675 = vsel %vm3642, %v3674, %v3673
        %v3676 = vrot.slane %v3487, 4
        %v3677 = vsel %vm3645, %v3676, %v3675
        %v3678 = vrot.slane %v3488, 3
        %v3679 = vsel %vm3648, %v3678, %v3677
        %v3680 = vrot.slane %v3489, 2
        %v3681 = vsel %vm3651, %v3680, %v3679
        %v3682 = vrot.slane %v3490, 1
        %v3683 = vsel %vm3654, %v3682, %v3681
        %v3684 = vrot.slane %v3492, 7
        %v3685 = vsel %vm3636, %v3684, %v3491
        %v3686 = vrot.slane %v3493, 6
        %v3687 = vsel %vm3639, %v3686, %v3685
        %v3688 = vrot.slane %v3494, 5
        %v3689 = vsel %vm3642, %v3688, %v3687
        %v3690 = vrot.slane %v3495, 4
        %v3691 = vsel %vm3645, %v3690, %v3689
        %v3692 = vrot.slane %v3496, 3
        %v3693 = vsel %vm3648, %v3692, %v3691
        %v3694 = vrot.slane %v3497, 2
        %v3695 = vsel %vm3651, %v3694, %v3693
        %v3696 = vrot.slane %v3498, 1
        %v3697 = vsel %vm3654, %v3696, %v3695
        %v3698 = vrot.slane %v3500, 7
        %v3699 = vsel %vm3636, %v3698, %v3499
        %v3700 = vrot.slane %v3501, 6
        %v3701 = vsel %vm3639, %v3700, %v3699
        %v3702 = vrot.slane %v3502, 5
        %v3703 = vsel %vm3642, %v3702, %v3701
        %v3704 = vrot.slane %v3503, 4
        %v3705 = vsel %vm3645, %v3704, %v3703
        %v3706 = vrot.slane %v3504, 3
        %v3707 = vsel %vm3648, %v3706, %v3705
        %v3708 = vrot.slane %v3505, 2
        %v3709 = vsel %vm3651, %v3708, %v3707
        %v3710 = vrot.slane %v3506, 1
        %v3711 = vsel %vm3654, %v3710, %v3709
        %v3712 = vrot.slane %v3508, 7
        %v3713 = vsel %vm3636, %v3712, %v3507
        %v3714 = vrot.slane %v3509, 6
        %v3715 = vsel %vm3639, %v3714, %v3713
        %v3716 = vrot.slane %v3510, 5
        %v3717 = vsel %vm3642, %v3716, %v3715
        %v3718 = vrot.slane %v3511, 4
        %v3719 = vsel %vm3645, %v3718, %v3717
        %v3720 = vrot.slane %v3512, 3
        %v3721 = vsel %vm3648, %v3720, %v3719
        %v3722 = vrot.slane %v3513, 2
        %v3723 = vsel %vm3651, %v3722, %v3721
        %v3724 = vrot.slane %v3514, 1
        %v3725 = vsel %vm3654, %v3724, %v3723
        %v3726 = vrot.slane %v3516, 7
        %v3727 = vsel %vm3636, %v3726, %v3515
        %v3728 = vrot.slane %v3517, 6
        %v3729 = vsel %vm3639, %v3728, %v3727
        %v3730 = vrot.slane %v3518, 5
        %v3731 = vsel %vm3642, %v3730, %v3729
        %v3732 = vrot.slane %v3519, 4
        %v3733 = vsel %vm3645, %v3732, %v3731
        %v3734 = vrot.slane %v3520, 3
        %v3735 = vsel %vm3648, %v3734, %v3733
        %v3736 = vrot.slane %v3521, 2
        %v3737 = vsel %vm3651, %v3736, %v3735
        %v3738 = vrot.slane %v3522, 1
        %v3739 = vsel %vm3654, %v3738, %v3737
        %v3740 = vrot.slane %v3524, 7
        %v3741 = vsel %vm3636, %v3740, %v3523
        %v3742 = vrot.slane %v3525, 6
        %v3743 = vsel %vm3639, %v3742, %v3741
        %v3744 = vrot.slane %v3526, 5
        %v3745 = vsel %vm3642, %v3744, %v3743
        %v3746 = vrot.slane %v3527, 4
        %v3747 = vsel %vm3645, %v3746, %v3745
        %v3748 = vrot.slane %v3528, 3
        %v3749 = vsel %vm3648, %v3748, %v3747
        %v3750 = vrot.slane %v3529, 2
        %v3751 = vsel %vm3651, %v3750, %v3749
        %v3752 = vrot.slane %v3530, 1
        %v3753 = vsel %vm3654, %v3752, %v3751
        %v3754 = vrot.slane %v3532, 7
        %v3755 = vsel %vm3636, %v3754, %v3531
        %v3756 = vrot.slane %v3533, 6
        %v3757 = vsel %vm3639, %v3756, %v3755
        %v3758 = vrot.slane %v3534, 5
        %v3759 = vsel %vm3642, %v3758, %v3757
        %v3760 = vrot.slane %v3535, 4
        %v3761 = vsel %vm3645, %v3760, %v3759
        %v3762 = vrot.slane %v3536, 3
        %v3763 = vsel %vm3648, %v3762, %v3761
        %v3764 = vrot.slane %v3537, 2
        %v3765 = vsel %vm3651, %v3764, %v3763
        %v3766 = vrot.slane %v3538, 1
        %v3767 = vsel %vm3654, %v3766, %v3765
        %v3768 = vrot.slane %v3540, 7
        %v3769 = vsel %vm3636, %v3768, %v3539
        %v3770 = vrot.slane %v3541, 6
        %v3771 = vsel %vm3639, %v3770, %v3769
        %v3772 = vrot.slane %v3542, 5
        %v3773 = vsel %vm3642, %v3772, %v3771
        %v3774 = vrot.slane %v3543, 4
        %v3775 = vsel %vm3645, %v3774, %v3773
        %v3776 = vrot.slane %v3544, 3
        %v3777 = vsel %vm3648, %v3776, %v3775
        %v3778 = vrot.slane %v3545, 2
        %v3779 = vsel %vm3651, %v3778, %v3777
        %v3780 = vrot.slane %v3546, 1
        %v3781 = vsel %vm3654, %v3780, %v3779
        %v3782 = vrot.slane %v3548, 7
        %v3783 = vsel %vm3636, %v3782, %v3547
        %v3784 = vrot.slane %v3549, 6
        %v3785 = vsel %vm3639, %v3784, %v3783
        %v3786 = vrot.slane %v3550, 5
        %v3787 = vsel %vm3642, %v3786, %v3785
        %v3788 = vrot.slane %v3551, 4
        %v3789 = vsel %vm3645, %v3788, %v3787
        %v3790 = vrot.slane %v3552, 3
        %v3791 = vsel %vm3648, %v3790, %v3789
        %v3792 = vrot.slane %v3553, 2
        %v3793 = vsel %vm3651, %v3792, %v3791
        %v3794 = vrot.slane %v3554, 1
        %v3795 = vsel %vm3654, %v3794, %v3793
        %v3796 = vrot.slane %v3556, 7
        %v3797 = vsel %vm3636, %v3796, %v3555
        %v3798 = vrot.slane %v3557, 6
        %v3799 = vsel %vm3639, %v3798, %v3797
        %v3800 = vrot.slane %v3558, 5
        %v3801 = vsel %vm3642, %v3800, %v3799
        %v3802 = vrot.slane %v3559, 4
        %v3803 = vsel %vm3645, %v3802, %v3801
        %v3804 = vrot.slane %v3560, 3
        %v3805 = vsel %vm3648, %v3804, %v3803
        %v3806 = vrot.slane %v3561, 2
        %v3807 = vsel %vm3651, %v3806, %v3805
        %v3808 = vrot.slane %v3562, 1
        %v3809 = vsel %vm3654, %v3808, %v3807
        %v3810 = vrot.slane %v3564, 7
        %v3811 = vsel %vm3636, %v3810, %v3563
        %v3812 = vrot.slane %v3565, 6
        %v3813 = vsel %vm3639, %v3812, %v3811
        %v3814 = vrot.slane %v3566, 5
        %v3815 = vsel %vm3642, %v3814, %v3813
        %v3816 = vrot.slane %v3567, 4
        %v3817 = vsel %vm3645, %v3816, %v3815
        %v3818 = vrot.slane %v3568, 3
        %v3819 = vsel %vm3648, %v3818, %v3817
        %v3820 = vrot.slane %v3569, 2
        %v3821 = vsel %vm3651, %v3820, %v3819
        %v3822 = vrot.slane %v3570, 1
        %v3823 = vsel %vm3654, %v3822, %v3821
        %v3824 = vrot.slane %v3572, 7
        %v3825 = vsel %vm3636, %v3824, %v3571
        %v3826 = vrot.slane %v3573, 6
        %v3827 = vsel %vm3639, %v3826, %v3825
        %v3828 = vrot.slane %v3574, 5
        %v3829 = vsel %vm3642, %v3828, %v3827
        %v3830 = vrot.slane %v3575, 4
        %v3831 = vsel %vm3645, %v3830, %v3829
        %v3832 = vrot.slane %v3576, 3
        %v3833 = vsel %vm3648, %v3832, %v3831
        %v3834 = vrot.slane %v3577, 2
        %v3835 = vsel %vm3651, %v3834, %v3833
        %v3836 = vrot.slane %v3578, 1
        %v3837 = vsel %vm3654, %v3836, %v3835
        %v3838 = vrot.slane %v3580, 7
        %v3839 = vsel %vm3636, %v3838, %v3579
        %v3840 = vrot.slane %v3581, 6
        %v3841 = vsel %vm3639, %v3840, %v3839
        %v3842 = vrot.slane %v3582, 5
        %v3843 = vsel %vm3642, %v3842, %v3841
        %v3844 = vrot.slane %v3583, 4
        %v3845 = vsel %vm3645, %v3844, %v3843
        %v3846 = vrot.slane %v3584, 3
        %v3847 = vsel %vm3648, %v3846, %v3845
        %v3848 = vrot.slane %v3585, 2
        %v3849 = vsel %vm3651, %v3848, %v3847
        %v3850 = vrot.slane %v3586, 1
        %v3851 = vsel %vm3654, %v3850, %v3849
        %v3852 = vrot.slane %v3588, 7
        %v3853 = vsel %vm3636, %v3852, %v3587
        %v3854 = vrot.slane %v3589, 6
        %v3855 = vsel %vm3639, %v3854, %v3853
        %v3856 = vrot.slane %v3590, 5
        %v3857 = vsel %vm3642, %v3856, %v3855
        %v3858 = vrot.slane %v3591, 4
        %v3859 = vsel %vm3645, %v3858, %v3857
        %v3860 = vrot.slane %v3592, 3
        %v3861 = vsel %vm3648, %v3860, %v3859
        %v3862 = vrot.slane %v3593, 2
        %v3863 = vsel %vm3651, %v3862, %v3861
        %v3864 = vrot.slane %v3594, 1
        %v3865 = vsel %vm3654, %v3864, %v3863
        %v3866 = vrot.slane %v3596, 7
        %v3867 = vsel %vm3636, %v3866, %v3595
        %v3868 = vrot.slane %v3597, 6
        %v3869 = vsel %vm3639, %v3868, %v3867
        %v3870 = vrot.slane %v3598, 5
        %v3871 = vsel %vm3642, %v3870, %v3869
        %v3872 = vrot.slane %v3599, 4
        %v3873 = vsel %vm3645, %v3872, %v3871
        %v3874 = vrot.slane %v3600, 3
        %v3875 = vsel %vm3648, %v3874, %v3873
        %v3876 = vrot.slane %v3601, 2
        %v3877 = vsel %vm3651, %v3876, %v3875
        %v3878 = vrot.slane %v3602, 1
        %v3879 = vsel %vm3654, %v3878, %v3877
        %v3880 = vrot.slane %v3604, 7
        %v3881 = vsel %vm3636, %v3880, %v3603
        %v3882 = vrot.slane %v3605, 6
        %v3883 = vsel %vm3639, %v3882, %v3881
        %v3884 = vrot.slane %v3606, 5
        %v3885 = vsel %vm3642, %v3884, %v3883
        %v3886 = vrot.slane %v3607, 4
        %v3887 = vsel %vm3645, %v3886, %v3885
        %v3888 = vrot.slane %v3608, 3
        %v3889 = vsel %vm3648, %v3888, %v3887
        %v3890 = vrot.slane %v3609, 2
        %v3891 = vsel %vm3651, %v3890, %v3889
        %v3892 = vrot.slane %v3610, 1
        %v3893 = vsel %vm3654, %v3892, %v3891
        %v3894 = vrot.slane %v3612, 7
        %v3895 = vsel %vm3636, %v3894, %v3611
        %v3896 = vrot.slane %v3613, 6
        %v3897 = vsel %vm3639, %v3896, %v3895
        %v3898 = vrot.slane %v3614, 5
        %v3899 = vsel %vm3642, %v3898, %v3897
        %v3900 = vrot.slane %v3615, 4
        %v3901 = vsel %vm3645, %v3900, %v3899
        %v3902 = vrot.slane %v3616, 3
        %v3903 = vsel %vm3648, %v3902, %v3901
        %v3904 = vrot.slane %v3617, 2
        %v3905 = vsel %vm3651, %v3904, %v3903
        %v3906 = vrot.slane %v3618, 1
        %v3907 = vsel %vm3654, %v3906, %v3905
        %v3908 = vrot.slane %v3620, 7
        %v3909 = vsel %vm3636, %v3908, %v3619
        %v3910 = vrot.slane %v3621, 6
        %v3911 = vsel %vm3639, %v3910, %v3909
        %v3912 = vrot.slane %v3622, 5
        %v3913 = vsel %vm3642, %v3912, %v3911
        %v3914 = vrot.slane %v3623, 4
        %v3915 = vsel %vm3645, %v3914, %v3913
        %v3916 = vrot.slane %v3624, 3
        %v3917 = vsel %vm3648, %v3916, %v3915
        %v3918 = vrot.slane %v3625, 2
        %v3919 = vsel %vm3651, %v3918, %v3917
        %v3920 = vrot.slane %v3626, 1
        %v3921 = vsel %vm3654, %v3920, %v3919
        %v3922 = vrot.slane %v3628, 7
        %v3923 = vsel %vm3636, %v3922, %v3627
        %v3924 = vrot.slane %v3629, 6
        %v3925 = vsel %vm3639, %v3924, %v3923
        %v3926 = vrot.slane %v3630, 5
        %v3927 = vsel %vm3642, %v3926, %v3925
        %v3928 = vrot.slane %v3631, 4
        %v3929 = vsel %vm3645, %v3928, %v3927
        %v3930 = vrot.slane %v3632, 3
        %v3931 = vsel %vm3648, %v3930, %v3929
        %v3932 = vrot.slane %v3633, 2
        %v3933 = vsel %vm3651, %v3932, %v3931
        %v3934 = vrot.slane %v3634, 1
        %v3935 = vsel %vm3654, %v3934, %v3933
        %v3936 = vpack.c.b16 %v3655, %v3655
        %v3937 = vpack.c.b16 %v3669, %v3669
        %v3938 = vpack.c.b16 %v3683, %v3683
        %v3939 = vpack.c.b16 %v3697, %v3697
        %v3940 = vpack.c.b16 %v3711, %v3711
        %v3941 = vpack.c.b16 %v3725, %v3725
        %v3942 = vpack.c.b16 %v3739, %v3739
        %v3943 = vpack.c.b16 %v3753, %v3753
        %v3944 = vpack.c.b16 %v3767, %v3767
        %v3945 = vpack.c.b16 %v3781, %v3781
        %v3946 = vpack.c.b16 %v3795, %v3795
        %v3947 = vpack.c.b16 %v3809, %v3809
        %v3948 = vpack.c.b16 %v3823, %v3823
        %v3949 = vpack.c.b16 %v3837, %v3837
        %v3950 = vpack.c.b16 %v3851, %v3851
        %v3951 = vpack.c.b16 %v3865, %v3865
        %v3952 = vpack.c.b16 %v3879, %v3879
        %v3953 = vpack.c.b16 %v3893, %v3893
        %v3954 = vpack.c.b16 %v3907, %v3907
        %v3955 = vpack.c.b16 %v3921, %v3921
        %v3956 = vpack.c.b16 %v3935, %v3935
        %3978 = vst [vmem:[%s226] sm:$0xf] %v3936
        %3979 = vst [vmem:[%s226 + $0x4] sm:$0xf] %v3937
        %3980 = vst [vmem:[%s226 + $0x8] sm:$0xf] %v3938
        %3981 = vst [vmem:[%s226 + $0xc] sm:$0xf] %v3939
        %3982 = vst [vmem:[%s226 + $0x10] sm:$0xf] %v3940
        %3983 = vst [vmem:[%s226 + $0x14] sm:$0xf] %v3941
        %3984 = vst [vmem:[%s226 + $0x18] sm:$0xf] %v3942
        %3985 = vst [vmem:[%s226 + $0x1c] sm:$0xf] %v3943
        %3986 = vst [vmem:[%s226 + $0x20] sm:$0xf] %v3944
        %3987 = vst [vmem:[%s226 + $0x24] sm:$0xf] %v3945
        %3988 = vst [vmem:[%s226 + $0x28] sm:$0xf] %v3946
        %3989 = vst [vmem:[%s226 + $0x2c] sm:$0xf] %v3947
        %3990 = vst [vmem:[%s226 + $0x30] sm:$0xf] %v3948
        %3991 = vst [vmem:[%s226 + $0x34] sm:$0xf] %v3949
        %3992 = vst [vmem:[%s226 + $0x38] sm:$0xf] %v3950
        %3993 = vst [vmem:[%s226 + $0x3c] sm:$0xf] %v3951
        %3994 = vst [vmem:[%s226 + $0x40] sm:$0xf] %v3952
        %3995 = vst [vmem:[%s226 + $0x44] sm:$0xf] %v3953
        %3996 = vst [vmem:[%s226 + $0x48] sm:$0xf] %v3954
        %3997 = vst [vmem:[%s226 + $0x4c] sm:$0xf] %v3955
        %3998 = vst [vmem:[%s226 + $0x50] sm:$0xf] %v3956
        %s3999 = sand.u32 %s134, 1
        %s4000 = sand.u32 %s134, 1
        %s4001 = smul.addr %s4000, 84
        %s4002 = scalar_lea.vmem [#allocation2], %s4001
        // Predicated region
        $region41: #{lenet_mix_forward.3} parent=39 // pred_check
          %p4003 = pneg %p144
        $region42: #{lenet_mix_forward.3} parent=39 // pred_check_branch
          %4005 = sbr.rel (%p4003) target = $region44
        $region43: #{lenet_mix_forward.3} parent=39 // pred_region
          %s4006 = smul.u32 21, %s16
          %s4007 = ssub.s32 49, %s4006
          %p4008 = scmp.lt.s32.totalorder %s4007, 21
          %s4009 = scalar_select %p4008, %s4007, 21
          %s4010 = smul.u32 4, %s4009
          %p4011 = scmp.ne.s32.totalorder 0, %s4010
          %s4012 = smul.addr %s4006, 4
          %s4013 = scalar_lea.vmem %s5, %s4012
          // Predicated region
          $region45: #{lenet_mix_forward.3} parent=43 // pred_check
            %p4014 = pneg %p4011
          $region46: #{lenet_mix_forward.3} parent=43 // pred_check_branch
            %4016 = sbr.rel (%p4014) target = $region48
          $region47: #{lenet_mix_forward.3} parent=43 // pred_region
            // Predicated region
            $region49: #{lenet_mix_forward.3} parent=47 // pred_check
              _
            $region50: #{lenet_mix_forward.3} parent=47 // pred_check_branch
              %4018 = sbr.rel target = $region52
            $region51: #{lenet_mix_forward.3} parent=47 // pred_region
              // Predicated region
              $region71: #{lenet_mix_forward.3} parent=51 // pred_check
                _
              $region72: #{lenet_mix_forward.3} parent=51 // pred_check_branch
                %4109 = sbr.rel (0) target = $region74
              $region73: #{lenet_mix_forward.3} parent=51 // pred_region
                %s4111 = ssub.s32 16, 1
                %s4112 = sdiv.u32.pop %s4009, 21
                %s4113 = srem.u32.pop %s4009, 21
                // While loop
                $region75: #{lenet_mix_forward.3} parent=73 // loop_pre_header
                  _
                $region76: #{lenet_mix_forward.3} parent=73 // loop_header
                  %s4115 = sphi 0, %s4117
                  %p4116 = scmp.ge.s32.totalorder %s4115, %s4112
                  %s4120 = sphi 0, %s4167
                  %s4121 = sphi %s4002, %s4170
                  %s4122 = sphi %s4013, %s4171
                $region77: #{lenet_mix_forward.3} parent=73 // loop_header_branch
                  %4119 = sbr.rel (%p4116) target = $region81
                $region78: #{lenet_mix_forward.3} parent=73 // loop_body
                  %v4123 = vld [vmem:[%s4121] sm:%s4111]
                  %4124 = vst [vmem:[%s4122] sm:%s4111] %v4123
                  %v4125 = vld [vmem:[%s4121 + $0x4] sm:%s4111]
                  %4126 = vst [vmem:[%s4122 + $0x4] sm:%s4111] %v4125
                  %v4127 = vld [vmem:[%s4121 + $0x8] sm:%s4111]
                  %4128 = vst [vmem:[%s4122 + $0x8] sm:%s4111] %v4127
                  %v4129 = vld [vmem:[%s4121 + $0xc] sm:%s4111]
                  %4130 = vst [vmem:[%s4122 + $0xc] sm:%s4111] %v4129
                  %v4131 = vld [vmem:[%s4121 + $0x10] sm:%s4111]
                  %4132 = vst [vmem:[%s4122 + $0x10] sm:%s4111] %v4131
                  %v4133 = vld [vmem:[%s4121 + $0x14] sm:%s4111]
                  %4134 = vst [vmem:[%s4122 + $0x14] sm:%s4111] %v4133
                  %v4135 = vld [vmem:[%s4121 + $0x18] sm:%s4111]
                  %4136 = vst [vmem:[%s4122 + $0x18] sm:%s4111] %v4135
                  %v4137 = vld [vmem:[%s4121 + $0x1c] sm:%s4111]
                  %4138 = vst [vmem:[%s4122 + $0x1c] sm:%s4111] %v4137
                  %v4139 = vld [vmem:[%s4121 + $0x20] sm:%s4111]
                  %4140 = vst [vmem:[%s4122 + $0x20] sm:%s4111] %v4139
                  %v4141 = vld [vmem:[%s4121 + $0x24] sm:%s4111]
                  %4142 = vst [vmem:[%s4122 + $0x24] sm:%s4111] %v4141
                  %v4143 = vld [vmem:[%s4121 + $0x28] sm:%s4111]
                  %4144 = vst [vmem:[%s4122 + $0x28] sm:%s4111] %v4143
                  %v4145 = vld [vmem:[%s4121 + $0x2c] sm:%s4111]
                  %4146 = vst [vmem:[%s4122 + $0x2c] sm:%s4111] %v4145
                  %v4147 = vld [vmem:[%s4121 + $0x30] sm:%s4111]
                  %4148 = vst [vmem:[%s4122 + $0x30] sm:%s4111] %v4147
                  %v4149 = vld [vmem:[%s4121 + $0x34] sm:%s4111]
                  %4150 = vst [vmem:[%s4122 + $0x34] sm:%s4111] %v4149
                  %v4151 = vld [vmem:[%s4121 + $0x38] sm:%s4111]
                  %4152 = vst [vmem:[%s4122 + $0x38] sm:%s4111] %v4151
                  %v4153 = vld [vmem:[%s4121 + $0x3c] sm:%s4111]
                  %4154 = vst [vmem:[%s4122 + $0x3c] sm:%s4111] %v4153
                  %v4155 = vld [vmem:[%s4121 + $0x40] sm:%s4111]
                  %4156 = vst [vmem:[%s4122 + $0x40] sm:%s4111] %v4155
                  %v4157 = vld [vmem:[%s4121 + $0x44] sm:%s4111]
                  %4158 = vst [vmem:[%s4122 + $0x44] sm:%s4111] %v4157
                  %v4159 = vld [vmem:[%s4121 + $0x48] sm:%s4111]
                  %4160 = vst [vmem:[%s4122 + $0x48] sm:%s4111] %v4159
                  %v4161 = vld [vmem:[%s4121 + $0x4c] sm:%s4111]
                  %4162 = vst [vmem:[%s4122 + $0x4c] sm:%s4111] %v4161
                  %v4163 = vld [vmem:[%s4121 + $0x50] sm:%s4111]
                  %4164 = vst [vmem:[%s4122 + $0x50] sm:%s4111] %v4163
                  %s4165 = sadd.s32 1, %s4120
                  %p4166 = scmp.ge.s32.totalorder %s4165, %s4112
                  %s4167 = scalar_select %p4166, 0, %s4165
                  %s4168 = smul.u32 %s4167, 84
                  %s4169 = smul.u32 %s4167, 84
                  %s4170 = scalar_lea.vmem %s4002, %s4168 [#allocation2]
                  %s4171 = scalar_lea.vmem %s4013, %s4169
                $region79: #{lenet_mix_forward.3} parent=73 // loop_footer
                  %s4117 = sadd.s32 %s4115, 1
                $region80: #{lenet_mix_forward.3} parent=73 // loop_footer_branch
                  %4114 = sbr.rel target = $region76
                $region81: #{lenet_mix_forward.3} parent=73 // loop_exit
                  _
                %s4172 = sdiv.u32.pop %s4009, 21
                %s4173 = srem.u32.pop %s4009, 21
                %s4174 = smul.u32 %s4172, 21
                %s4175 = smul.u32 4, %s4174
                %s4176 = scalar_lea.vmem %s4002, %s4175 [#allocation2]
                %s4177 = smul.u32 4, %s4174
                %s4178 = scalar_lea.vmem %s4013, %s4177
                // While loop
                $region82: #{lenet_mix_forward.3} parent=73 // loop_pre_header
                  _
                $region83: #{lenet_mix_forward.3} parent=73 // loop_header
                  %s4180 = sphi 0, %s4182
                  %p4181 = scmp.ge.s32.totalorder %s4180, %s4173
                  %s4185 = sphi 0, %s4192
                  %s4186 = sphi %s4176, %s4195
                  %s4187 = sphi %s4178, %s4196
                $region84: #{lenet_mix_forward.3} parent=73 // loop_header_branch
                  %4184 = sbr.rel (%p4181) target = $region88
                $region85: #{lenet_mix_forward.3} parent=73 // loop_body
                  %v4188 = vld [vmem:[%s4186] sm:%s4111]
                  %4189 = vst [vmem:[%s4187] sm:%s4111] %v4188
                  %s4190 = sadd.s32 1, %s4185
                  %p4191 = scmp.ge.s32.totalorder %s4190, %s4173
                  %s4192 = scalar_select %p4191, 0, %s4190
                  %s4193 = smul.u32 %s4192, 4
                  %s4194 = smul.u32 %s4192, 4
                  %s4195 = scalar_lea.vmem %s4176, %s4193 [#allocation2]
                  %s4196 = scalar_lea.vmem %s4178, %s4194
                $region86: #{lenet_mix_forward.3} parent=73 // loop_footer
                  %s4182 = sadd.s32 %s4180, 1
                $region87: #{lenet_mix_forward.3} parent=73 // loop_footer_branch
                  %4179 = sbr.rel target = $region83
                $region88: #{lenet_mix_forward.3} parent=73 // loop_exit
                  _
              $region74: #{lenet_mix_forward.3} parent=51 // pred_fallthru
                _
            $region52: #{lenet_mix_forward.3} parent=47 // pred_fallthru
              _
            // Predicated region
            $region53: #{lenet_mix_forward.3} parent=47 // pred_check
              _
            $region54: #{lenet_mix_forward.3} parent=47 // pred_check_branch
              %4020 = sbr.rel (0) target = $region56
            $region55: #{lenet_mix_forward.3} parent=47 // pred_region
              %s4022 = ssub.s32 16, 1
              %s4023 = sdiv.u32.pop %s4009, 21
              %s4024 = srem.u32.pop %s4009, 21
              // While loop
              $region57: #{lenet_mix_forward.3} parent=55 // loop_pre_header
                _
              $region58: #{lenet_mix_forward.3} parent=55 // loop_header
                %s4026 = sphi 0, %s4028
                %p4027 = scmp.ge.s32.totalorder %s4026, %s4023
                %s4031 = sphi 0, %s4078
                %s4032 = sphi %s4002, %s4081
                %s4033 = sphi %s4013, %s4082
              $region59: #{lenet_mix_forward.3} parent=55 // loop_header_branch
                %4030 = sbr.rel (%p4027) target = $region63
              $region60: #{lenet_mix_forward.3} parent=55 // loop_body
                %v4034 = vld [vmem:[%s4032] sm:%s4022]
                %4035 = vst [vmem:[%s4033] sm:%s4022] %v4034
                %v4036 = vld [vmem:[%s4032 + $0x4] sm:%s4022]
                %4037 = vst [vmem:[%s4033 + $0x4] sm:%s4022] %v4036
                %v4038 = vld [vmem:[%s4032 + $0x8] sm:%s4022]
                %4039 = vst [vmem:[%s4033 + $0x8] sm:%s4022] %v4038
                %v4040 = vld [vmem:[%s4032 + $0xc] sm:%s4022]
                %4041 = vst [vmem:[%s4033 + $0xc] sm:%s4022] %v4040
                %v4042 = vld [vmem:[%s4032 + $0x10] sm:%s4022]
                %4043 = vst [vmem:[%s4033 + $0x10] sm:%s4022] %v4042
                %v4044 = vld [vmem:[%s4032 + $0x14] sm:%s4022]
                %4045 = vst [vmem:[%s4033 + $0x14] sm:%s4022] %v4044
                %v4046 = vld [vmem:[%s4032 + $0x18] sm:%s4022]
                %4047 = vst [vmem:[%s4033 + $0x18] sm:%s4022] %v4046
                %v4048 = vld [vmem:[%s4032 + $0x1c] sm:%s4022]
                %4049 = vst [vmem:[%s4033 + $0x1c] sm:%s4022] %v4048
                %v4050 = vld [vmem:[%s4032 + $0x20] sm:%s4022]
                %4051 = vst [vmem:[%s4033 + $0x20] sm:%s4022] %v4050
                %v4052 = vld [vmem:[%s4032 + $0x24] sm:%s4022]
                %4053 = vst [vmem:[%s4033 + $0x24] sm:%s4022] %v4052
                %v4054 = vld [vmem:[%s4032 + $0x28] sm:%s4022]
                %4055 = vst [vmem:[%s4033 + $0x28] sm:%s4022] %v4054
                %v4056 = vld [vmem:[%s4032 + $0x2c] sm:%s4022]
                %4057 = vst [vmem:[%s4033 + $0x2c] sm:%s4022] %v4056
                %v4058 = vld [vmem:[%s4032 + $0x30] sm:%s4022]
                %4059 = vst [vmem:[%s4033 + $0x30] sm:%s4022] %v4058
                %v4060 = vld [vmem:[%s4032 + $0x34] sm:%s4022]
                %4061 = vst [vmem:[%s4033 + $0x34] sm:%s4022] %v4060
                %v4062 = vld [vmem:[%s4032 + $0x38] sm:%s4022]
                %4063 = vst [vmem:[%s4033 + $0x38] sm:%s4022] %v4062
                %v4064 = vld [vmem:[%s4032 + $0x3c] sm:%s4022]
                %4065 = vst [vmem:[%s4033 + $0x3c] sm:%s4022] %v4064
                %v4066 = vld [vmem:[%s4032 + $0x40] sm:%s4022]
                %4067 = vst [vmem:[%s4033 + $0x40] sm:%s4022] %v4066
                %v4068 = vld [vmem:[%s4032 + $0x44] sm:%s4022]
                %4069 = vst [vmem:[%s4033 + $0x44] sm:%s4022] %v4068
                %v4070 = vld [vmem:[%s4032 + $0x48] sm:%s4022]
                %4071 = vst [vmem:[%s4033 + $0x48] sm:%s4022] %v4070
                %v4072 = vld [vmem:[%s4032 + $0x4c] sm:%s4022]
                %4073 = vst [vmem:[%s4033 + $0x4c] sm:%s4022] %v4072
                %v4074 = vld [vmem:[%s4032 + $0x50] sm:%s4022]
                %4075 = vst [vmem:[%s4033 + $0x50] sm:%s4022] %v4074
                %s4076 = sadd.s32 1, %s4031
                %p4077 = scmp.ge.s32.totalorder %s4076, %s4023
                %s4078 = scalar_select %p4077, 0, %s4076
                %s4079 = smul.u32 %s4078, 84
                %s4080 = smul.u32 %s4078, 84
                %s4081 = scalar_lea.vmem %s4002, %s4079 [#allocation2]
                %s4082 = scalar_lea.vmem %s4013, %s4080
              $region61: #{lenet_mix_forward.3} parent=55 // loop_footer
                %s4028 = sadd.s32 %s4026, 1
              $region62: #{lenet_mix_forward.3} parent=55 // loop_footer_branch
                %4025 = sbr.rel target = $region58
              $region63: #{lenet_mix_forward.3} parent=55 // loop_exit
                _
              %s4083 = sdiv.u32.pop %s4009, 21
              %s4084 = srem.u32.pop %s4009, 21
              %s4085 = smul.u32 %s4083, 21
              %s4086 = smul.u32 4, %s4085
              %s4087 = scalar_lea.vmem %s4002, %s4086 [#allocation2]
              %s4088 = smul.u32 4, %s4085
              %s4089 = scalar_lea.vmem %s4013, %s4088
              // While loop
              $region64: #{lenet_mix_forward.3} parent=55 // loop_pre_header
                _
              $region65: #{lenet_mix_forward.3} parent=55 // loop_header
                %s4091 = sphi 0, %s4093
                %p4092 = scmp.ge.s32.totalorder %s4091, %s4084
                %s4096 = sphi 0, %s4103
                %s4097 = sphi %s4087, %s4106
                %s4098 = sphi %s4089, %s4107
              $region66: #{lenet_mix_forward.3} parent=55 // loop_header_branch
                %4095 = sbr.rel (%p4092) target = $region70
              $region67: #{lenet_mix_forward.3} parent=55 // loop_body
                %v4099 = vld [vmem:[%s4097] sm:%s4022]
                %4100 = vst [vmem:[%s4098] sm:%s4022] %v4099
                %s4101 = sadd.s32 1, %s4096
                %p4102 = scmp.ge.s32.totalorder %s4101, %s4084
                %s4103 = scalar_select %p4102, 0, %s4101
                %s4104 = smul.u32 %s4103, 4
                %s4105 = smul.u32 %s4103, 4
                %s4106 = scalar_lea.vmem %s4087, %s4104 [#allocation2]
                %s4107 = scalar_lea.vmem %s4089, %s4105
              $region68: #{lenet_mix_forward.3} parent=55 // loop_footer
                %s4093 = sadd.s32 %s4091, 1
              $region69: #{lenet_mix_forward.3} parent=55 // loop_footer_branch
                %4090 = sbr.rel target = $region65
              $region70: #{lenet_mix_forward.3} parent=55 // loop_exit
                _
            $region56: #{lenet_mix_forward.3} parent=47 // pred_fallthru
              _
          $region48: #{lenet_mix_forward.3} parent=43 // pred_fallthru
            _
          %4197 = vnop
        $region44: #{lenet_mix_forward.3} parent=39 // pred_fallthru
          _
      $region40: #{lenet_mix_forward.3} parent=5 // pred_fallthru
        _
      %p4198 = scmp.le.s32.totalorder 2, %s11
      // Predicated region
      $region89: #{lenet_mix_forward.3} parent=5 // pred_check
        %p4199 = pneg %p4198
      $region90: #{lenet_mix_forward.3} parent=5 // pred_check_branch
        %4201 = sbr.rel (%p4199) target = $region92
      $region91: #{lenet_mix_forward.3} parent=5 // pred_region
        %s4202 = ssub.s32 %s11, 2
        // Predicated region
        $region93: #{lenet_mix_forward.3} parent=91 // pred_check
          %p4203 = pneg %p150
        $region94: #{lenet_mix_forward.3} parent=91 // pred_check_branch
          %4205 = sbr.rel (%p4203) target = $region96
        $region95: #{lenet_mix_forward.3} parent=91 // pred_region
          %s4206 = sand.u32 %s135, 1
          %s4207 = sand.u32 %s135, 1
          %s4208 = smul.addr %s4207, 84
          %s4209 = scalar_lea.vmem [#allocation2], %s4208
        $region96: #{lenet_mix_forward.3} parent=91 // pred_fallthru
          _
      $region92: #{lenet_mix_forward.3} parent=5 // pred_fallthru
        _
    $region6: #{lenet_mix_forward.3} parent=1 // loop_footer
      %s15 = sadd.s32 1, %s11
    $region7: #{lenet_mix_forward.3} parent=1 // loop_footer_branch
      %10 = sbr.rel target = $region3
    $region8: #{lenet_mix_forward.3} parent=1 // loop_exit
      _

// kernel: lenet_mix_forward.4
$region0: #{lenet_mix_forward.4}
  #allocation0 [shape = 'u32[]', space=smem, size = 0x4, offset = 0x4, fixed_abs, tag = 'smem constant byte address 0x4 - core index']
  #allocation1 [shape = 'u32[72,128]{1,0:T(1,128)}', space=vmem, size = 0x9000, scoped, tag = 'internal scratch']
  %s0 = inlined_call_operand.vmem [shape: bf16[200,150], index: 0, kind: input, shape index: {}]
  %s1 = inlined_call_operand.vmem [shape: bf16[150,128], index: 1, kind: input, shape index: {}]
  %s2 = inlined_call_operand.vmem [shape: f32[1,128], index: 2, kind: input, shape index: {}]
  %s3 = inlined_call_operand.vmem [shape: f32[1,128], index: 3, kind: input, shape index: {}]
  %s4 = inlined_call_operand.vmem [shape: f32[1,128], index: 4, kind: input, shape index: {}]
  %s5 = inlined_call_operand.vmem [shape: bf16[50,128], index: 5, kind: output, shape index: {}]
  %s6 = sld [smem:[#allocation0]]
  $region30: #{lenet_mix_forward.4} parent=0
    _
  %s8 = ssub.s32 1, %s6
  %s9 = scalar_select 0, %s8, %s6
  // Predicated region
  $region2: #{lenet_mix_forward.4} parent=0 // pred_check
    _
  $region3: #{lenet_mix_forward.4} parent=0 // pred_check_branch
    %11 = sbr.rel (0) target = $region5
  $region4: #{lenet_mix_forward.4} parent=0 // pred_region
    _
  $region5: #{lenet_mix_forward.4} parent=0 // pred_fallthru
    _
  // Predicated region
  $region6: #{lenet_mix_forward.4} parent=0 // pred_check
    _
  $region7: #{lenet_mix_forward.4} parent=0 // pred_check_branch
    %13 = sbr.rel (0) target = $region9
  $region8: #{lenet_mix_forward.4} parent=0 // pred_region
    _
  $region9: #{lenet_mix_forward.4} parent=0 // pred_fallthru
    _
  // Predicated region
  $region10: #{lenet_mix_forward.4} parent=0 // pred_check
    _
  $region11: #{lenet_mix_forward.4} parent=0 // pred_check_branch
    %15 = sbr.rel (0) target = $region13
  $region12: #{lenet_mix_forward.4} parent=0 // pred_region
    _
  $region13: #{lenet_mix_forward.4} parent=0 // pred_fallthru
    _
  // Predicated region
  $region14: #{lenet_mix_forward.4} parent=0 // pred_check
    _
  $region15: #{lenet_mix_forward.4} parent=0 // pred_check_branch
    %17 = sbr.rel (0) target = $region17
  $region16: #{lenet_mix_forward.4} parent=0 // pred_region
    _
  $region17: #{lenet_mix_forward.4} parent=0 // pred_fallthru
    _
  // Predicated region
  $region18: #{lenet_mix_forward.4} parent=0 // pred_check
    _
  $region19: #{lenet_mix_forward.4} parent=0 // pred_check_branch
    %19 = sbr.rel (0) target = $region21
  $region20: #{lenet_mix_forward.4} parent=0 // pred_region
    _
  $region21: #{lenet_mix_forward.4} parent=0 // pred_fallthru
    _
  %v21 = vld [vmem:[%s0] sm:$0xff]
  %v22 = vld [vmem:[%s0 + $0x8] sm:$0xff]
  %v23 = vld [vmem:[%s0 + $0x10] sm:$0xff]
  %v24 = vld [vmem:[%s0 + $0x18] sm:$0xff]
  %v25 = vld [vmem:[%s0 + $0x20] sm:$0xff]
  %v26 = vld [vmem:[%s0 + $0x28] sm:$0xff]
  %v27 = vld [vmem:[%s0 + $0x30] sm:$0xff]
  %v28 = vld [vmem:[%s0 + $0x38] sm:$0xff]
  %v29 = vld [vmem:[%s0 + $0x40] sm:$0xff]
  %v30 = vld [vmem:[%s0 + $0x48] sm:$0xff]
  %v31 = vld [vmem:[%s0 + $0x50] sm:$0xff]
  %v32 = vld [vmem:[%s0 + $0x58] sm:$0xff]
  %v33 = vld [vmem:[%s0 + $0x60] sm:$0xff]
  %v34 = vld [vmem:[%s0 + $0x68] sm:$0xff]
  %v35 = vld [vmem:[%s0 + $0x70] sm:$0xff]
  %v36 = vld [vmem:[%s0 + $0x78] sm:$0xff]
  %v37 = vld [vmem:[%s0 + $0x80] sm:$0xff]
  %v38 = vld [vmem:[%s0 + $0x88] sm:$0xff]
  %v39 = vld [vmem:[%s0 + $0x90] sm:$0xff]
  %v40 = vld [vmem:[%s0 + $0x98] sm:$0xff]
  %v41 = vld [vmem:[%s0 + $0xa0] sm:$0xff]
  %v42 = vld [vmem:[%s0 + $0xa8] sm:$0xff]
  %v43 = vld [vmem:[%s0 + $0xb0] sm:$0xff]
  %v44 = vld [vmem:[%s0 + $0xb8] sm:$0xff]
  %v45 = vld [vmem:[%s0 + $0xc0] sm:$0xff]
  %v46 = vld [vmem:[%s1] sm:$0xf]
  %v47 = vld [vmem:[%s1 + $0x4] sm:$0xf]
  %v48 = vld [vmem:[%s1 + $0x8] sm:$0xf]
  %v49 = vld [vmem:[%s1 + $0xc] sm:$0xf]
  %v50 = vld [vmem:[%s1 + $0x10] sm:$0xf]
  %v51 = vld [vmem:[%s1 + $0x14] sm:$0xf]
  %v52 = vld [vmem:[%s1 + $0x18] sm:$0xf]
  %v53 = vld [vmem:[%s1 + $0x1c] sm:$0xf]
  %v54 = vld [vmem:[%s1 + $0x20] sm:$0xf]
  %v55 = vld [vmem:[%s1 + $0x24] sm:$0xf]
  %v56 = vld [vmem:[%s1 + $0x28] sm:$0xf]
  %v57 = vld [vmem:[%s1 + $0x2c] sm:$0xf]
  %v58 = vld [vmem:[%s1 + $0x30] sm:$0xf]
  %v59 = vld [vmem:[%s1 + $0x34] sm:$0xf]
  %v60 = vld [vmem:[%s1 + $0x38] sm:$0xf]
  %v61 = vld [vmem:[%s1 + $0x3c] sm:$0xf]
  %v62 = vld [vmem:[%s1 + $0x40] sm:$0xf]
  %v63 = vld [vmem:[%s1 + $0x44] sm:$0xf]
  %v64 = vld [vmem:[%s1 + $0x48] sm:$0x7]
  %v65 = vld [vmem:[%s2] sm:$0x1]
  %v67 = vperm.slane %v65, 0
  %v94 = vunpack.c.l.b16 %v21
  %v95 = vunpack.c.h.b16 %v21
  %v96 = vunpack.c.l.b16 %v22
  %v97 = vunpack.c.h.b16 %v22
  %v98 = vunpack.c.l.b16 %v23
  %v99 = vunpack.c.h.b16 %v23
  %v100 = vunpack.c.l.b16 %v24
  %v101 = vunpack.c.h.b16 %v24
  %v102 = vunpack.c.l.b16 %v25
  %v103 = vunpack.c.h.b16 %v25
  %v104 = vunpack.c.l.b16 %v26
  %v105 = vunpack.c.h.b16 %v26
  %v106 = vunpack.c.l.b16 %v27
  %v107 = vunpack.c.h.b16 %v27
  %v108 = vunpack.c.l.b16 %v28
  %v109 = vunpack.c.h.b16 %v28
  %v110 = vunpack.c.l.b16 %v29
  %v111 = vunpack.c.h.b16 %v29
  %v112 = vunpack.c.l.b16 %v30
  %v113 = vunpack.c.h.b16 %v30
  %v114 = vunpack.c.l.b16 %v31
  %v115 = vunpack.c.h.b16 %v31
  %v116 = vunpack.c.l.b16 %v32
  %v117 = vunpack.c.h.b16 %v32
  %v118 = vunpack.c.l.b16 %v33
  %v119 = vunpack.c.h.b16 %v33
  %v120 = vunpack.c.l.b16 %v34
  %v121 = vunpack.c.h.b16 %v34
  %v122 = vunpack.c.l.b16 %v35
  %v123 = vunpack.c.h.b16 %v35
  %v124 = vunpack.c.l.b16 %v36
  %v125 = vunpack.c.h.b16 %v36
  %v126 = vunpack.c.l.b16 %v37
  %v127 = vunpack.c.h.b16 %v37
  %v128 = vunpack.c.l.b16 %v38
  %v129 = vunpack.c.h.b16 %v38
  %v130 = vunpack.c.l.b16 %v39
  %v131 = vunpack.c.h.b16 %v39
  %v132 = vunpack.c.l.b16 %v40
  %v133 = vunpack.c.h.b16 %v40
  %v134 = vunpack.c.l.b16 %v41
  %v135 = vunpack.c.h.b16 %v41
  %v136 = vunpack.c.l.b16 %v42
  %v137 = vunpack.c.h.b16 %v42
  %v138 = vunpack.c.l.b16 %v43
  %v139 = vunpack.c.h.b16 %v43
  %v140 = vunpack.c.l.b16 %v44
  %v141 = vunpack.c.h.b16 %v44
  %v142 = vunpack.c.l.b16 %v45
  %v143 = vunpack.c.h.b16 %v45
  %v144 = vpack.c.b16 %v96, %v94
  %v145 = vpack.c.b16 %v97, %v95
  %v146 = vpack.c.b16 %v100, %v98
  %v147 = vpack.c.b16 %v101, %v99
  %v148 = vpack.c.b16 %v104, %v102
  %v149 = vpack.c.b16 %v105, %v103
  %v150 = vpack.c.b16 %v108, %v106
  %v151 = vpack.c.b16 %v109, %v107
  %v152 = vpack.c.b16 %v112, %v110
  %v153 = vpack.c.b16 %v113, %v111
  %v154 = vpack.c.b16 %v116, %v114
  %v155 = vpack.c.b16 %v117, %v115
  %v156 = vpack.c.b16 %v120, %v118
  %v157 = vpack.c.b16 %v121, %v119
  %v158 = vpack.c.b16 %v124, %v122
  %v159 = vpack.c.b16 %v125, %v123
  %v160 = vpack.c.b16 %v128, %v126
  %v161 = vpack.c.b16 %v129, %v127
  %v162 = vpack.c.b16 %v132, %v130
  %v163 = vpack.c.b16 %v133, %v131
  %v164 = vpack.c.b16 %v136, %v134
  %v165 = vpack.c.b16 %v137, %v135
  %v166 = vpack.c.b16 %v140, %v138
  %v167 = vpack.c.b16 %v141, %v139
  %v168 = vpack.c.b16 %v142, %v142
  %v169 = vpack.c.b16 %v143, %v143
  %v202 = vunpack.c.l.b16 %v46
  %v203 = vunpack.c.l.b16 %v47
  %v204 = vunpack.c.l.b16 %v48
  %v205 = vunpack.c.l.b16 %v49
  %v206 = vunpack.c.l.b16 %v50
  %v207 = vunpack.c.l.b16 %v51
  %v208 = vunpack.c.l.b16 %v52
  %v209 = vunpack.c.l.b16 %v53
  %v210 = vunpack.c.l.b16 %v54
  %v211 = vunpack.c.l.b16 %v55
  %v212 = vunpack.c.l.b16 %v56
  %v213 = vunpack.c.l.b16 %v57
  %v214 = vunpack.c.l.b16 %v58
  %v215 = vunpack.c.l.b16 %v59
  %v216 = vunpack.c.l.b16 %v60
  %v217 = vunpack.c.l.b16 %v61
  %v218 = vunpack.c.l.b16 %v62
  %v219 = vunpack.c.l.b16 %v63
  %v220 = vunpack.c.l.b16 %v64
  %v221 = vpack.c.b16 %v203, %v202
  %v222 = vpack.c.b16 %v205, %v204
  %v223 = vpack.c.b16 %v207, %v206
  %v224 = vpack.c.b16 %v209, %v208
  %v225 = vpack.c.b16 %v211, %v210
  %v226 = vpack.c.b16 %v213, %v212
  %v227 = vpack.c.b16 %v215, %v214
  %v228 = vpack.c.b16 %v217, %v216
  %v229 = vpack.c.b16 %v219, %v218
  %v230 = vpack.c.b16 %v220, %v220
  %vm240 = vcmask 179200
  %v242 = vsel %vm240, %v145, 0
  %v245 = vsel %vm240, %v147, 0
  %v248 = vsel %vm240, %v149, 0
  %v251 = vsel %vm240, %v151, 0
  %v254 = vsel %vm240, %v153, 0
  %v257 = vsel %vm240, %v155, 0
  %v260 = vsel %vm240, %v157, 0
  %v263 = vsel %vm240, %v159, 0
  %v266 = vsel %vm240, %v161, 0
  %v269 = vsel %vm240, %v163, 0
  %v272 = vsel %vm240, %v165, 0
  %v275 = vsel %vm240, %v167, 0
  %v278 = vsel %vm240, %v169, 0
  %vm280 = vcmask 1042432
  %v282 = vsel %vm280, %v230, 0
  %284 = vmatpush.bf16.msra.mxu0 %v228
  %285 = vmatpush.bf16.msra.mxu0 %v227
  %286 = vmatpush.bf16.msra.mxu0 %v226
  %287 = vmatpush.bf16.msra.mxu0 %v225
  %288 = vmatpush.bf16.msra.mxu0 %v224
  %289 = vmatpush.bf16.msra.mxu0 %v223
  %290 = vmatpush.bf16.msra.mxu0 %v222
  %291 = vmatpush.bf16.msra.mxu0 %v221
  %292 = vmatmul.bf16.gmra.mxu0 %v144
  %v293 = vpop.f32.mrf.mxu0
  %v294 = vadd.f32 %v67, %v293
  %v295 = vpop.f32.mrf.mxu0
  %v296 = vadd.f32 %v67, %v295
  %297 = vmatmul.bf16.gmra.mxu0 %v146
  %v298 = vpop.f32.mrf.mxu0
  %v299 = vadd.f32 %v67, %v298
  %v300 = vpop.f32.mrf.mxu0
  %v301 = vadd.f32 %v67, %v300
  %302 = vmatmul.bf16.gmra.mxu0 %v148
  %v303 = vpop.f32.mrf.mxu0
  %v304 = vadd.f32 %v67, %v303
  %v305 = vpop.f32.mrf.mxu0
  %v306 = vadd.f32 %v67, %v305
  %307 = vmatmul.bf16.gmra.mxu0 %v150
  %v308 = vpop.f32.mrf.mxu0
  %v309 = vadd.f32 %v67, %v308
  %v310 = vpop.f32.mrf.mxu0
  %v311 = vadd.f32 %v67, %v310
  %312 = vmatmul.bf16.gmra.mxu0 %v152
  %v313 = vpop.f32.mrf.mxu0
  %v314 = vadd.f32 %v67, %v313
  %v315 = vpop.f32.mrf.mxu0
  %v316 = vadd.f32 %v67, %v315
  %317 = vmatmul.bf16.gmra.mxu0 %v154
  %v318 = vpop.f32.mrf.mxu0
  %v319 = vadd.f32 %v67, %v318
  %v320 = vpop.f32.mrf.mxu0
  %v321 = vadd.f32 %v67, %v320
  %322 = vmatmul.bf16.gmra.mxu0 %v156
  %v323 = vpop.f32.mrf.mxu0
  %v324 = vadd.f32 %v67, %v323
  %v325 = vpop.f32.mrf.mxu0
  %v326 = vadd.f32 %v67, %v325
  %327 = vmatmul.bf16.gmra.mxu0 %v158
  %v328 = vpop.f32.mrf.mxu0
  %v329 = vadd.f32 %v67, %v328
  %v330 = vpop.f32.mrf.mxu0
  %v331 = vadd.f32 %v67, %v330
  %332 = vmatmul.bf16.gmra.mxu0 %v160
  %v333 = vpop.f32.mrf.mxu0
  %v334 = vadd.f32 %v67, %v333
  %v335 = vpop.f32.mrf.mxu0
  %v336 = vadd.f32 %v67, %v335
  %337 = vmatmul.bf16.gmra.mxu0 %v162
  %v338 = vpop.f32.mrf.mxu0
  %v339 = vadd.f32 %v67, %v338
  %v340 = vpop.f32.mrf.mxu0
  %v341 = vadd.f32 %v67, %v340
  %342 = vmatmul.bf16.gmra.mxu0 %v164
  %v343 = vpop.f32.mrf.mxu0
  %v344 = vadd.f32 %v67, %v343
  %v345 = vpop.f32.mrf.mxu0
  %v346 = vadd.f32 %v67, %v345
  %347 = vmatmul.bf16.gmra.mxu0 %v166
  %v348 = vpop.f32.mrf.mxu0
  %v349 = vadd.f32 %v67, %v348
  %v350 = vpop.f32.mrf.mxu0
  %v351 = vadd.f32 %v67, %v350
  %352 = vmatmul.bf16.gmra.mxu0 %v168
  %v353 = vpop.f32.mrf.mxu0
  %v354 = vadd.f32 %v67, %v353
  %v355 = vpop.f32.mrf.mxu0
  %356 = vdwg.mxu0
  %357 = vmatpush.bf16.msra.mxu0 0
  %358 = vmatpush.bf16.msra.mxu0 0
  %359 = vmatpush.bf16.msra.mxu0 0
  %360 = vmatpush.bf16.msra.mxu0 0
  %361 = vmatpush.bf16.msra.mxu0 0
  %362 = vmatpush.bf16.msra.mxu0 0
  %363 = vmatpush.bf16.msra.mxu0 %v282
  %364 = vmatpush.bf16.msra.mxu0 %v229
  %365 = vmatmul.bf16.gmra.mxu0 %v242
  %v366 = vpop.f32.mrf.mxu0
  %v367 = vadd.f32 %v294, %v366
  %v368 = vpop.f32.mrf.mxu0
  %v369 = vadd.f32 %v296, %v368
  %370 = vmatmul.bf16.gmra.mxu0 %v245
  %v371 = vpop.f32.mrf.mxu0
  %v372 = vadd.f32 %v299, %v371
  %v373 = vpop.f32.mrf.mxu0
  %v374 = vadd.f32 %v301, %v373
  %375 = vmatmul.bf16.gmra.mxu0 %v248
  %v376 = vpop.f32.mrf.mxu0
  %v377 = vadd.f32 %v304, %v376
  %v378 = vpop.f32.mrf.mxu0
  %v379 = vadd.f32 %v306, %v378
  %380 = vmatmul.bf16.gmra.mxu0 %v251
  %v381 = vpop.f32.mrf.mxu0
  %v382 = vadd.f32 %v309, %v381
  %v383 = vpop.f32.mrf.mxu0
  %v384 = vadd.f32 %v311, %v383
  %385 = vmatmul.bf16.gmra.mxu0 %v254
  %v386 = vpop.f32.mrf.mxu0
  %v387 = vadd.f32 %v314, %v386
  %v388 = vpop.f32.mrf.mxu0
  %v389 = vadd.f32 %v316, %v388
  %390 = vmatmul.bf16.gmra.mxu0 %v257
  %v391 = vpop.f32.mrf.mxu0
  %v392 = vadd.f32 %v319, %v391
  %v393 = vpop.f32.mrf.mxu0
  %v394 = vadd.f32 %v321, %v393
  %395 = vmatmul.bf16.gmra.mxu0 %v260
  %v396 = vpop.f32.mrf.mxu0
  %v397 = vadd.f32 %v324, %v396
  %v398 = vpop.f32.mrf.mxu0
  %v399 = vadd.f32 %v326, %v398
  %400 = vmatmul.bf16.gmra.mxu0 %v263
  %v401 = vpop.f32.mrf.mxu0
  %v402 = vadd.f32 %v329, %v401
  %v403 = vpop.f32.mrf.mxu0
  %v404 = vadd.f32 %v331, %v403
  %405 = vmatmul.bf16.gmra.mxu0 %v266
  %v406 = vpop.f32.mrf.mxu0
  %v407 = vadd.f32 %v334, %v406
  %v408 = vpop.f32.mrf.mxu0
  %v409 = vadd.f32 %v336, %v408
  %410 = vmatmul.bf16.gmra.mxu0 %v269
  %v411 = vpop.f32.mrf.mxu0
  %v412 = vadd.f32 %v339, %v411
  %v413 = vpop.f32.mrf.mxu0
  %v414 = vadd.f32 %v341, %v413
  %415 = vmatmul.bf16.gmra.mxu0 %v272
  %v416 = vpop.f32.mrf.mxu0
  %v417 = vadd.f32 %v344, %v416
  %v418 = vpop.f32.mrf.mxu0
  %v419 = vadd.f32 %v346, %v418
  %420 = vmatmul.bf16.gmra.mxu0 %v275
  %v421 = vpop.f32.mrf.mxu0
  %v422 = vadd.f32 %v349, %v421
  %v423 = vpop.f32.mrf.mxu0
  %v424 = vadd.f32 %v351, %v423
  %425 = vmatmul.bf16.gmra.mxu0 %v278
  %v426 = vpop.f32.mrf.mxu0
  %v427 = vadd.f32 %v354, %v426
  %v428 = vpop.f32.mrf.mxu0
  %429 = vdwg.mxu0
  %vm430 = vcmp.gt.f32.partialorder %v367, 0.0
  %vm431 = vcmp.gt.f32.partialorder %v369, 0.0
  %vm432 = vcmp.gt.f32.partialorder %v372, 0.0
  %vm433 = vcmp.gt.f32.partialorder %v374, 0.0
  %vm434 = vcmp.gt.f32.partialorder %v377, 0.0
  %vm435 = vcmp.gt.f32.partialorder %v379, 0.0
  %vm436 = vcmp.gt.f32.partialorder %v382, 0.0
  %vm437 = vcmp.gt.f32.partialorder %v384, 0.0
  %vm438 = vcmp.gt.f32.partialorder %v387, 0.0
  %vm439 = vcmp.gt.f32.partialorder %v389, 0.0
  %vm440 = vcmp.gt.f32.partialorder %v392, 0.0
  %vm441 = vcmp.gt.f32.partialorder %v394, 0.0
  %vm442 = vcmp.gt.f32.partialorder %v397, 0.0
  %vm443 = vcmp.gt.f32.partialorder %v399, 0.0
  %vm444 = vcmp.gt.f32.partialorder %v402, 0.0
  %vm445 = vcmp.gt.f32.partialorder %v404, 0.0
  %vm446 = vcmp.gt.f32.partialorder %v407, 0.0
  %vm447 = vcmp.gt.f32.partialorder %v409, 0.0
  %vm448 = vcmp.gt.f32.partialorder %v412, 0.0
  %vm449 = vcmp.gt.f32.partialorder %v414, 0.0
  %vm450 = vcmp.gt.f32.partialorder %v417, 0.0
  %vm451 = vcmp.gt.f32.partialorder %v419, 0.0
  %vm452 = vcmp.gt.f32.partialorder %v422, 0.0
  %vm453 = vcmp.gt.f32.partialorder %v424, 0.0
  %vm454 = vcmp.gt.f32.partialorder %v427, 0.0
  %v455 = vmul.f32 %v367, 0.01
  %v456 = vmul.f32 %v369, 0.01
  %v457 = vmul.f32 %v372, 0.01
  %v458 = vmul.f32 %v374, 0.01
  %v459 = vmul.f32 %v377, 0.01
  %v460 = vmul.f32 %v379, 0.01
  %v461 = vmul.f32 %v382, 0.01
  %v462 = vmul.f32 %v384, 0.01
  %v463 = vmul.f32 %v387, 0.01
  %v464 = vmul.f32 %v389, 0.01
  %v465 = vmul.f32 %v392, 0.01
  %v466 = vmul.f32 %v394, 0.01
  %v467 = vmul.f32 %v397, 0.01
  %v468 = vmul.f32 %v399, 0.01
  %v469 = vmul.f32 %v402, 0.01
  %v470 = vmul.f32 %v404, 0.01
  %v471 = vmul.f32 %v407, 0.01
  %v472 = vmul.f32 %v409, 0.01
  %v473 = vmul.f32 %v412, 0.01
  %v474 = vmul.f32 %v414, 0.01
  %v475 = vmul.f32 %v417, 0.01
  %v476 = vmul.f32 %v419, 0.01
  %v477 = vmul.f32 %v422, 0.01
  %v478 = vmul.f32 %v424, 0.01
  %v479 = vmul.f32 %v427, 0.01
  %v480 = vsel %vm430, %v367, %v455
  %v481 = vsel %vm431, %v369, %v456
  %v482 = vsel %vm432, %v372, %v457
  %v483 = vsel %vm433, %v374, %v458
  %v484 = vsel %vm434, %v377, %v459
  %v485 = vsel %vm435, %v379, %v460
  %v486 = vsel %vm436, %v382, %v461
  %v487 = vsel %vm437, %v384, %v462
  %v488 = vsel %vm438, %v387, %v463
  %v489 = vsel %vm439, %v389, %v464
  %v490 = vsel %vm440, %v392, %v465
  %v491 = vsel %vm441, %v394, %v466
  %v492 = vsel %vm442, %v397, %v467
  %v493 = vsel %vm443, %v399, %v468
  %v494 = vsel %vm444, %v402, %v469
  %v495 = vsel %vm445, %v404, %v470
  %v496 = vsel %vm446, %v407, %v471
  %v497 = vsel %vm447, %v409, %v472
  %v498 = vsel %vm448, %v412, %v473
  %v499 = vsel %vm449, %v414, %v474
  %v500 = vsel %vm450, %v417, %v475
  %v501 = vsel %vm451, %v419, %v476
  %v502 = vsel %vm452, %v422, %v477
  %v503 = vsel %vm453, %v424, %v478
  %v504 = vsel %vm454, %v427, %v479
  %v505 = vld [vmem:[%s3] sm:$0x1]
  %v507 = vperm.slane %v505, 0
  %v509 = vmul.f32 %v480, %v507
  %v510 = vmul.f32 %v481, %v507
  %v511 = vmul.f32 %v482, %v507
  %v512 = vmul.f32 %v483, %v507
  %v513 = vmul.f32 %v484, %v507
  %v514 = vmul.f32 %v485, %v507
  %v515 = vmul.f32 %v486, %v507
  %v516 = vmul.f32 %v487, %v507
  %v517 = vmul.f32 %v488, %v507
  %v518 = vmul.f32 %v489, %v507
  %v519 = vmul.f32 %v490, %v507
  %v520 = vmul.f32 %v491, %v507
  %v521 = vmul.f32 %v492, %v507
  %v522 = vmul.f32 %v493, %v507
  %v523 = vmul.f32 %v494, %v507
  %v524 = vmul.f32 %v495, %v507
  %v525 = vmul.f32 %v496, %v507
  %v526 = vmul.f32 %v497, %v507
  %v527 = vmul.f32 %v498, %v507
  %v528 = vmul.f32 %v499, %v507
  %v529 = vmul.f32 %v500, %v507
  %v530 = vmul.f32 %v501, %v507
  %v531 = vmul.f32 %v502, %v507
  %v532 = vmul.f32 %v503, %v507
  %v533 = vmul.f32 %v504, %v507
  %v534 = vld [vmem:[%s4] sm:$0x1]
  %v536 = vperm.slane %v534, 0
  %v538 = vadd.f32 %v509, %v536
  %v539 = vadd.f32 %v510, %v536
  %v540 = vadd.f32 %v511, %v536
  %v541 = vadd.f32 %v512, %v536
  %v542 = vadd.f32 %v513, %v536
  %v543 = vadd.f32 %v514, %v536
  %v544 = vadd.f32 %v515, %v536
  %v545 = vadd.f32 %v516, %v536
  %v546 = vadd.f32 %v517, %v536
  %v547 = vadd.f32 %v518, %v536
  %v548 = vadd.f32 %v519, %v536
  %v549 = vadd.f32 %v520, %v536
  %v550 = vadd.f32 %v521, %v536
  %v551 = vadd.f32 %v522, %v536
  %v552 = vadd.f32 %v523, %v536
  %v553 = vadd.f32 %v524, %v536
  %v554 = vadd.f32 %v525, %v536
  %v555 = vadd.f32 %v526, %v536
  %v556 = vadd.f32 %v527, %v536
  %v557 = vadd.f32 %v528, %v536
  %v558 = vadd.f32 %v529, %v536
  %v559 = vadd.f32 %v530, %v536
  %v560 = vadd.f32 %v531, %v536
  %v561 = vadd.f32 %v532, %v536
  %v562 = vadd.f32 %v533, %v536
  %v588 = vrot.slane %v538, 2
  %v589 = vrot.slane %v538, 4
  %v590 = vrot.slane %v538, 6
  %v591 = vrot.slane %v539, 2
  %v592 = vrot.slane %v539, 4
  %v593 = vrot.slane %v539, 6
  %v594 = vrot.slane %v540, 2
  %v595 = vrot.slane %v540, 4
  %v596 = vrot.slane %v540, 6
  %v597 = vrot.slane %v541, 2
  %v598 = vrot.slane %v541, 4
  %v599 = vrot.slane %v541, 6
  %v600 = vrot.slane %v542, 2
  %v601 = vrot.slane %v542, 4
  %v602 = vrot.slane %v542, 6
  %v603 = vrot.slane %v543, 2
  %v604 = vrot.slane %v543, 4
  %v605 = vrot.slane %v543, 6
  %v606 = vrot.slane %v544, 2
  %v607 = vrot.slane %v544, 4
  %v608 = vrot.slane %v544, 6
  %v609 = vrot.slane %v545, 2
  %v610 = vrot.slane %v545, 4
  %v611 = vrot.slane %v545, 6
  %v612 = vrot.slane %v546, 2
  %v613 = vrot.slane %v546, 4
  %v614 = vrot.slane %v546, 6
  %v615 = vrot.slane %v547, 2
  %v616 = vrot.slane %v547, 4
  %v617 = vrot.slane %v547, 6
  %v618 = vrot.slane %v548, 2
  %v619 = vrot.slane %v548, 4
  %v620 = vrot.slane %v548, 6
  %v621 = vrot.slane %v549, 2
  %v622 = vrot.slane %v549, 4
  %v623 = vrot.slane %v549, 6
  %v624 = vrot.slane %v550, 2
  %v625 = vrot.slane %v550, 4
  %v626 = vrot.slane %v550, 6
  %v627 = vrot.slane %v551, 2
  %v628 = vrot.slane %v551, 4
  %v629 = vrot.slane %v551, 6
  %v630 = vrot.slane %v552, 2
  %v631 = vrot.slane %v552, 4
  %v632 = vrot.slane %v552, 6
  %v633 = vrot.slane %v553, 2
  %v634 = vrot.slane %v553, 4
  %v635 = vrot.slane %v553, 6
  %v636 = vrot.slane %v554, 2
  %v637 = vrot.slane %v554, 4
  %v638 = vrot.slane %v554, 6
  %v639 = vrot.slane %v555, 2
  %v640 = vrot.slane %v555, 4
  %v641 = vrot.slane %v555, 6
  %v642 = vrot.slane %v556, 2
  %v643 = vrot.slane %v556, 4
  %v644 = vrot.slane %v556, 6
  %v645 = vrot.slane %v557, 2
  %v646 = vrot.slane %v557, 4
  %v647 = vrot.slane %v557, 6
  %v648 = vrot.slane %v558, 2
  %v649 = vrot.slane %v558, 4
  %v650 = vrot.slane %v558, 6
  %v651 = vrot.slane %v559, 2
  %v652 = vrot.slane %v559, 4
  %v653 = vrot.slane %v559, 6
  %v654 = vrot.slane %v560, 2
  %v655 = vrot.slane %v560, 4
  %v656 = vrot.slane %v560, 6
  %v657 = vrot.slane %v561, 2
  %v658 = vrot.slane %v561, 4
  %v659 = vrot.slane %v561, 6
  %v660 = vrot.slane %v562, 2
  %v661 = vrot.slane %v562, 4
  %v662 = vrot.slane %v562, 6
  %v738 = vadd.f32 %v538, %v591
  %v739 = vadd.f32 %v588, %v592
  %v740 = vadd.f32 %v589, %v593
  %v741 = vadd.f32 %v590, %v540
  %v742 = vadd.f32 %v539, %v594
  %v743 = vadd.f32 %v595, %v599
  %v744 = vadd.f32 %v596, %v542
  %v745 = vadd.f32 %v541, %v600
  %v746 = vadd.f32 %v597, %v601
  %v747 = vadd.f32 %v598, %v602
  %v748 = vadd.f32 %v543, %v606
  %v749 = vadd.f32 %v603, %v607
  %v750 = vadd.f32 %v604, %v608
  %v751 = vadd.f32 %v605, %v545
  %v752 = vadd.f32 %v544, %v609
  %v753 = vadd.f32 %v610, %v614
  %v754 = vadd.f32 %v611, %v547
  %v755 = vadd.f32 %v546, %v615
  %v756 = vadd.f32 %v612, %v616
  %v757 = vadd.f32 %v613, %v617
  %v758 = vadd.f32 %v548, %v621
  %v759 = vadd.f32 %v618, %v622
  %v760 = vadd.f32 %v619, %v623
  %v761 = vadd.f32 %v620, %v550
  %v762 = vadd.f32 %v549, %v624
  %v763 = vadd.f32 %v625, %v629
  %v764 = vadd.f32 %v626, %v552
  %v765 = vadd.f32 %v551, %v630
  %v766 = vadd.f32 %v627, %v631
  %v767 = vadd.f32 %v628, %v632
  %v768 = vadd.f32 %v553, %v636
  %v769 = vadd.f32 %v633, %v637
  %v770 = vadd.f32 %v634, %v638
  %v771 = vadd.f32 %v635, %v555
  %v772 = vadd.f32 %v554, %v639
  %v773 = vadd.f32 %v640, %v644
  %v774 = vadd.f32 %v641, %v557
  %v775 = vadd.f32 %v556, %v645
  %v776 = vadd.f32 %v642, %v646
  %v777 = vadd.f32 %v643, %v647
  %v778 = vadd.f32 %v558, %v651
  %v779 = vadd.f32 %v648, %v652
  %v780 = vadd.f32 %v649, %v653
  %v781 = vadd.f32 %v650, %v560
  %v782 = vadd.f32 %v559, %v654
  %v783 = vadd.f32 %v655, %v659
  %v784 = vadd.f32 %v656, %v562
  %v785 = vadd.f32 %v561, %v660
  %v786 = vadd.f32 %v657, %v661
  %v787 = vadd.f32 %v658, %v662
  %v838 = vrot.slane %v738, 7
  %v839 = vrot.slane %v838, 2
  %v840 = vrot.slane %v739, 7
  %v841 = vrot.slane %v840, 2
  %v842 = vrot.slane %v740, 7
  %v843 = vrot.slane %v842, 2
  %v844 = vrot.slane %v741, 7
  %v845 = vrot.slane %v844, 2
  %v846 = vrot.slane %v742, 7
  %v847 = vrot.slane %v846, 2
  %v848 = vrot.slane %v743, 7
  %v849 = vrot.slane %v848, 2
  %v850 = vrot.slane %v744, 7
  %v851 = vrot.slane %v850, 2
  %v852 = vrot.slane %v745, 7
  %v853 = vrot.slane %v852, 2
  %v854 = vrot.slane %v746, 7
  %v855 = vrot.slane %v854, 2
  %v856 = vrot.slane %v747, 7
  %v857 = vrot.slane %v856, 2
  %v858 = vrot.slane %v748, 7
  %v859 = vrot.slane %v858, 2
  %v860 = vrot.slane %v749, 7
  %v861 = vrot.slane %v860, 2
  %v862 = vrot.slane %v750, 7
  %v863 = vrot.slane %v862, 2
  %v864 = vrot.slane %v751, 7
  %v865 = vrot.slane %v864, 2
  %v866 = vrot.slane %v752, 7
  %v867 = vrot.slane %v866, 2
  %v868 = vrot.slane %v753, 7
  %v869 = vrot.slane %v868, 2
  %v870 = vrot.slane %v754, 7
  %v871 = vrot.slane %v870, 2
  %v872 = vrot.slane %v755, 7
  %v873 = vrot.slane %v872, 2
  %v874 = vrot.slane %v756, 7
  %v875 = vrot.slane %v874, 2
  %v876 = vrot.slane %v757, 7
  %v877 = vrot.slane %v876, 2
  %v878 = vrot.slane %v758, 7
  %v879 = vrot.slane %v878, 2
  %v880 = vrot.slane %v759, 7
  %v881 = vrot.slane %v880, 2
  %v882 = vrot.slane %v760, 7
  %v883 = vrot.slane %v882, 2
  %v884 = vrot.slane %v761, 7
  %v885 = vrot.slane %v884, 2
  %v886 = vrot.slane %v762, 7
  %v887 = vrot.slane %v886, 2
  %v888 = vrot.slane %v763, 7
  %v889 = vrot.slane %v888, 2
  %v890 = vrot.slane %v764, 7
  %v891 = vrot.slane %v890, 2
  %v892 = vrot.slane %v765, 7
  %v893 = vrot.slane %v892, 2
  %v894 = vrot.slane %v766, 7
  %v895 = vrot.slane %v894, 2
  %v896 = vrot.slane %v767, 7
  %v897 = vrot.slane %v896, 2
  %v898 = vrot.slane %v768, 7
  %v899 = vrot.slane %v898, 2
  %v900 = vrot.slane %v769, 7
  %v901 = vrot.slane %v900, 2
  %v902 = vrot.slane %v770, 7
  %v903 = vrot.slane %v902, 2
  %v904 = vrot.slane %v771, 7
  %v905 = vrot.slane %v904, 2
  %v906 = vrot.slane %v772, 7
  %v907 = vrot.slane %v906, 2
  %v908 = vrot.slane %v773, 7
  %v909 = vrot.slane %v908, 2
  %v910 = vrot.slane %v774, 7
  %v911 = vrot.slane %v910, 2
  %v912 = vrot.slane %v775, 7
  %v913 = vrot.slane %v912, 2
  %v914 = vrot.slane %v776, 7
  %v915 = vrot.slane %v914, 2
  %v916 = vrot.slane %v777, 7
  %v917 = vrot.slane %v916, 2
  %v918 = vrot.slane %v778, 7
  %v919 = vrot.slane %v918, 2
  %v920 = vrot.slane %v779, 7
  %v921 = vrot.slane %v920, 2
  %v922 = vrot.slane %v780, 7
  %v923 = vrot.slane %v922, 2
  %v924 = vrot.slane %v781, 7
  %v925 = vrot.slane %v924, 2
  %v926 = vrot.slane %v782, 7
  %v927 = vrot.slane %v926, 2
  %v928 = vrot.slane %v783, 7
  %v929 = vrot.slane %v928, 2
  %v930 = vrot.slane %v784, 7
  %v931 = vrot.slane %v930, 2
  %v932 = vrot.slane %v785, 7
  %v933 = vrot.slane %v932, 2
  %v934 = vrot.slane %v786, 7
  %v935 = vrot.slane %v934, 2
  %v936 = vrot.slane %v787, 7
  %v937 = vrot.slane %v936, 2
  %v988 = vadd.f32 %v738, %v839
  %v989 = vadd.f32 %v739, %v841
  %v990 = vadd.f32 %v740, %v843
  %v991 = vadd.f32 %v741, %v845
  %v992 = vadd.f32 %v742, %v847
  %v993 = vadd.f32 %v743, %v849
  %v994 = vadd.f32 %v744, %v851
  %v995 = vadd.f32 %v745, %v853
  %v996 = vadd.f32 %v746, %v855
  %v997 = vadd.f32 %v747, %v857
  %v998 = vadd.f32 %v748, %v859
  %v999 = vadd.f32 %v749, %v861
  %v1000 = vadd.f32 %v750, %v863
  %v1001 = vadd.f32 %v751, %v865
  %v1002 = vadd.f32 %v752, %v867
  %v1003 = vadd.f32 %v753, %v869
  %v1004 = vadd.f32 %v754, %v871
  %v1005 = vadd.f32 %v755, %v873
  %v1006 = vadd.f32 %v756, %v875
  %v1007 = vadd.f32 %v757, %v877
  %v1008 = vadd.f32 %v758, %v879
  %v1009 = vadd.f32 %v759, %v881
  %v1010 = vadd.f32 %v760, %v883
  %v1011 = vadd.f32 %v761, %v885
  %v1012 = vadd.f32 %v762, %v887
  %v1013 = vadd.f32 %v763, %v889
  %v1014 = vadd.f32 %v764, %v891
  %v1015 = vadd.f32 %v765, %v893
  %v1016 = vadd.f32 %v766, %v895
  %v1017 = vadd.f32 %v767, %v897
  %v1018 = vadd.f32 %v768, %v899
  %v1019 = vadd.f32 %v769, %v901
  %v1020 = vadd.f32 %v770, %v903
  %v1021 = vadd.f32 %v771, %v905
  %v1022 = vadd.f32 %v772, %v907
  %v1023 = vadd.f32 %v773, %v909
  %v1024 = vadd.f32 %v774, %v911
  %v1025 = vadd.f32 %v775, %v913
  %v1026 = vadd.f32 %v776, %v915
  %v1027 = vadd.f32 %v777, %v917
  %v1028 = vadd.f32 %v778, %v919
  %v1029 = vadd.f32 %v779, %v921
  %v1030 = vadd.f32 %v780, %v923
  %v1031 = vadd.f32 %v781, %v925
  %v1032 = vadd.f32 %v782, %v927
  %v1033 = vadd.f32 %v783, %v929
  %v1034 = vadd.f32 %v784, %v931
  %v1035 = vadd.f32 %v785, %v933
  %v1036 = vadd.f32 %v786, %v935
  %v1037 = vadd.f32 %v787, %v937
  %v1038 = vmul.f32 %v988, 0.25
  %v1039 = vmul.f32 %v989, 0.25
  %v1040 = vmul.f32 %v990, 0.25
  %v1041 = vmul.f32 %v991, 0.25
  %v1042 = vmul.f32 %v992, 0.25
  %v1043 = vmul.f32 %v993, 0.25
  %v1044 = vmul.f32 %v994, 0.25
  %v1045 = vmul.f32 %v995, 0.25
  %v1046 = vmul.f32 %v996, 0.25
  %v1047 = vmul.f32 %v997, 0.25
  %v1048 = vmul.f32 %v998, 0.25
  %v1049 = vmul.f32 %v999, 0.25
  %v1050 = vmul.f32 %v1000, 0.25
  %v1051 = vmul.f32 %v1001, 0.25
  %v1052 = vmul.f32 %v1002, 0.25
  %v1053 = vmul.f32 %v1003, 0.25
  %v1054 = vmul.f32 %v1004, 0.25
  %v1055 = vmul.f32 %v1005, 0.25
  %v1056 = vmul.f32 %v1006, 0.25
  %v1057 = vmul.f32 %v1007, 0.25
  %v1058 = vmul.f32 %v1008, 0.25
  %v1059 = vmul.f32 %v1009, 0.25
  %v1060 = vmul.f32 %v1010, 0.25
  %v1061 = vmul.f32 %v1011, 0.25
  %v1062 = vmul.f32 %v1012, 0.25
  %v1063 = vmul.f32 %v1013, 0.25
  %v1064 = vmul.f32 %v1014, 0.25
  %v1065 = vmul.f32 %v1015, 0.25
  %v1066 = vmul.f32 %v1016, 0.25
  %v1067 = vmul.f32 %v1017, 0.25
  %v1068 = vmul.f32 %v1018, 0.25
  %v1069 = vmul.f32 %v1019, 0.25
  %v1070 = vmul.f32 %v1020, 0.25
  %v1071 = vmul.f32 %v1021, 0.25
  %v1072 = vmul.f32 %v1022, 0.25
  %v1073 = vmul.f32 %v1023, 0.25
  %v1074 = vmul.f32 %v1024, 0.25
  %v1075 = vmul.f32 %v1025, 0.25
  %v1076 = vmul.f32 %v1026, 0.25
  %v1077 = vmul.f32 %v1027, 0.25
  %v1078 = vmul.f32 %v1028, 0.25
  %v1079 = vmul.f32 %v1029, 0.25
  %v1080 = vmul.f32 %v1030, 0.25
  %v1081 = vmul.f32 %v1031, 0.25
  %v1082 = vmul.f32 %v1032, 0.25
  %v1083 = vmul.f32 %v1033, 0.25
  %v1084 = vmul.f32 %v1034, 0.25
  %v1085 = vmul.f32 %v1035, 0.25
  %v1086 = vmul.f32 %v1036, 0.25
  %v1087 = vmul.f32 %v1037, 0.25
  %v1088 = vpack.c.bf16 %v1038, %v1038
  %v1089 = vpack.c.bf16 %v1039, %v1039
  %v1090 = vpack.c.bf16 %v1040, %v1040
  %v1091 = vpack.c.bf16 %v1041, %v1041
  %v1092 = vpack.c.bf16 %v1042, %v1042
  %v1093 = vpack.c.bf16 %v1043, %v1043
  %v1094 = vpack.c.bf16 %v1044, %v1044
  %v1095 = vpack.c.bf16 %v1045, %v1045
  %v1096 = vpack.c.bf16 %v1046, %v1046
  %v1097 = vpack.c.bf16 %v1047, %v1047
  %v1098 = vpack.c.bf16 %v1048, %v1048
  %v1099 = vpack.c.bf16 %v1049, %v1049
  %v1100 = vpack.c.bf16 %v1050, %v1050
  %v1101 = vpack.c.bf16 %v1051, %v1051
  %v1102 = vpack.c.bf16 %v1052, %v1052
  %v1103 = vpack.c.bf16 %v1053, %v1053
  %v1104 = vpack.c.bf16 %v1054, %v1054
  %v1105 = vpack.c.bf16 %v1055, %v1055
  %v1106 = vpack.c.bf16 %v1056, %v1056
  %v1107 = vpack.c.bf16 %v1057, %v1057
  %v1108 = vpack.c.bf16 %v1058, %v1058
  %v1109 = vpack.c.bf16 %v1059, %v1059
  %v1110 = vpack.c.bf16 %v1060, %v1060
  %v1111 = vpack.c.bf16 %v1061, %v1061
  %v1112 = vpack.c.bf16 %v1062, %v1062
  %v1113 = vpack.c.bf16 %v1063, %v1063
  %v1114 = vpack.c.bf16 %v1064, %v1064
  %v1115 = vpack.c.bf16 %v1065, %v1065
  %v1116 = vpack.c.bf16 %v1066, %v1066
  %v1117 = vpack.c.bf16 %v1067, %v1067
  %v1118 = vpack.c.bf16 %v1068, %v1068
  %v1119 = vpack.c.bf16 %v1069, %v1069
  %v1120 = vpack.c.bf16 %v1070, %v1070
  %v1121 = vpack.c.bf16 %v1071, %v1071
  %v1122 = vpack.c.bf16 %v1072, %v1072
  %v1123 = vpack.c.bf16 %v1073, %v1073
  %v1124 = vpack.c.bf16 %v1074, %v1074
  %v1125 = vpack.c.bf16 %v1075, %v1075
  %v1126 = vpack.c.bf16 %v1076, %v1076
  %v1127 = vpack.c.bf16 %v1077, %v1077
  %v1128 = vpack.c.bf16 %v1078, %v1078
  %v1129 = vpack.c.bf16 %v1079, %v1079
  %v1130 = vpack.c.bf16 %v1080, %v1080
  %v1131 = vpack.c.bf16 %v1081, %v1081
  %v1132 = vpack.c.bf16 %v1082, %v1082
  %v1133 = vpack.c.bf16 %v1083, %v1083
  %v1134 = vpack.c.bf16 %v1084, %v1084
  %v1135 = vpack.c.bf16 %v1085, %v1085
  %v1136 = vpack.c.bf16 %v1086, %v1086
  %v1137 = vpack.c.bf16 %v1087, %v1087
  %v1188 = vunpack.c.l.b16 %v1088
  %v1189 = vunpack.c.l.b16 %v1089
  %v1190 = vunpack.c.l.b16 %v1090
  %v1191 = vunpack.c.l.b16 %v1091
  %v1192 = vunpack.c.l.b16 %v1092
  %v1193 = vunpack.c.l.b16 %v1093
  %v1194 = vunpack.c.l.b16 %v1094
  %v1195 = vunpack.c.l.b16 %v1095
  %v1196 = vunpack.c.l.b16 %v1096
  %v1197 = vunpack.c.l.b16 %v1097
  %v1198 = vunpack.c.l.b16 %v1098
  %v1199 = vunpack.c.l.b16 %v1099
  %v1200 = vunpack.c.l.b16 %v1100
  %v1201 = vunpack.c.l.b16 %v1101
  %v1202 = vunpack.c.l.b16 %v1102
  %v1203 = vunpack.c.l.b16 %v1103
  %v1204 = vunpack.c.l.b16 %v1104
  %v1205 = vunpack.c.l.b16 %v1105
  %v1206 = vunpack.c.l.b16 %v1106
  %v1207 = vunpack.c.l.b16 %v1107
  %v1208 = vunpack.c.l.b16 %v1108
  %v1209 = vunpack.c.l.b16 %v1109
  %v1210 = vunpack.c.l.b16 %v1110
  %v1211 = vunpack.c.l.b16 %v1111
  %v1212 = vunpack.c.l.b16 %v1112
  %v1213 = vunpack.c.l.b16 %v1113
  %v1214 = vunpack.c.l.b16 %v1114
  %v1215 = vunpack.c.l.b16 %v1115
  %v1216 = vunpack.c.l.b16 %v1116
  %v1217 = vunpack.c.l.b16 %v1117
  %v1218 = vunpack.c.l.b16 %v1118
  %v1219 = vunpack.c.l.b16 %v1119
  %v1220 = vunpack.c.l.b16 %v1120
  %v1221 = vunpack.c.l.b16 %v1121
  %v1222 = vunpack.c.l.b16 %v1122
  %v1223 = vunpack.c.l.b16 %v1123
  %v1224 = vunpack.c.l.b16 %v1124
  %v1225 = vunpack.c.l.b16 %v1125
  %v1226 = vunpack.c.l.b16 %v1126
  %v1227 = vunpack.c.l.b16 %v1127
  %v1228 = vunpack.c.l.b16 %v1128
  %v1229 = vunpack.c.l.b16 %v1129
  %v1230 = vunpack.c.l.b16 %v1130
  %v1231 = vunpack.c.l.b16 %v1131
  %v1232 = vunpack.c.l.b16 %v1132
  %v1233 = vunpack.c.l.b16 %v1133
  %v1234 = vunpack.c.l.b16 %v1134
  %v1235 = vunpack.c.l.b16 %v1135
  %v1236 = vunpack.c.l.b16 %v1136
  %v1237 = vunpack.c.l.b16 %v1137
  %v1238 = vrot.slane %v1189, 7
  %vm1239 = vcmask 1041409
  %v1240 = vsel %vm1239, %v1238, %v1188
  %v1241 = vrot.slane %v1190, 6
  %vm1242 = vcmask 1042434
  %v1243 = vsel %vm1242, %v1241, %v1240
  %v1244 = vrot.slane %v1191, 5
  %vm1245 = vcmask 1043459
  %v1246 = vsel %vm1245, %v1244, %v1243
  %v1247 = vrot.slane %v1192, 4
  %vm1248 = vcmask 1044484
  %v1249 = vsel %vm1248, %v1247, %v1246
  %v1250 = vrot.slane %v1193, 3
  %vm1251 = vcmask 1045509
  %v1252 = vsel %vm1251, %v1250, %v1249
  %v1253 = vrot.slane %v1194, 2
  %vm1254 = vcmask 1046534
  %v1255 = vsel %vm1254, %v1253, %v1252
  %v1256 = vrot.slane %v1195, 1
  %vm1257 = vcmask 1047559
  %v1258 = vsel %vm1257, %v1256, %v1255
  %v1259 = vrot.slane %v1197, 7
  %v1260 = vsel %vm1239, %v1259, %v1196
  %v1261 = vrot.slane %v1198, 6
  %v1262 = vsel %vm1242, %v1261, %v1260
  %v1263 = vrot.slane %v1199, 5
  %v1264 = vsel %vm1245, %v1263, %v1262
  %v1265 = vrot.slane %v1200, 4
  %v1266 = vsel %vm1248, %v1265, %v1264
  %v1267 = vrot.slane %v1201, 3
  %v1268 = vsel %vm1251, %v1267, %v1266
  %v1269 = vrot.slane %v1202, 2
  %v1270 = vsel %vm1254, %v1269, %v1268
  %v1271 = vrot.slane %v1203, 1
  %v1272 = vsel %vm1257, %v1271, %v1270
  %v1273 = vrot.slane %v1205, 7
  %v1274 = vsel %vm1239, %v1273, %v1204
  %v1275 = vrot.slane %v1206, 6
  %v1276 = vsel %vm1242, %v1275, %v1274
  %v1277 = vrot.slane %v1207, 5
  %v1278 = vsel %vm1245, %v1277, %v1276
  %v1279 = vrot.slane %v1208, 4
  %v1280 = vsel %vm1248, %v1279, %v1278
  %v1281 = vrot.slane %v1209, 3
  %v1282 = vsel %vm1251, %v1281, %v1280
  %v1283 = vrot.slane %v1210, 2
  %v1284 = vsel %vm1254, %v1283, %v1282
  %v1285 = vrot.slane %v1211, 1
  %v1286 = vsel %vm1257, %v1285, %v1284
  %v1287 = vrot.slane %v1213, 7
  %v1288 = vsel %vm1239, %v1287, %v1212
  %v1289 = vrot.slane %v1214, 6
  %v1290 = vsel %vm1242, %v1289, %v1288
  %v1291 = vrot.slane %v1215, 5
  %v1292 = vsel %vm1245, %v1291, %v1290
  %v1293 = vrot.slane %v1216, 4
  %v1294 = vsel %vm1248, %v1293, %v1292
  %v1295 = vrot.slane %v1217, 3
  %v1296 = vsel %vm1251, %v1295, %v1294
  %v1297 = vrot.slane %v1218, 2
  %v1298 = vsel %vm1254, %v1297, %v1296
  %v1299 = vrot.slane %v1219, 1
  %v1300 = vsel %vm1257, %v1299, %v1298
  %v1301 = vrot.slane %v1221, 7
  %v1302 = vsel %vm1239, %v1301, %v1220
  %v1303 = vrot.slane %v1222, 6
  %v1304 = vsel %vm1242, %v1303, %v1302
  %v1305 = vrot.slane %v1223, 5
  %v1306 = vsel %vm1245, %v1305, %v1304
  %v1307 = vrot.slane %v1224, 4
  %v1308 = vsel %vm1248, %v1307, %v1306
  %v1309 = vrot.slane %v1225, 3
  %v1310 = vsel %vm1251, %v1309, %v1308
  %v1311 = vrot.slane %v1226, 2
  %v1312 = vsel %vm1254, %v1311, %v1310
  %v1313 = vrot.slane %v1227, 1
  %v1314 = vsel %vm1257, %v1313, %v1312
  %v1315 = vrot.slane %v1229, 7
  %v1316 = vsel %vm1239, %v1315, %v1228
  %v1317 = vrot.slane %v1230, 6
  %v1318 = vsel %vm1242, %v1317, %v1316
  %v1319 = vrot.slane %v1231, 5
  %v1320 = vsel %vm1245, %v1319, %v1318
  %v1321 = vrot.slane %v1232, 4
  %v1322 = vsel %vm1248, %v1321, %v1320
  %v1323 = vrot.slane %v1233, 3
  %v1324 = vsel %vm1251, %v1323, %v1322
  %v1325 = vrot.slane %v1234, 2
  %v1326 = vsel %vm1254, %v1325, %v1324
  %v1327 = vrot.slane %v1235, 1
  %v1328 = vsel %vm1257, %v1327, %v1326
  %v1329 = vrot.slane %v1237, 7
  %v1330 = vsel %vm1239, %v1329, %v1236
  %v1331 = vpack.c.b16 %v1258, %v1258
  %v1332 = vpack.c.b16 %v1272, %v1272
  %v1333 = vpack.c.b16 %v1286, %v1286
  %v1334 = vpack.c.b16 %v1300, %v1300
  %v1335 = vpack.c.b16 %v1314, %v1314
  %v1336 = vpack.c.b16 %v1328, %v1328
  %v1337 = vpack.c.b16 %v1330, %v1330
  %1345 = vst [vmem:[%s5] sm:$0xf] %v1331
  %1346 = vst [vmem:[%s5 + $0x4] sm:$0xf] %v1332
  %1347 = vst [vmem:[%s5 + $0x8] sm:$0xf] %v1333
  %1348 = vst [vmem:[%s5 + $0xc] sm:$0xf] %v1334
  %1349 = vst [vmem:[%s5 + $0x10] sm:$0xf] %v1335
  %1350 = vst [vmem:[%s5 + $0x14] sm:$0xf] %v1336
  %1351 = vst [vmem:[%s5 + $0x18] sm:$0x1] %v1337
  // Predicated region
  $region22: #{lenet_mix_forward.4} parent=0 // pred_check
    _
  $region23: #{lenet_mix_forward.4} parent=0 // pred_check_branch
    %1353 = sbr.rel (0) target = $region25
  $region24: #{lenet_mix_forward.4} parent=0 // pred_region
    _
  $region25: #{lenet_mix_forward.4} parent=0 // pred_fallthru
    _
  // Predicated region
  $region26: #{lenet_mix_forward.4} parent=0 // pred_check
    _
  $region27: #{lenet_mix_forward.4} parent=0 // pred_check_branch
    %1355 = sbr.rel (0) target = $region29
  $region28: #{lenet_mix_forward.4} parent=0 // pred_region
    _
  $region29: #{lenet_mix_forward.4} parent=0 // pred_fallthru
    _

// kernel: lenet_mix_forward.5
$region0: #{lenet_mix_forward.5}
  #allocation0 [shape = 'u32[]', space=smem, size = 0x4, offset = 0x4, fixed_abs, tag = 'smem constant byte address 0x4 - core index']
  #allocation1 [shape = 'u32[72,128]{1,0:T(1,128)}', space=vmem, size = 0x9000, scoped, tag = 'internal scratch']
  %s0 = inlined_call_operand.vmem [shape: bf16[2,512], index: 0, kind: input, shape index: {}]
  %s1 = inlined_call_operand.vmem [shape: bf16[512,128], index: 1, kind: input, shape index: {}]
  %s2 = inlined_call_operand.vmem [shape: f32[1,128], index: 2, kind: input, shape index: {}]
  %s3 = inlined_call_operand.vmem [shape: f32[1,128], index: 3, kind: input, shape index: {}]
  %s4 = inlined_call_operand.vmem [shape: f32[1,128], index: 4, kind: input, shape index: {}]
  %s5 = inlined_call_operand.vmem [shape: bf16[128,128], index: 5, kind: input, shape index: {}]
  %s6 = inlined_call_operand.vmem [shape: f32[1,128], index: 6, kind: input, shape index: {}]
  %s7 = inlined_call_operand.vmem [shape: f32[1,128], index: 7, kind: input, shape index: {}]
  %s8 = inlined_call_operand.vmem [shape: f32[1,128], index: 8, kind: input, shape index: {}]
  %s9 = inlined_call_operand.vmem [shape: bf16[128,128], index: 9, kind: input, shape index: {}]
  %s10 = inlined_call_operand.vmem [shape: f32[1,128], index: 10, kind: input, shape index: {}]
  %s11 = inlined_call_operand.hbm [shape: f32[2,128], index: 11, kind: output, shape index: {}]
  %s12 = sld [smem:[#allocation0]]
  $region54: #{lenet_mix_forward.5} parent=0
    _
  %s14 = ssub.s32 1, %s12
  %s15 = scalar_select 0, %s14, %s12
  $region1: #{lenet_mix_forward.5} parent=0
    #allocation2 [shape = 'u8[1024]{0}', space=vmem, size = 0x400, scoped, tag = 'output window, operand 0, single buffered']
    #allocation3 [shape = 's32[1]{0}', space=sflag, size = 0x4, scoped, tag = 'scoped memory for lenet_mix_forward.5']
    %16 = vsyncpa [#allocation3], 0
    // Predicated region
    $region2: #{lenet_mix_forward.5} parent=1 // pred_check
      _
    $region3: #{lenet_mix_forward.5} parent=1 // pred_check_branch
      %18 = sbr.rel (0) target = $region5
    $region4: #{lenet_mix_forward.5} parent=1 // pred_region
      _
    $region5: #{lenet_mix_forward.5} parent=1 // pred_fallthru
      _
    // Predicated region
    $region6: #{lenet_mix_forward.5} parent=1 // pred_check
      _
    $region7: #{lenet_mix_forward.5} parent=1 // pred_check_branch
      %20 = sbr.rel (0) target = $region9
    $region8: #{lenet_mix_forward.5} parent=1 // pred_region
      _
    $region9: #{lenet_mix_forward.5} parent=1 // pred_fallthru
      _
    // Predicated region
    $region10: #{lenet_mix_forward.5} parent=1 // pred_check
      _
    $region11: #{lenet_mix_forward.5} parent=1 // pred_check_branch
      %22 = sbr.rel (0) target = $region13
    $region12: #{lenet_mix_forward.5} parent=1 // pred_region
      _
    $region13: #{lenet_mix_forward.5} parent=1 // pred_fallthru
      _
    // Predicated region
    $region14: #{lenet_mix_forward.5} parent=1 // pred_check
      _
    $region15: #{lenet_mix_forward.5} parent=1 // pred_check_branch
      %24 = sbr.rel (0) target = $region17
    $region16: #{lenet_mix_forward.5} parent=1 // pred_region
      _
    $region17: #{lenet_mix_forward.5} parent=1 // pred_fallthru
      _
    // Predicated region
    $region18: #{lenet_mix_forward.5} parent=1 // pred_check
      _
    $region19: #{lenet_mix_forward.5} parent=1 // pred_check_branch
      %26 = sbr.rel (0) target = $region21
    $region20: #{lenet_mix_forward.5} parent=1 // pred_region
      _
    $region21: #{lenet_mix_forward.5} parent=1 // pred_fallthru
      _
    // Predicated region
    $region22: #{lenet_mix_forward.5} parent=1 // pred_check
      _
    $region23: #{lenet_mix_forward.5} parent=1 // pred_check_branch
      %28 = sbr.rel (0) target = $region25
    $region24: #{lenet_mix_forward.5} parent=1 // pred_region
      _
    $region25: #{lenet_mix_forward.5} parent=1 // pred_fallthru
      _
    // Predicated region
    $region26: #{lenet_mix_forward.5} parent=1 // pred_check
      _
    $region27: #{lenet_mix_forward.5} parent=1 // pred_check_branch
      %30 = sbr.rel (0) target = $region29
    $region28: #{lenet_mix_forward.5} parent=1 // pred_region
      _
    $region29: #{lenet_mix_forward.5} parent=1 // pred_fallthru
      _
    // Predicated region
    $region30: #{lenet_mix_forward.5} parent=1 // pred_check
      _
    $region31: #{lenet_mix_forward.5} parent=1 // pred_check_branch
      %32 = sbr.rel (0) target = $region33
    $region32: #{lenet_mix_forward.5} parent=1 // pred_region
      _
    $region33: #{lenet_mix_forward.5} parent=1 // pred_fallthru
      _
    // Predicated region
    $region34: #{lenet_mix_forward.5} parent=1 // pred_check
      _
    $region35: #{lenet_mix_forward.5} parent=1 // pred_check_branch
      %34 = sbr.rel (0) target = $region37
    $region36: #{lenet_mix_forward.5} parent=1 // pred_region
      _
    $region37: #{lenet_mix_forward.5} parent=1 // pred_fallthru
      _
    // Predicated region
    $region38: #{lenet_mix_forward.5} parent=1 // pred_check
      _
    $region39: #{lenet_mix_forward.5} parent=1 // pred_check_branch
      %36 = sbr.rel (0) target = $region41
    $region40: #{lenet_mix_forward.5} parent=1 // pred_region
      _
    $region41: #{lenet_mix_forward.5} parent=1 // pred_fallthru
      _
    // Predicated region
    $region42: #{lenet_mix_forward.5} parent=1 // pred_check
      _
    $region43: #{lenet_mix_forward.5} parent=1 // pred_check_branch
      %38 = sbr.rel (0) target = $region45
    $region44: #{lenet_mix_forward.5} parent=1 // pred_region
      _
    $region45: #{lenet_mix_forward.5} parent=1 // pred_fallthru
      _
    %v39 = vld [vmem:[%s0] sm:$0xf]
    %v40 = vld [vmem:[%s1] sm:$0xf]
    %v41 = vld [vmem:[%s1 + $0x4] sm:$0xf]
    %v42 = vld [vmem:[%s1 + $0x8] sm:$0xf]
    %v43 = vld [vmem:[%s1 + $0xc] sm:$0xf]
    %v44 = vld [vmem:[%s1 + $0x10] sm:$0xf]
    %v45 = vld [vmem:[%s1 + $0x14] sm:$0xf]
    %v46 = vld [vmem:[%s1 + $0x18] sm:$0xf]
    %v47 = vld [vmem:[%s1 + $0x1c] sm:$0xf]
    %v48 = vld [vmem:[%s1 + $0x20] sm:$0xf]
    %v49 = vld [vmem:[%s1 + $0x24] sm:$0xf]
    %v50 = vld [vmem:[%s1 + $0x28] sm:$0xf]
    %v51 = vld [vmem:[%s1 + $0x2c] sm:$0xf]
    %v52 = vld [vmem:[%s1 + $0x30] sm:$0xf]
    %v53 = vld [vmem:[%s1 + $0x34] sm:$0xf]
    %v54 = vld [vmem:[%s1 + $0x38] sm:$0xf]
    %v55 = vld [vmem:[%s1 + $0x3c] sm:$0xf]
    %v56 = vld [vmem:[%s1 + $0x40] sm:$0xf]
    %v57 = vld [vmem:[%s1 + $0x44] sm:$0xf]
    %v58 = vld [vmem:[%s1 + $0x48] sm:$0xf]
    %v59 = vld [vmem:[%s1 + $0x4c] sm:$0xf]
    %v60 = vld [vmem:[%s1 + $0x50] sm:$0xf]
    %v61 = vld [vmem:[%s1 + $0x54] sm:$0xf]
    %v62 = vld [vmem:[%s1 + $0x58] sm:$0xf]
    %v63 = vld [vmem:[%s1 + $0x5c] sm:$0xf]
    %v64 = vld [vmem:[%s1 + $0x60] sm:$0xf]
    %v65 = vld [vmem:[%s1 + $0x64] sm:$0xf]
    %v66 = vld [vmem:[%s1 + $0x68] sm:$0xf]
    %v67 = vld [vmem:[%s1 + $0x6c] sm:$0xf]
    %v68 = vld [vmem:[%s1 + $0x70] sm:$0xf]
    %v69 = vld [vmem:[%s1 + $0x74] sm:$0xf]
    %v70 = vld [vmem:[%s1 + $0x78] sm:$0xf]
    %v71 = vld [vmem:[%s1 + $0x7c] sm:$0xf]
    %v72 = vld [vmem:[%s1 + $0x80] sm:$0xf]
    %v73 = vld [vmem:[%s1 + $0x84] sm:$0xf]
    %v74 = vld [vmem:[%s1 + $0x88] sm:$0xf]
    %v75 = vld [vmem:[%s1 + $0x8c] sm:$0xf]
    %v76 = vld [vmem:[%s1 + $0x90] sm:$0xf]
    %v77 = vld [vmem:[%s1 + $0x94] sm:$0xf]
    %v78 = vld [vmem:[%s1 + $0x98] sm:$0xf]
    %v79 = vld [vmem:[%s1 + $0x9c] sm:$0xf]
    %v80 = vld [vmem:[%s1 + $0xa0] sm:$0xf]
    %v81 = vld [vmem:[%s1 + $0xa4] sm:$0xf]
    %v82 = vld [vmem:[%s1 + $0xa8] sm:$0xf]
    %v83 = vld [vmem:[%s1 + $0xac] sm:$0xf]
    %v84 = vld [vmem:[%s1 + $0xb0] sm:$0xf]
    %v85 = vld [vmem:[%s1 + $0xb4] sm:$0xf]
    %v86 = vld [vmem:[%s1 + $0xb8] sm:$0xf]
    %v87 = vld [vmem:[%s1 + $0xbc] sm:$0xf]
    %v88 = vld [vmem:[%s1 + $0xc0] sm:$0xf]
    %v89 = vld [vmem:[%s1 + $0xc4] sm:$0xf]
    %v90 = vld [vmem:[%s1 + $0xc8] sm:$0xf]
    %v91 = vld [vmem:[%s1 + $0xcc] sm:$0xf]
    %v92 = vld [vmem:[%s1 + $0xd0] sm:$0xf]
    %v93 = vld [vmem:[%s1 + $0xd4] sm:$0xf]
    %v94 = vld [vmem:[%s1 + $0xd8] sm:$0xf]
    %v95 = vld [vmem:[%s1 + $0xdc] sm:$0xf]
    %v96 = vld [vmem:[%s1 + $0xe0] sm:$0xf]
    %v97 = vld [vmem:[%s1 + $0xe4] sm:$0xf]
    %v98 = vld [vmem:[%s1 + $0xe8] sm:$0xf]
    %v99 = vld [vmem:[%s1 + $0xec] sm:$0xf]
    %v100 = vld [vmem:[%s1 + $0xf0] sm:$0xf]
    %v101 = vld [vmem:[%s1 + $0xf4] sm:$0xf]
    %v102 = vld [vmem:[%s1 + $0xf8] sm:$0xf]
    %v103 = vld [vmem:[%s1 + $0xfc] sm:$0xf]
    %v104 = vld [vmem:[%s2] sm:$0x1]
    %v106 = vperm.slane %v104, 0
    %109 = vst [vmem:[#allocation1] ss:$9 sm:$0xff] %v39
    %v110 = vld [vmem:[#allocation1] sm:$0xff]
    %v111 = vld [vmem:[#allocation1 + $0x9] sm:$0xff]
    %v112 = vld [vmem:[#allocation1 + $0x12] sm:$0xff]
    %v113 = vld [vmem:[#allocation1 + $0x1b] sm:$0xff]
    %v182 = vunpack.c.l.b16 %v40
    %v183 = vunpack.c.l.b16 %v41
    %v184 = vunpack.c.l.b16 %v42
    %v185 = vunpack.c.l.b16 %v43
    %v186 = vunpack.c.l.b16 %v44
    %v187 = vunpack.c.l.b16 %v45
    %v188 = vunpack.c.l.b16 %v46
    %v189 = vunpack.c.l.b16 %v47
    %v190 = vunpack.c.l.b16 %v48
    %v191 = vunpack.c.l.b16 %v49
    %v192 = vunpack.c.l.b16 %v50
    %v193 = vunpack.c.l.b16 %v51
    %v194 = vunpack.c.l.b16 %v52
    %v195 = vunpack.c.l.b16 %v53
    %v196 = vunpack.c.l.b16 %v54
    %v197 = vunpack.c.l.b16 %v55
    %v198 = vunpack.c.l.b16 %v56
    %v199 = vunpack.c.l.b16 %v57
    %v200 = vunpack.c.l.b16 %v58
    %v201 = vunpack.c.l.b16 %v59
    %v202 = vunpack.c.l.b16 %v60
    %v203 = vunpack.c.l.b16 %v61
    %v204 = vunpack.c.l.b16 %v62
    %v205 = vunpack.c.l.b16 %v63
    %v206 = vunpack.c.l.b16 %v64
    %v207 = vunpack.c.l.b16 %v65
    %v208 = vunpack.c.l.b16 %v66
    %v209 = vunpack.c.l.b16 %v67
    %v210 = vunpack.c.l.b16 %v68
    %v211 = vunpack.c.l.b16 %v69
    %v212 = vunpack.c.l.b16 %v70
    %v213 = vunpack.c.l.b16 %v71
    %v214 = vunpack.c.l.b16 %v72
    %v215 = vunpack.c.l.b16 %v73
    %v216 = vunpack.c.l.b16 %v74
    %v217 = vunpack.c.l.b16 %v75
    %v218 = vunpack.c.l.b16 %v76
    %v219 = vunpack.c.l.b16 %v77
    %v220 = vunpack.c.l.b16 %v78
    %v221 = vunpack.c.l.b16 %v79
    %v222 = vunpack.c.l.b16 %v80
    %v223 = vunpack.c.l.b16 %v81
    %v224 = vunpack.c.l.b16 %v82
    %v225 = vunpack.c.l.b16 %v83
    %v226 = vunpack.c.l.b16 %v84
    %v227 = vunpack.c.l.b16 %v85
    %v228 = vunpack.c.l.b16 %v86
    %v229 = vunpack.c.l.b16 %v87
    %v230 = vunpack.c.l.b16 %v88
    %v231 = vunpack.c.l.b16 %v89
    %v232 = vunpack.c.l.b16 %v90
    %v233 = vunpack.c.l.b16 %v91
    %v234 = vunpack.c.l.b16 %v92
    %v235 = vunpack.c.l.b16 %v93
    %v236 = vunpack.c.l.b16 %v94
    %v237 = vunpack.c.l.b16 %v95
    %v238 = vunpack.c.l.b16 %v96
    %v239 = vunpack.c.l.b16 %v97
    %v240 = vunpack.c.l.b16 %v98
    %v241 = vunpack.c.l.b16 %v99
    %v242 = vunpack.c.l.b16 %v100
    %v243 = vunpack.c.l.b16 %v101
    %v244 = vunpack.c.l.b16 %v102
    %v245 = vunpack.c.l.b16 %v103
    %v246 = vpack.c.b16 %v183, %v182
    %v247 = vpack.c.b16 %v185, %v184
    %v248 = vpack.c.b16 %v187, %v186
    %v249 = vpack.c.b16 %v189, %v188
    %v250 = vpack.c.b16 %v191, %v190
    %v251 = vpack.c.b16 %v193, %v192
    %v252 = vpack.c.b16 %v195, %v194
    %v253 = vpack.c.b16 %v197, %v196
    %v254 = vpack.c.b16 %v199, %v198
    %v255 = vpack.c.b16 %v201, %v200
    %v256 = vpack.c.b16 %v203, %v202
    %v257 = vpack.c.b16 %v205, %v204
    %v258 = vpack.c.b16 %v207, %v206
    %v259 = vpack.c.b16 %v209, %v208
    %v260 = vpack.c.b16 %v211, %v210
    %v261 = vpack.c.b16 %v213, %v212
    %v262 = vpack.c.b16 %v215, %v214
    %v263 = vpack.c.b16 %v217, %v216
    %v264 = vpack.c.b16 %v219, %v218
    %v265 = vpack.c.b16 %v221, %v220
    %v266 = vpack.c.b16 %v223, %v222
    %v267 = vpack.c.b16 %v225, %v224
    %v268 = vpack.c.b16 %v227, %v226
    %v269 = vpack.c.b16 %v229, %v228
    %v270 = vpack.c.b16 %v231, %v230
    %v271 = vpack.c.b16 %v233, %v232
    %v272 = vpack.c.b16 %v235, %v234
    %v273 = vpack.c.b16 %v237, %v236
    %v274 = vpack.c.b16 %v239, %v238
    %v275 = vpack.c.b16 %v241, %v240
    %v276 = vpack.c.b16 %v243, %v242
    %v277 = vpack.c.b16 %v245, %v244
    %310 = vmatpush.bf16.msra.mxu0 %v253
    %311 = vmatpush.bf16.msra.mxu0 %v252
    %312 = vmatpush.bf16.msra.mxu0 %v251
    %313 = vmatpush.bf16.msra.mxu0 %v250
    %314 = vmatpush.bf16.msra.mxu0 %v249
    %315 = vmatpush.bf16.msra.mxu0 %v248
    %316 = vmatpush.bf16.msra.mxu0 %v247
    %317 = vmatpush.bf16.msra.mxu0 %v246
    %318 = vmatmul.bf16.gmra.mxu0 %v110
    %v319 = vpop.f32.mrf.mxu0
    %v320 = vadd.f32 %v106, %v319
    %v321 = vpop.f32.mrf.mxu0
    %322 = vdwg.mxu0
    %323 = vmatpush.bf16.msra.mxu0 %v261
    %324 = vmatpush.bf16.msra.mxu0 %v260
    %325 = vmatpush.bf16.msra.mxu0 %v259
    %326 = vmatpush.bf16.msra.mxu0 %v258
    %327 = vmatpush.bf16.msra.mxu0 %v257
    %328 = vmatpush.bf16.msra.mxu0 %v256
    %329 = vmatpush.bf16.msra.mxu0 %v255
    %330 = vmatpush.bf16.msra.mxu0 %v254
    %331 = vmatmul.bf16.gmra.mxu0 %v111
    %v332 = vpop.f32.mrf.mxu0
    %v333 = vadd.f32 %v320, %v332
    %v334 = vpop.f32.mrf.mxu0
    %335 = vdwg.mxu0
    %336 = vmatpush.bf16.msra.mxu0 %v269
    %337 = vmatpush.bf16.msra.mxu0 %v268
    %338 = vmatpush.bf16.msra.mxu0 %v267
    %339 = vmatpush.bf16.msra.mxu0 %v266
    %340 = vmatpush.bf16.msra.mxu0 %v265
    %341 = vmatpush.bf16.msra.mxu0 %v264
    %342 = vmatpush.bf16.msra.mxu0 %v263
    %343 = vmatpush.bf16.msra.mxu0 %v262
    %344 = vmatmul.bf16.gmra.mxu0 %v112
    %v345 = vpop.f32.mrf.mxu0
    %v346 = vadd.f32 %v333, %v345
    %v347 = vpop.f32.mrf.mxu0
    %348 = vdwg.mxu0
    %349 = vmatpush.bf16.msra.mxu0 %v277
    %350 = vmatpush.bf16.msra.mxu0 %v276
    %351 = vmatpush.bf16.msra.mxu0 %v275
    %352 = vmatpush.bf16.msra.mxu0 %v274
    %353 = vmatpush.bf16.msra.mxu0 %v273
    %354 = vmatpush.bf16.msra.mxu0 %v272
    %355 = vmatpush.bf16.msra.mxu0 %v271
    %356 = vmatpush.bf16.msra.mxu0 %v270
    %357 = vmatmul.bf16.gmra.mxu0 %v113
    %v358 = vpop.f32.mrf.mxu0
    %v359 = vadd.f32 %v346, %v358
    %v360 = vpop.f32.mrf.mxu0
    %361 = vdwg.mxu0
    %vm362 = vcmp.gt.f32.partialorder %v359, 0.0
    %v363 = vmul.f32 %v359, 0.01
    %v364 = vsel %vm362, %v359, %v363
    %v365 = vld [vmem:[%s3] sm:$0x1]
    %v367 = vperm.slane %v365, 0
    %v369 = vmul.f32 %v364, %v367
    %v370 = vld [vmem:[%s4] sm:$0x1]
    %v372 = vperm.slane %v370, 0
    %v374 = vadd.f32 %v369, %v372
    %v375 = vpack.c.bf16 %v374, %v374
    %v376 = vld [vmem:[%s5] sm:$0xf]
    %v377 = vld [vmem:[%s5 + $0x4] sm:$0xf]
    %v378 = vld [vmem:[%s5 + $0x8] sm:$0xf]
    %v379 = vld [vmem:[%s5 + $0xc] sm:$0xf]
    %v380 = vld [vmem:[%s5 + $0x10] sm:$0xf]
    %v381 = vld [vmem:[%s5 + $0x14] sm:$0xf]
    %v382 = vld [vmem:[%s5 + $0x18] sm:$0xf]
    %v383 = vld [vmem:[%s5 + $0x1c] sm:$0xf]
    %v384 = vld [vmem:[%s5 + $0x20] sm:$0xf]
    %v385 = vld [vmem:[%s5 + $0x24] sm:$0xf]
    %v386 = vld [vmem:[%s5 + $0x28] sm:$0xf]
    %v387 = vld [vmem:[%s5 + $0x2c] sm:$0xf]
    %v388 = vld [vmem:[%s5 + $0x30] sm:$0xf]
    %v389 = vld [vmem:[%s5 + $0x34] sm:$0xf]
    %v390 = vld [vmem:[%s5 + $0x38] sm:$0xf]
    %v391 = vld [vmem:[%s5 + $0x3c] sm:$0xf]
    %v392 = vld [vmem:[%s6] sm:$0x1]
    %v394 = vperm.slane %v392, 0
    %v412 = vunpack.c.l.b16 %v376
    %v413 = vunpack.c.l.b16 %v377
    %v414 = vunpack.c.l.b16 %v378
    %v415 = vunpack.c.l.b16 %v379
    %v416 = vunpack.c.l.b16 %v380
    %v417 = vunpack.c.l.b16 %v381
    %v418 = vunpack.c.l.b16 %v382
    %v419 = vunpack.c.l.b16 %v383
    %v420 = vunpack.c.l.b16 %v384
    %v421 = vunpack.c.l.b16 %v385
    %v422 = vunpack.c.l.b16 %v386
    %v423 = vunpack.c.l.b16 %v387
    %v424 = vunpack.c.l.b16 %v388
    %v425 = vunpack.c.l.b16 %v389
    %v426 = vunpack.c.l.b16 %v390
    %v427 = vunpack.c.l.b16 %v391
    %v428 = vpack.c.b16 %v413, %v412
    %v429 = vpack.c.b16 %v415, %v414
    %v430 = vpack.c.b16 %v417, %v416
    %v431 = vpack.c.b16 %v419, %v418
    %v432 = vpack.c.b16 %v421, %v420
    %v433 = vpack.c.b16 %v423, %v422
    %v434 = vpack.c.b16 %v425, %v424
    %v435 = vpack.c.b16 %v427, %v426
    %444 = vmatpush.bf16.msra.mxu0 %v435
    %445 = vmatpush.bf16.msra.mxu0 %v434
    %446 = vmatpush.bf16.msra.mxu0 %v433
    %447 = vmatpush.bf16.msra.mxu0 %v432
    %448 = vmatpush.bf16.msra.mxu0 %v431
    %449 = vmatpush.bf16.msra.mxu0 %v430
    %450 = vmatpush.bf16.msra.mxu0 %v429
    %451 = vmatpush.bf16.msra.mxu0 %v428
    %452 = vmatmul.bf16.gmra.mxu0 %v375
    %v453 = vpop.f32.mrf.mxu0
    %v454 = vadd.f32 %v394, %v453
    %v455 = vpop.f32.mrf.mxu0
    %456 = vdwg.mxu0
    %vm457 = vcmp.gt.f32.partialorder %v454, 0.0
    %v458 = vmul.f32 %v454, 0.01
    %v459 = vsel %vm457, %v454, %v458
    %v460 = vld [vmem:[%s7] sm:$0x1]
    %v462 = vperm.slane %v460, 0
    %v464 = vmul.f32 %v459, %v462
    %v465 = vld [vmem:[%s8] sm:$0x1]
    %v467 = vperm.slane %v465, 0
    %v469 = vadd.f32 %v464, %v467
    %v470 = vpack.c.bf16 %v469, %v469
    %v471 = vld [vmem:[%s9] sm:$0xf]
    %v472 = vld [vmem:[%s9 + $0x4] sm:$0xf]
    %v473 = vld [vmem:[%s9 + $0x8] sm:$0xf]
    %v474 = vld [vmem:[%s9 + $0xc] sm:$0xf]
    %v475 = vld [vmem:[%s9 + $0x10] sm:$0xf]
    %v476 = vld [vmem:[%s9 + $0x14] sm:$0xf]
    %v477 = vld [vmem:[%s9 + $0x18] sm:$0xf]
    %v478 = vld [vmem:[%s9 + $0x1c] sm:$0xf]
    %v479 = vld [vmem:[%s9 + $0x20] sm:$0xf]
    %v480 = vld [vmem:[%s9 + $0x24] sm:$0xf]
    %v481 = vld [vmem:[%s9 + $0x28] sm:$0xf]
    %v482 = vld [vmem:[%s9 + $0x2c] sm:$0xf]
    %v483 = vld [vmem:[%s9 + $0x30] sm:$0xf]
    %v484 = vld [vmem:[%s9 + $0x34] sm:$0xf]
    %v485 = vld [vmem:[%s9 + $0x38] sm:$0xf]
    %v486 = vld [vmem:[%s9 + $0x3c] sm:$0xf]
    %v487 = vld [vmem:[%s10] sm:$0x1]
    %v489 = vperm.slane %v487, 0
    %v507 = vunpack.c.l.b16 %v471
    %v508 = vunpack.c.l.b16 %v472
    %v509 = vunpack.c.l.b16 %v473
    %v510 = vunpack.c.l.b16 %v474
    %v511 = vunpack.c.l.b16 %v475
    %v512 = vunpack.c.l.b16 %v476
    %v513 = vunpack.c.l.b16 %v477
    %v514 = vunpack.c.l.b16 %v478
    %v515 = vunpack.c.l.b16 %v479
    %v516 = vunpack.c.l.b16 %v480
    %v517 = vunpack.c.l.b16 %v481
    %v518 = vunpack.c.l.b16 %v482
    %v519 = vunpack.c.l.b16 %v483
    %v520 = vunpack.c.l.b16 %v484
    %v521 = vunpack.c.l.b16 %v485
    %v522 = vunpack.c.l.b16 %v486
    %v523 = vpack.c.b16 %v508, %v507
    %v524 = vpack.c.b16 %v510, %v509
    %v525 = vpack.c.b16 %v512, %v511
    %v526 = vpack.c.b16 %v514, %v513
    %v527 = vpack.c.b16 %v516, %v515
    %v528 = vpack.c.b16 %v518, %v517
    %v529 = vpack.c.b16 %v520, %v519
    %v530 = vpack.c.b16 %v522, %v521
    %539 = vmatpush.bf16.msra.mxu0 %v530
    %540 = vmatpush.bf16.msra.mxu0 %v529
    %541 = vmatpush.bf16.msra.mxu0 %v528
    %542 = vmatpush.bf16.msra.mxu0 %v527
    %543 = vmatpush.bf16.msra.mxu0 %v526
    %544 = vmatpush.bf16.msra.mxu0 %v525
    %545 = vmatpush.bf16.msra.mxu0 %v524
    %546 = vmatpush.bf16.msra.mxu0 %v523
    %547 = vmatmul.bf16.gmra.mxu0 %v470
    %v548 = vpop.f32.mrf.mxu0
    %v549 = vadd.f32 %v489, %v548
    %v550 = vpop.f32.mrf.mxu0
    %551 = vdwg.mxu0
    %552 = vst [vmem:[#allocation2] sm:$0x3] %v549
    // Predicated region
    $region46: #{lenet_mix_forward.5} parent=1 // pred_check
      _
    $region47: #{lenet_mix_forward.5} parent=1 // pred_check_branch
      %554 = sbr.rel (0) target = $region49
    $region48: #{lenet_mix_forward.5} parent=1 // pred_region
      %556 = vsyncadd [#allocation3], 0
      %s558 = sshll.u32 [#allocation2], 4
      %s559 = int_to_ptr.vmem [resolvable:$true] %s558
      %s560 = sshll.u32 %s11, 4
      %s561 = int_to_ptr.hbm [resolvable:$true] %s560
      %563 = dma.vmem_to_hbm [thread:$0]  %s559, 32, %s561, [#allocation3]
    $region49: #{lenet_mix_forward.5} parent=1 // pred_fallthru
      _
    // Predicated region
    $region50: #{lenet_mix_forward.5} parent=1 // pred_check
      _
    $region51: #{lenet_mix_forward.5} parent=1 // pred_check_branch
      %565 = sbr.rel (0) target = $region53
    $region52: #{lenet_mix_forward.5} parent=1 // pred_region
      %567 = dma.done [#allocation3], 32
    $region53: #{lenet_mix_forward.5} parent=1 // pred_fallthru
      _
    %568 = vsyncpa [#allocation3], 1

</llo_original>
